<compile_context>
chip_gen: v6e
topology: v6e:2x2x1
jax: 0.10.0
libtpu: 0.0.40
codegen_flags: <defaults>
</compile_context>

<pallas_src>
import functools

import jax
import jax.numpy as jnp
import numpy as np
from jax.experimental import pallas as pl
from jax.experimental.pallas import tpu as pltpu


def _gelu_tanh(z):
    # tanh-form GELU (EUP transcendental); <=~1e-3 abs deviation from torch's exact erf GELU.
    return 0.5 * z * (1.0 + jnp.tanh(0.7978845608028654 * (z + 0.044715 * z * z * z)))


# tap t = (dh + 1) * 3 + (dw + 1); matches OIHW weights stacked as (O, kh, kw, I).
_OFFSETS = tuple((dh, dw) for dh in (-1, 0, 1) for dw in (-1, 0, 1))


def _double_conv_kernel(x_ref, masks_ref, seg_ref, segt_ref,
                        w1_ref, g1_ref, b1_ref, w2_ref, g2_ref, b2_ref,
                        o_ref, *, W, HW, n1, n2, residual):
    eps = 1e-5
    hi = jax.lax.Precision.HIGHEST
    L = x_ref.shape[-1]            # bn * HW  (lane axis, multiple of 128 at test shapes)
    bn = seg_ref.shape[-1]         # samples folded onto lanes per grid step

    x = x_ref[0]                   # (Cin_p, L) f32
    masks = masks_ref[...]         # (8, L)    f32 — one row per non-centre tap
    seg = seg_ref[...]             # (L, bn)   f32 — seg[p, b] = 1 iff lane p belongs to sample b
    segt = segt_ref[...]           # (bn, L)   f32

    def conv3x3(a, w):
        # a: (C, L) f32, w: (Co, 9*C) bf16  ->  (Co, L) f32.
        # Shift by dh*W+dw = static lane slice of [a | a]; zero padding via boundary masks
        # (masks also kill any cross-sample / wrap-around reads when bn > 1).
        a2 = jnp.concatenate([a, a], axis=1)                 # (C, 2L): aligned lane concat
        pieces = []
        for t, (dh, dw) in enumerate(_OFFSETS):
            off = dh * W + dw
            if off == 0:
                pieces.append(a)                             # centre tap: no shift, no mask
            else:
                s = off % L
                mrow = t if t < 4 else t - 1
                pieces.append(a2[:, s:s + L] * masks[mrow:mrow + 1, :])
        patch = jnp.concatenate(pieces, axis=0)              # (9C, L): aligned sublane concat
        return jnp.dot(w, patch.astype(jnp.bfloat16),        # single bf16 MXU pass, f32 accum
                       preferred_element_type=jnp.float32)

    def groupnorm1(y, g, b, n_real):
        # GroupNorm(1, C): per-sample stats over (C_real, HW).  Zero-padded channels add 0
        # to the sums; divide by the real element count.  Stats stay f32 (HIGHEST).
        C = y.shape[0]
        ystk = jnp.concatenate([y, y * y], axis=0)           # (2C, L) — one fused reduction
        r = jnp.dot(ystk, seg, preferred_element_type=jnp.float32, precision=hi)  # (2C, bn)
        inv_n = 1.0 / float(n_real)
        mean = jnp.sum(r[:C], axis=0, keepdims=True) * inv_n          # (1, bn)
        ex2 = jnp.sum(r[C:], axis=0, keepdims=True) * inv_n           # (1, bn)
        inv_std = jax.lax.rsqrt(ex2 - mean * mean + eps)              # (1, bn)
        if bn == 1:
            mu_l, inv_l = mean, inv_std                      # plain (1,1) broadcast
        else:
            # per-sample lane broadcast via tiny MXU dots (avoids lane reshapes)
            mu_l = jnp.dot(mean, segt, preferred_element_type=jnp.float32, precision=hi)
            inv_l = jnp.dot(inv_std, segt, preferred_element_type=jnp.float32, precision=hi)
        return (y - mu_l) * inv_l * g + b

    h1 = _gelu_tanh(groupnorm1(conv3x3(x, w1_ref[...]), g1_ref[...], b1_ref[...], n1))
    y2 = groupnorm1(conv3x3(h1, w2_ref[...]), g2_ref[...], b2_ref[...], n2)
    if residual:
        y2 = _gelu_tanh(x + y2)

    o_ref[...] = y2[None].astype(o_ref.dtype)                # (1, Cout_p, L) lane-dense store


# ------------------------------------ wrapper ------------------------------------
def _round8(c):
    return ((c + 7) // 8) * 8


def _pick_block_n(n, hw, max_lanes=2048):
    # Largest divisor of n whose folded lane width (bn*hw) stays <= max_lanes while keeping
    # >= 2 grid steps (so v7x can shard steps across its 2 TensorCores).
    best = 1
    for bn in range(1, n + 1):
        if n % bn or bn * hw > max_lanes:
            continue
        if n >= 2 and n // bn < 2:
            continue
        best = bn
    return best


def _stack_conv_weights(w, co_p, ci_p):
    # (Co, Ci, 3, 3) OIHW -> (Co_p, 9*Ci_p) bf16; column block t holds tap (kh, kw)=(t//3, t%3).
    co, ci = w.shape[0], w.shape[1]
    wp = jnp.zeros((co_p, ci_p, 3, 3), jnp.float32).at[:co, :ci].set(w.astype(jnp.float32))
    return jnp.transpose(wp, (0, 2, 3, 1)).reshape(co_p, 9 * ci_p).astype(jnp.bfloat16)


def _pad_affine(v, c_p):
    # gamma/beta padded with ZEROS so padded channels stay exactly 0 through GroupNorm.
    return jnp.zeros((c_p, 1), jnp.float32).at[:v.shape[0], 0].set(v.astype(jnp.float32))


def double_conv_pallas(x_nchw, w1, g1, b1, w2, g2, b2, *, residual=False):
    """x: (N, Cin, H, W) f32; w1: (Cmid, Cin, 3, 3), w2: (Cout, Cmid, 3, 3) (OIHW, PyTorch)."""
    N, Cin, H, W = x_nchw.shape
    Cmid, Cout = w1.shape[0], w2.shape[0]
    assert w1.shape == (Cmid, Cin, 3, 3) and w2.shape == (Cout, Cmid, 3, 3)
    if residual:
        assert Cin == Cout, "residual path requires in_channels == out_channels"
    HW = H * W

    bn = _pick_block_n(N, HW)
    G = N // bn
    L = bn * HW
    Cin_p, Cmid_p, Cout_p = _round8(Cin), _round8(Cmid), _round8(Cout)
    if residual:
        Cin_p = Cout_p = max(Cin_p, Cout_p)

    # activations: pad channels to a multiple of 8, fold bn samples onto the lane axis
    xp = jnp.zeros((N, Cin_p, HW), jnp.float32).at[:, :Cin, :].set(
        x_nchw.reshape(N, Cin, HW).astype(jnp.float32))
    xg = xp.reshape(G, bn, Cin_p, HW).transpose(0, 2, 1, 3).reshape(G, Cin_p, L)

    # constants precomputed once (constant index_map -> fetched once, stays VMEM-resident)
    p = np.arange(HW)
    row, col = p // W, p % W
    mrows = []
    for dh, dw in _OFFSETS:
        if dh == 0 and dw == 0:
            continue
        mrows.append((row + dh >= 0) & (row + dh < H) & (col + dw >= 0) & (col + dw < W))
    masks = jnp.asarray(np.tile(np.stack(mrows).astype(np.float32), (1, bn)))   # (8, L)
    sample_id = np.repeat(np.arange(bn), HW)
    seg_np = (sample_id[:, None] == np.arange(bn)[None, :]).astype(np.float32)
    seg = jnp.asarray(seg_np)            # (L, bn)
    segt = jnp.asarray(seg_np.T)         # (bn, L)

    # parameters: stacked bf16 conv weights + zero-padded GN affine params
    w1s = _stack_conv_weights(w1, Cmid_p, Cin_p)     # (Cmid_p, 9*Cin_p)
    w2s = _stack_conv_weights(w2, Cout_p, Cmid_p)    # (Cout_p, 9*Cmid_p)
    g1p, b1p = _pad_affine(g1, Cmid_p), _pad_affine(b1, Cmid_p)
    g2p, b2p = _pad_affine(g2, Cout_p), _pad_affine(b2, Cout_p)

    kernel = functools.partial(_double_conv_kernel, W=W, HW=HW,
                               n1=Cmid * HW, n2=Cout * HW, residual=residual)
    const2 = lambda g: (0, 0)

    out = pl.pallas_call(
        kernel,
        out_shape=jax.ShapeDtypeStruct((G, Cout_p, L), jnp.float32),
        grid=(G,),
        in_specs=[
            pl.BlockSpec((1, Cin_p, L), lambda g: (g, 0, 0)),   # x (bn samples on lanes)
            pl.BlockSpec((8, L), const2),                        # boundary masks
            pl.BlockSpec((L, bn), const2),                       # seg (lane -> sample)
            pl.BlockSpec((bn, L), const2),                       # seg^T
            pl.BlockSpec((Cmid_p, 9 * Cin_p), const2),           # conv1 stacked weights
            pl.BlockSpec((Cmid_p, 1), const2),                   # gamma1
            pl.BlockSpec((Cmid_p, 1), const2),                   # beta1
            pl.BlockSpec((Cout_p, 9 * Cmid_p), const2),          # conv2 stacked weights
            pl.BlockSpec((Cout_p, 1), const2),                   # gamma2
            pl.BlockSpec((Cout_p, 1), const2),                   # beta2
        ],
        out_specs=pl.BlockSpec((1, Cout_p, L), lambda g: (g, 0, 0)),
        compiler_params=pltpu.CompilerParams(dimension_semantics=("parallel",)),
    )(xg, masks, seg, segt, w1s, g1p, b1p, w2s, g2p, b2p)

    # unfold the folded batch, drop channel padding, back to NCHW (wrapper-side plumbing)
    out = out.reshape(G, Cout_p, bn, HW).transpose(0, 2, 1, 3).reshape(N, Cout_p, HW)
    return out[:, :Cout, :].reshape(N, Cout, H, W)


# ------------------ pure-JAX reference (matches the PyTorch module) ------------------
def _ref_groupnorm1(y, gamma, beta, eps=1e-5):
    m = jnp.mean(y, axis=(1, 2, 3), keepdims=True)
    v = jnp.mean((y - m) ** 2, axis=(1, 2, 3), keepdims=True)
    yn = (y - m) / jnp.sqrt(v + eps)
    return yn * gamma[None, :, None, None] + beta[None, :, None, None]


def ref_double_conv(x, w1, g1, b1, w2, g2, b2, *, residual=False):
    prec = jax.lax.Precision.HIGHEST
    conv = lambda a, w: jax.lax.conv_general_dilated(
        a, w, (1, 1), ((1, 1), (1, 1)),
        dimension_numbers=("NCHW", "OIHW", "NCHW"), precision=prec)
    y = conv(x, w1)
    y = _ref_groupnorm1(y, g1, b1)
    y = jax.nn.gelu(y, approximate=False)
    y = conv(y, w2)
    y = _ref_groupnorm1(y, g2, b2)
    if residual:
        y = jax.nn.gelu(x + y, approximate=False)
    return y


def _make_params(key, cin, cmid, cout):
    ks = jax.random.split(key, 6)
    w1 = 0.1 * jax.random.normal(ks[0], (cmid, cin, 3, 3), jnp.float32)
    g1 = 1.0 + 0.1 * jax.random.normal(ks[1], (cmid,), jnp.float32)
    b1 = 0.1 * jax.random.normal(ks[2], (cmid,), jnp.float32)
    w2 = 0.1 * jax.random.normal(ks[3], (cout, cmid, 3, 3), jnp.float32)
    g2 = 1.0 + 0.1 * jax.random.normal(ks[4], (cout,), jnp.float32)
    b2 = 0.1 * jax.random.normal(ks[5], (cout,), jnp.float32)
    return w1, g1, b1, w2, g2, b2


if __name__ == "__main__":
    key = jax.random.PRNGKey(0)
    kx, kp1, kp2 = jax.random.split(key, 3)

    N, Cin, H, W = 2, 4, 16, 16
    x = jax.random.normal(kx, (N, Cin, H, W), jnp.float32)

    # bf16 MXU operands + tanh-GELU (per perf review) -> compare at 2e-2 instead of 1e-2.
    TOL = 2e-2

    # Config 1: DoubleConv(4, 8)  (mid_channels defaults to out_channels, residual=False)
    p1 = _make_params(kp1, Cin, 8, 8)
    out1 = jax.block_until_ready(double_conv_pallas(x, *p1, residual=False))
    ref1 = ref_double_conv(x, *p1, residual=False)
    assert out1.shape == (N, 8, H, W)
    assert jnp.allclose(out1, ref1, atol=TOL, rtol=TOL), "mismatch vs reference (non-residual)"

    # Config 2: DoubleConv(4, 4, residual=True)
    p2 = _make_params(kp2, Cin, 4, 4)
    out2 = jax.block_until_ready(double_conv_pallas(x, *p2, residual=True))
    ref2 = ref_double_conv(x, *p2, residual=True)
    assert out2.shape == (N, 4, H, W)
    assert jnp.allclose(out2, ref2, atol=TOL, rtol=TOL), "mismatch vs reference (residual)"

    print("KERNEL_OK")
</pallas_src>

<mosaic_0001>
module attributes {stable_mosaic.version = 11 : i64} {
  func.func @_double_conv_kernel(%arg0: i32, %arg1: memref<1x8x256xf32, #tpu.memory_space<vmem>>, %arg2: memref<8x256xf32, #tpu.memory_space<vmem>>, %arg3: memref<256x1xf32, #tpu.memory_space<vmem>>, %arg4: memref<1x256xf32, #tpu.memory_space<vmem>>, %arg5: memref<8x72xbf16, #tpu.memory_space<vmem>>, %arg6: memref<8x1xf32, #tpu.memory_space<vmem>>, %arg7: memref<8x1xf32, #tpu.memory_space<vmem>>, %arg8: memref<8x72xbf16, #tpu.memory_space<vmem>>, %arg9: memref<8x1xf32, #tpu.memory_space<vmem>>, %arg10: memref<8x1xf32, #tpu.memory_space<vmem>>, %arg11: memref<1x8x256xf32, #tpu.memory_space<vmem>>) attributes {dimension_semantics = [#tpu.dimension_semantics<parallel>], iteration_bounds = array<i64: 2>, scalar_prefetch = 0 : i64, scratch_operands = 0 : i64, tpu.core_type = #tpu.core_type<tc>, window_params = [{transform_indices = @transform_0, window_bounds = array<i64: 1, 8, 256>}, {pipeline_mode = #tpu.pipeline_mode<synchronous>, transform_indices = @transform_1, window_bounds = array<i64: 8, 256>}, {pipeline_mode = #tpu.pipeline_mode<synchronous>, transform_indices = @transform_2, window_bounds = array<i64: 256, 1>}, {pipeline_mode = #tpu.pipeline_mode<synchronous>, transform_indices = @transform_3, window_bounds = array<i64: 1, 256>}, {pipeline_mode = #tpu.pipeline_mode<synchronous>, transform_indices = @transform_4, window_bounds = array<i64: 8, 72>}, {pipeline_mode = #tpu.pipeline_mode<synchronous>, transform_indices = @transform_5, window_bounds = array<i64: 8, 1>}, {pipeline_mode = #tpu.pipeline_mode<synchronous>, transform_indices = @transform_6, window_bounds = array<i64: 8, 1>}, {pipeline_mode = #tpu.pipeline_mode<synchronous>, transform_indices = @transform_7, window_bounds = array<i64: 8, 72>}, {pipeline_mode = #tpu.pipeline_mode<synchronous>, transform_indices = @transform_8, window_bounds = array<i64: 8, 1>}, {pipeline_mode = #tpu.pipeline_mode<synchronous>, transform_indices = @transform_9, window_bounds = array<i64: 8, 1>}, {transform_indices = @transform_10, window_bounds = array<i64: 1, 8, 256>}]} {
    %c0 = arith.constant 0 : index
    %c0_0 = arith.constant 0 : index
    %c0_1 = arith.constant 0 : index
    %0 = vector.load %arg1[%c0, %c0_0, %c0_1] : memref<1x8x256xf32, #tpu.memory_space<vmem>>, vector<1x8x256xf32>
    %1 = vector.shape_cast %0 : vector<1x8x256xf32> to vector<8x256xf32>
    %c0_2 = arith.constant 0 : index
    %c0_3 = arith.constant 0 : index
    %2 = vector.load %arg2[%c0_2, %c0_3] : memref<8x256xf32, #tpu.memory_space<vmem>>, vector<8x256xf32>
    %c0_4 = arith.constant 0 : index
    %c0_5 = arith.constant 0 : index
    %3 = vector.load %arg3[%c0_4, %c0_5] : memref<256x1xf32, #tpu.memory_space<vmem>>, vector<256x1xf32>
    %c0_6 = arith.constant 0 : index
    %c0_7 = arith.constant 0 : index
    %4 = vector.load %arg5[%c0_6, %c0_7] : memref<8x72xbf16, #tpu.memory_space<vmem>>, vector<8x72xbf16>
    %5 = tpu.concatenate %1, %1 in 1 : vector<8x256xf32>, vector<8x256xf32> -> vector<8x512xf32>
    %6 = vector.extract_strided_slice %5 {offsets = [0, 239], sizes = [8, 256], strides = [1, 1]} : vector<8x512xf32> to vector<8x256xf32>
    %7 = vector.extract_strided_slice %2 {offsets = [0, 0], sizes = [1, 256], strides = [1, 1]} : vector<8x256xf32> to vector<1x256xf32>
    %8 = vector.broadcast %7 : vector<1x256xf32> to vector<8x256xf32>
    %9 = arith.mulf %6, %8 : vector<8x256xf32>
    %10 = vector.extract_strided_slice %5 {offsets = [0, 240], sizes = [8, 256], strides = [1, 1]} : vector<8x512xf32> to vector<8x256xf32>
    %11 = vector.extract_strided_slice %2 {offsets = [1, 0], sizes = [1, 256], strides = [1, 1]} : vector<8x256xf32> to vector<1x256xf32>
    %12 = vector.broadcast %11 : vector<1x256xf32> to vector<8x256xf32>
    %13 = arith.mulf %10, %12 : vector<8x256xf32>
    %14 = vector.extract_strided_slice %5 {offsets = [0, 241], sizes = [8, 256], strides = [1, 1]} : vector<8x512xf32> to vector<8x256xf32>
    %15 = vector.extract_strided_slice %2 {offsets = [2, 0], sizes = [1, 256], strides = [1, 1]} : vector<8x256xf32> to vector<1x256xf32>
    %16 = vector.broadcast %15 : vector<1x256xf32> to vector<8x256xf32>
    %17 = arith.mulf %14, %16 : vector<8x256xf32>
    %18 = vector.extract_strided_slice %5 {offsets = [0, 255], sizes = [8, 256], strides = [1, 1]} : vector<8x512xf32> to vector<8x256xf32>
    %19 = vector.extract_strided_slice %2 {offsets = [3, 0], sizes = [1, 256], strides = [1, 1]} : vector<8x256xf32> to vector<1x256xf32>
    %20 = vector.broadcast %19 : vector<1x256xf32> to vector<8x256xf32>
    %21 = arith.mulf %18, %20 : vector<8x256xf32>
    %22 = vector.extract_strided_slice %5 {offsets = [0, 1], sizes = [8, 256], strides = [1, 1]} : vector<8x512xf32> to vector<8x256xf32>
    %23 = vector.extract_strided_slice %2 {offsets = [4, 0], sizes = [1, 256], strides = [1, 1]} : vector<8x256xf32> to vector<1x256xf32>
    %24 = vector.broadcast %23 : vector<1x256xf32> to vector<8x256xf32>
    %25 = arith.mulf %22, %24 : vector<8x256xf32>
    %26 = vector.extract_strided_slice %5 {offsets = [0, 15], sizes = [8, 256], strides = [1, 1]} : vector<8x512xf32> to vector<8x256xf32>
    %27 = vector.extract_strided_slice %2 {offsets = [5, 0], sizes = [1, 256], strides = [1, 1]} : vector<8x256xf32> to vector<1x256xf32>
    %28 = vector.broadcast %27 : vector<1x256xf32> to vector<8x256xf32>
    %29 = arith.mulf %26, %28 : vector<8x256xf32>
    %30 = vector.extract_strided_slice %5 {offsets = [0, 16], sizes = [8, 256], strides = [1, 1]} : vector<8x512xf32> to vector<8x256xf32>
    %31 = vector.extract_strided_slice %2 {offsets = [6, 0], sizes = [1, 256], strides = [1, 1]} : vector<8x256xf32> to vector<1x256xf32>
    %32 = vector.broadcast %31 : vector<1x256xf32> to vector<8x256xf32>
    %33 = arith.mulf %30, %32 : vector<8x256xf32>
    %34 = vector.extract_strided_slice %5 {offsets = [0, 17], sizes = [8, 256], strides = [1, 1]} : vector<8x512xf32> to vector<8x256xf32>
    %35 = vector.extract_strided_slice %2 {offsets = [7, 0], sizes = [1, 256], strides = [1, 1]} : vector<8x256xf32> to vector<1x256xf32>
    %36 = vector.broadcast %35 : vector<1x256xf32> to vector<8x256xf32>
    %37 = arith.mulf %34, %36 : vector<8x256xf32>
    %38 = tpu.concatenate %9, %13, %17, %21, %1, %25, %29, %33, %37 in 0 : vector<8x256xf32>, vector<8x256xf32>, vector<8x256xf32>, vector<8x256xf32>, vector<8x256xf32>, vector<8x256xf32>, vector<8x256xf32>, vector<8x256xf32>, vector<8x256xf32> -> vector<72x256xf32>
    %39 = arith.truncf %38 : vector<72x256xf32> to vector<72x256xbf16>
    %cst = arith.constant dense<0.000000e+00> : vector<8x256xf32>
    %40 = tpu.matmul %4, %39, %cst {dimension_numbers = #tpu.dot_dimension_numbers<[1], [0], [0], [1], [0, 0, 1, 1], [], []>} : vector<8x72xbf16>, vector<72x256xbf16>, vector<8x256xf32> -> vector<8x256xf32>
    %c0_8 = arith.constant 0 : index
    %c0_9 = arith.constant 0 : index
    %41 = vector.load %arg6[%c0_8, %c0_9] : memref<8x1xf32, #tpu.memory_space<vmem>>, vector<8x1xf32>
    %c0_10 = arith.constant 0 : index
    %c0_11 = arith.constant 0 : index
    %42 = vector.load %arg7[%c0_10, %c0_11] : memref<8x1xf32, #tpu.memory_space<vmem>>, vector<8x1xf32>
    %43 = arith.mulf %40, %40 : vector<8x256xf32>
    %44 = tpu.concatenate %40, %43 in 0 : vector<8x256xf32>, vector<8x256xf32> -> vector<16x256xf32>
    %cst_12 = arith.constant dense<0.000000e+00> : vector<16x1xf32>
    %45 = tpu.matmul %44, %3, %cst_12 {dimension_numbers = #tpu.dot_dimension_numbers<[1], [0], [0], [1], [0, 0, 1, 1], [], []>, precision = #tpu.contract_precision<fp32>} : vector<16x256xf32>, vector<256x1xf32>, vector<16x1xf32> -> vector<16x1xf32>
    %46 = vector.extract_strided_slice %45 {offsets = [0, 0], sizes = [8, 1], strides = [1, 1]} : vector<16x1xf32> to vector<8x1xf32>
    %cst_13 = arith.constant dense<0.000000e+00> : vector<1xf32>
    %47 = vector.multi_reduction <add>, %46, %cst_13 [0] : vector<8x1xf32> to vector<1xf32>
    %48 = vector.shape_cast %47 : vector<1xf32> to vector<1x1xf32>
    %cst_14 = arith.constant 4.8828125E-4 : f32
    %49 = vector.broadcast %cst_14 : f32 to vector<1x1xf32>
    %50 = arith.mulf %48, %49 : vector<1x1xf32>
    %51 = vector.extract_strided_slice %45 {offsets = [8, 0], sizes = [8, 1], strides = [1, 1]} : vector<16x1xf32> to vector<8x1xf32>
    %cst_15 = arith.constant dense<0.000000e+00> : vector<1xf32>
    %52 = vector.multi_reduction <add>, %51, %cst_15 [0] : vector<8x1xf32> to vector<1xf32>
    %53 = vector.shape_cast %52 : vector<1xf32> to vector<1x1xf32>
    %cst_16 = arith.constant 4.8828125E-4 : f32
    %54 = vector.broadcast %cst_16 : f32 to vector<1x1xf32>
    %55 = arith.mulf %53, %54 : vector<1x1xf32>
    %56 = arith.mulf %50, %50 : vector<1x1xf32>
    %57 = arith.subf %55, %56 : vector<1x1xf32>
    %cst_17 = arith.constant 9.99999974E-6 : f32
    %58 = vector.broadcast %cst_17 : f32 to vector<1x1xf32>
    %59 = arith.addf %57, %58 : vector<1x1xf32>
    %60 = math.rsqrt %59 : vector<1x1xf32>
    %61 = vector.broadcast %50 : vector<1x1xf32> to vector<8x256xf32>
    %62 = arith.subf %40, %61 : vector<8x256xf32>
    %63 = vector.broadcast %60 : vector<1x1xf32> to vector<8x256xf32>
    %64 = arith.mulf %62, %63 : vector<8x256xf32>
    %65 = vector.broadcast %41 : vector<8x1xf32> to vector<8x256xf32>
    %66 = arith.mulf %64, %65 : vector<8x256xf32>
    %67 = vector.broadcast %42 : vector<8x1xf32> to vector<8x256xf32>
    %68 = arith.addf %66, %67 : vector<8x256xf32>
    %cst_18 = arith.constant 5.000000e-01 : f32
    %69 = vector.broadcast %cst_18 : f32 to vector<8x256xf32>
    %70 = arith.mulf %69, %68 : vector<8x256xf32>
    %cst_19 = arith.constant 4.471500e-02 : f32
    %71 = vector.broadcast %cst_19 : f32 to vector<8x256xf32>
    %72 = arith.mulf %71, %68 : vector<8x256xf32>
    %73 = arith.mulf %72, %68 : vector<8x256xf32>
    %74 = arith.mulf %73, %68 : vector<8x256xf32>
    %75 = arith.addf %68, %74 : vector<8x256xf32>
    %cst_20 = arith.constant 0.797884583 : f32
    %76 = vector.broadcast %cst_20 : f32 to vector<8x256xf32>
    %77 = arith.mulf %76, %75 : vector<8x256xf32>
    %78 = math.tanh %77 : vector<8x256xf32>
    %cst_21 = arith.constant 1.000000e+00 : f32
    %79 = vector.broadcast %cst_21 : f32 to vector<8x256xf32>
    %80 = arith.addf %79, %78 : vector<8x256xf32>
    %81 = arith.mulf %70, %80 : vector<8x256xf32>
    %c0_22 = arith.constant 0 : index
    %c0_23 = arith.constant 0 : index
    %82 = vector.load %arg8[%c0_22, %c0_23] : memref<8x72xbf16, #tpu.memory_space<vmem>>, vector<8x72xbf16>
    %83 = tpu.concatenate %81, %81 in 1 : vector<8x256xf32>, vector<8x256xf32> -> vector<8x512xf32>
    %84 = vector.extract_strided_slice %83 {offsets = [0, 239], sizes = [8, 256], strides = [1, 1]} : vector<8x512xf32> to vector<8x256xf32>
    %85 = vector.extract_strided_slice %2 {offsets = [0, 0], sizes = [1, 256], strides = [1, 1]} : vector<8x256xf32> to vector<1x256xf32>
    %86 = vector.broadcast %85 : vector<1x256xf32> to vector<8x256xf32>
    %87 = arith.mulf %84, %86 : vector<8x256xf32>
    %88 = vector.extract_strided_slice %83 {offsets = [0, 240], sizes = [8, 256], strides = [1, 1]} : vector<8x512xf32> to vector<8x256xf32>
    %89 = vector.extract_strided_slice %2 {offsets = [1, 0], sizes = [1, 256], strides = [1, 1]} : vector<8x256xf32> to vector<1x256xf32>
    %90 = vector.broadcast %89 : vector<1x256xf32> to vector<8x256xf32>
    %91 = arith.mulf %88, %90 : vector<8x256xf32>
    %92 = vector.extract_strided_slice %83 {offsets = [0, 241], sizes = [8, 256], strides = [1, 1]} : vector<8x512xf32> to vector<8x256xf32>
    %93 = vector.extract_strided_slice %2 {offsets = [2, 0], sizes = [1, 256], strides = [1, 1]} : vector<8x256xf32> to vector<1x256xf32>
    %94 = vector.broadcast %93 : vector<1x256xf32> to vector<8x256xf32>
    %95 = arith.mulf %92, %94 : vector<8x256xf32>
    %96 = vector.extract_strided_slice %83 {offsets = [0, 255], sizes = [8, 256], strides = [1, 1]} : vector<8x512xf32> to vector<8x256xf32>
    %97 = vector.extract_strided_slice %2 {offsets = [3, 0], sizes = [1, 256], strides = [1, 1]} : vector<8x256xf32> to vector<1x256xf32>
    %98 = vector.broadcast %97 : vector<1x256xf32> to vector<8x256xf32>
    %99 = arith.mulf %96, %98 : vector<8x256xf32>
    %100 = vector.extract_strided_slice %83 {offsets = [0, 1], sizes = [8, 256], strides = [1, 1]} : vector<8x512xf32> to vector<8x256xf32>
    %101 = vector.extract_strided_slice %2 {offsets = [4, 0], sizes = [1, 256], strides = [1, 1]} : vector<8x256xf32> to vector<1x256xf32>
    %102 = vector.broadcast %101 : vector<1x256xf32> to vector<8x256xf32>
    %103 = arith.mulf %100, %102 : vector<8x256xf32>
    %104 = vector.extract_strided_slice %83 {offsets = [0, 15], sizes = [8, 256], strides = [1, 1]} : vector<8x512xf32> to vector<8x256xf32>
    %105 = vector.extract_strided_slice %2 {offsets = [5, 0], sizes = [1, 256], strides = [1, 1]} : vector<8x256xf32> to vector<1x256xf32>
    %106 = vector.broadcast %105 : vector<1x256xf32> to vector<8x256xf32>
    %107 = arith.mulf %104, %106 : vector<8x256xf32>
    %108 = vector.extract_strided_slice %83 {offsets = [0, 16], sizes = [8, 256], strides = [1, 1]} : vector<8x512xf32> to vector<8x256xf32>
    %109 = vector.extract_strided_slice %2 {offsets = [6, 0], sizes = [1, 256], strides = [1, 1]} : vector<8x256xf32> to vector<1x256xf32>
    %110 = vector.broadcast %109 : vector<1x256xf32> to vector<8x256xf32>
    %111 = arith.mulf %108, %110 : vector<8x256xf32>
    %112 = vector.extract_strided_slice %83 {offsets = [0, 17], sizes = [8, 256], strides = [1, 1]} : vector<8x512xf32> to vector<8x256xf32>
    %113 = vector.extract_strided_slice %2 {offsets = [7, 0], sizes = [1, 256], strides = [1, 1]} : vector<8x256xf32> to vector<1x256xf32>
    %114 = vector.broadcast %113 : vector<1x256xf32> to vector<8x256xf32>
    %115 = arith.mulf %112, %114 : vector<8x256xf32>
    %116 = tpu.concatenate %87, %91, %95, %99, %81, %103, %107, %111, %115 in 0 : vector<8x256xf32>, vector<8x256xf32>, vector<8x256xf32>, vector<8x256xf32>, vector<8x256xf32>, vector<8x256xf32>, vector<8x256xf32>, vector<8x256xf32>, vector<8x256xf32> -> vector<72x256xf32>
    %117 = arith.truncf %116 : vector<72x256xf32> to vector<72x256xbf16>
    %cst_24 = arith.constant dense<0.000000e+00> : vector<8x256xf32>
    %118 = tpu.matmul %82, %117, %cst_24 {dimension_numbers = #tpu.dot_dimension_numbers<[1], [0], [0], [1], [0, 0, 1, 1], [], []>} : vector<8x72xbf16>, vector<72x256xbf16>, vector<8x256xf32> -> vector<8x256xf32>
    %c0_25 = arith.constant 0 : index
    %c0_26 = arith.constant 0 : index
    %119 = vector.load %arg9[%c0_25, %c0_26] : memref<8x1xf32, #tpu.memory_space<vmem>>, vector<8x1xf32>
    %c0_27 = arith.constant 0 : index
    %c0_28 = arith.constant 0 : index
    %120 = vector.load %arg10[%c0_27, %c0_28] : memref<8x1xf32, #tpu.memory_space<vmem>>, vector<8x1xf32>
    %121 = arith.mulf %118, %118 : vector<8x256xf32>
    %122 = tpu.concatenate %118, %121 in 0 : vector<8x256xf32>, vector<8x256xf32> -> vector<16x256xf32>
    %cst_29 = arith.constant dense<0.000000e+00> : vector<16x1xf32>
    %123 = tpu.matmul %122, %3, %cst_29 {dimension_numbers = #tpu.dot_dimension_numbers<[1], [0], [0], [1], [0, 0, 1, 1], [], []>, precision = #tpu.contract_precision<fp32>} : vector<16x256xf32>, vector<256x1xf32>, vector<16x1xf32> -> vector<16x1xf32>
    %124 = vector.extract_strided_slice %123 {offsets = [0, 0], sizes = [8, 1], strides = [1, 1]} : vector<16x1xf32> to vector<8x1xf32>
    %cst_30 = arith.constant dense<0.000000e+00> : vector<1xf32>
    %125 = vector.multi_reduction <add>, %124, %cst_30 [0] : vector<8x1xf32> to vector<1xf32>
    %126 = vector.shape_cast %125 : vector<1xf32> to vector<1x1xf32>
    %cst_31 = arith.constant 4.8828125E-4 : f32
    %127 = vector.broadcast %cst_31 : f32 to vector<1x1xf32>
    %128 = arith.mulf %126, %127 : vector<1x1xf32>
    %129 = vector.extract_strided_slice %123 {offsets = [8, 0], sizes = [8, 1], strides = [1, 1]} : vector<16x1xf32> to vector<8x1xf32>
    %cst_32 = arith.constant dense<0.000000e+00> : vector<1xf32>
    %130 = vector.multi_reduction <add>, %129, %cst_32 [0] : vector<8x1xf32> to vector<1xf32>
    %131 = vector.shape_cast %130 : vector<1xf32> to vector<1x1xf32>
    %cst_33 = arith.constant 4.8828125E-4 : f32
    %132 = vector.broadcast %cst_33 : f32 to vector<1x1xf32>
    %133 = arith.mulf %131, %132 : vector<1x1xf32>
    %134 = arith.mulf %128, %128 : vector<1x1xf32>
    %135 = arith.subf %133, %134 : vector<1x1xf32>
    %cst_34 = arith.constant 9.99999974E-6 : f32
    %136 = vector.broadcast %cst_34 : f32 to vector<1x1xf32>
    %137 = arith.addf %135, %136 : vector<1x1xf32>
    %138 = math.rsqrt %137 : vector<1x1xf32>
    %139 = vector.broadcast %128 : vector<1x1xf32> to vector<8x256xf32>
    %140 = arith.subf %118, %139 : vector<8x256xf32>
    %141 = vector.broadcast %138 : vector<1x1xf32> to vector<8x256xf32>
    %142 = arith.mulf %140, %141 : vector<8x256xf32>
    %143 = vector.broadcast %119 : vector<8x1xf32> to vector<8x256xf32>
    %144 = arith.mulf %142, %143 : vector<8x256xf32>
    %145 = vector.broadcast %120 : vector<8x1xf32> to vector<8x256xf32>
    %146 = arith.addf %144, %145 : vector<8x256xf32>
    %147 = vector.shape_cast %146 : vector<8x256xf32> to vector<1x8x256xf32>
    %c0_35 = arith.constant 0 : index
    %c0_36 = arith.constant 0 : index
    %c0_37 = arith.constant 0 : index
    %148 = vector.load %arg11[%c0_35, %c0_36, %c0_37] : memref<1x8x256xf32, #tpu.memory_space<vmem>>, vector<1x8x256xf32>
    tpu.vector_store %arg11[%c0_35, %c0_36, %c0_37], %147 {strides = array<i32>} : memref<1x8x256xf32, #tpu.memory_space<vmem>>, vector<1x8x256xf32>,
    return
  }
  func.func @transform_0(%arg0: i32) -> (i32, i32, i32) {
    %c0_i32 = arith.constant 0 : i32
    %c0_i32_0 = arith.constant 0 : i32
    %c0_i32_1 = arith.constant 0 : i32
    return %arg0, %c0_i32, %c0_i32_0 : i32, i32, i32
  }
  func.func @transform_1(%arg0: i32) -> (i32, i32) {
    %c0_i32 = arith.constant 0 : i32
    %c0_i32_0 = arith.constant 0 : i32
    %c0_i32_1 = arith.constant 0 : i32
    return %c0_i32, %c0_i32_0 : i32, i32
  }
  func.func @transform_2(%arg0: i32) -> (i32, i32) {
    %c0_i32 = arith.constant 0 : i32
    %c0_i32_0 = arith.constant 0 : i32
    %c0_i32_1 = arith.constant 0 : i32
    return %c0_i32, %c0_i32_0 : i32, i32
  }
  func.func @transform_3(%arg0: i32) -> (i32, i32) {
    %c0_i32 = arith.constant 0 : i32
    %c0_i32_0 = arith.constant 0 : i32
    %c0_i32_1 = arith.constant 0 : i32
    return %c0_i32, %c0_i32_0 : i32, i32
  }
  func.func @transform_4(%arg0: i32) -> (i32, i32) {
    %c0_i32 = arith.constant 0 : i32
    %c0_i32_0 = arith.constant 0 : i32
    %c0_i32_1 = arith.constant 0 : i32
    return %c0_i32, %c0_i32_0 : i32, i32
  }
  func.func @transform_5(%arg0: i32) -> (i32, i32) {
    %c0_i32 = arith.constant 0 : i32
    %c0_i32_0 = arith.constant 0 : i32
    %c0_i32_1 = arith.constant 0 : i32
    return %c0_i32, %c0_i32_0 : i32, i32
  }
  func.func @transform_6(%arg0: i32) -> (i32, i32) {
    %c0_i32 = arith.constant 0 : i32
    %c0_i32_0 = arith.constant 0 : i32
    %c0_i32_1 = arith.constant 0 : i32
    return %c0_i32, %c0_i32_0 : i32, i32
  }
  func.func @transform_7(%arg0: i32) -> (i32, i32) {
    %c0_i32 = arith.constant 0 : i32
    %c0_i32_0 = arith.constant 0 : i32
    %c0_i32_1 = arith.constant 0 : i32
    return %c0_i32, %c0_i32_0 : i32, i32
  }
  func.func @transform_8(%arg0: i32) -> (i32, i32) {
    %c0_i32 = arith.constant 0 : i32
    %c0_i32_0 = arith.constant 0 : i32
    %c0_i32_1 = arith.constant 0 : i32
    return %c0_i32, %c0_i32_0 : i32, i32
  }
  func.func @transform_9(%arg0: i32) -> (i32, i32) {
    %c0_i32 = arith.constant 0 : i32
    %c0_i32_0 = arith.constant 0 : i32
    %c0_i32_1 = arith.constant 0 : i32
    return %c0_i32, %c0_i32_0 : i32, i32
  }
  func.func @transform_10(%arg0: i32) -> (i32, i32, i32) {
    %c0_i32 = arith.constant 0 : i32
    %c0_i32_0 = arith.constant 0 : i32
    %c0_i32_1 = arith.constant 0 : i32
    return %arg0, %c0_i32, %c0_i32_0 : i32, i32, i32
  }
}

</mosaic_0001>

<llo_original>
// kernel: tpu_custom_call.1
$region0: #{tpu_custom_call.1}
  #allocation0 [shape = 'u32[]', space=smem, size = 0x4, offset = 0x4, fixed_abs, tag = 'smem constant byte address 0x4 - core index']
  #allocation1 [shape = 'u32[144,128]{1,0:T(1,128)}', space=vmem, size = 0x12000, scoped, tag = 'internal scratch']
  %s0 = inlined_call_operand.vmem [shape: f32[2,8,256], index: 0, kind: input, shape index: {}]
  %s1 = inlined_call_operand.vmem [shape: f32[8,256], index: 1, kind: input, shape index: {}]
  %s2 = inlined_call_operand.vmem [shape: f32[256,1], index: 2, kind: input, shape index: {}]
  %s3 = inlined_call_operand.vmem [shape: f32[1,256], index: 3, kind: input, shape index: {}]
  %s4 = inlined_call_operand.vmem [shape: bf16[8,72], index: 4, kind: input, shape index: {}]
  %s5 = inlined_call_operand.vmem [shape: f32[8,1], index: 5, kind: input, shape index: {}]
  %s6 = inlined_call_operand.vmem [shape: f32[8,1], index: 6, kind: input, shape index: {}]
  %s7 = inlined_call_operand.vmem [shape: bf16[8,72], index: 7, kind: input, shape index: {}]
  %s8 = inlined_call_operand.vmem [shape: f32[8,1], index: 8, kind: input, shape index: {}]
  %s9 = inlined_call_operand.vmem [shape: f32[8,1], index: 9, kind: input, shape index: {}]
  %s10 = inlined_call_operand.hbm [shape: f32[2,8,256], index: 10, kind: output, shape index: {}]
  %s11 = sld [smem:[#allocation0]]
  $region73: #{tpu_custom_call.1} parent=0
    _
  %s13 = ssub.s32 1, %s11
  %s14 = scalar_select 0, %s13, %s11
  $region1: #{tpu_custom_call.1} parent=0
    #allocation2 [shape = 'u8[16384]{0}', space=vmem, size = 0x4000, scoped, tag = 'output window, operand 0']
    #allocation3 [shape = 's32[2]{0}', space=sflag, size = 0x8, scoped, tag = 'scoped memory for tpu_custom_call.1']
    %15 = vsyncpa [#allocation3], 0
    %s16 = scalar_lea.sflag [#allocation3], 1
    %17 = vsyncpa %s16, 0
    loop: start=0, step=1, limit=4
    $region2: #{tpu_custom_call.1} parent=1 // loop_pre_header
      _
    $region3: #{tpu_custom_call.1} parent=1 // loop_header
      %s19 = sphi 0, %s23
      %p20 = scmp.ge.s32.totalorder %s19, 4
      %s29 = sphi 0, %s31
      %s32 = sphi 0, %s29
      %s33 = sphi 0, %s32
      %s49 = sphi 0, %s33
      %s53 = sphi 0, %s53
      %s55 = sphi 0, %s53
      %s56 = sphi 0, %s55
      %s70 = sphi 0, %s56
      %s74 = sphi 0, %s74
      %s76 = sphi 0, %s74
      %s77 = sphi 0, %s76
      %s91 = sphi 0, %s77
      %s95 = sphi 0, %s95
      %s97 = sphi 0, %s95
      %s98 = sphi 0, %s97
      %s112 = sphi 0, %s98
      %s116 = sphi 0, %s116
      %s118 = sphi 0, %s116
      %s119 = sphi 0, %s118
      %s133 = sphi 0, %s119
      %s137 = sphi 0, %s137
      %s139 = sphi 0, %s137
      %s140 = sphi 0, %s139
      %s154 = sphi 0, %s140
      %s158 = sphi 0, %s158
      %s160 = sphi 0, %s158
      %s161 = sphi 0, %s160
      %s175 = sphi 0, %s161
      %s179 = sphi 0, %s179
      %s181 = sphi 0, %s179
      %s182 = sphi 0, %s181
      %s196 = sphi 0, %s182
      %s200 = sphi 0, %s200
      %s202 = sphi 0, %s200
      %s203 = sphi 0, %s202
      %s217 = sphi 0, %s203
      %s221 = sphi 0, %s221
      %s223 = sphi 0, %s221
      %s224 = sphi 0, %s223
      %s238 = sphi 0, %s224
      %s244 = sphi 0, %s246
      %s247 = sphi 0, %s244
      %s248 = sphi 0, %s247
      %s264 = sphi 0, %s248
    $region4: #{tpu_custom_call.1} parent=1 // loop_header_branch
      %22 = sbr.rel (%p20) target = $region8
    $region5: #{tpu_custom_call.1} parent=1 // loop_body
      %s24 = ssub.s32 %s19, 1
      %s25 = ssub.s32 %s19, 2
      %s26 = sadd.s32 %s19, 1
      %s27 = ssub.s32 %s19, %s26
      %p28 = scmp.eq.s32.totalorder %s27, 0
      %s30 = sadd.s32 %s29, 1
      %s31 = scalar_select %p28, %s29, %s30
      %p34 = pneg %p28
      %p35 = scmp.eq.s32.totalorder %s19, 1
      %p36 = por %p34, %p35
      %p37 = scmp.ne.s32.totalorder %s29, %s32
      %p38 = scmp.eq.s32.totalorder %s19, 0
      %p39 = por %p37, %p38
      %p40 = scmp.ne.s32.totalorder %s29, %s32
      %p41 = scmp.eq.s32.totalorder %s24, 1
      %p42 = por %p40, %p41
      %p43 = scmp.ne.s32.totalorder %s32, %s33
      %p44 = scmp.eq.s32.totalorder %s24, 0
      %p45 = por %p43, %p44
      %p46 = scmp.ne.s32.totalorder %s32, %s33
      %p47 = scmp.eq.s32.totalorder %s25, 1
      %p48 = por %p46, %p47
      %p50 = scmp.ne.s32.totalorder %s33, %s49
      %p51 = scmp.eq.s32.totalorder %s25, 0
      %p52 = por %p50, %p51
      %s54 = sadd.s32 %s53, 1
      %p57 = scmp.eq.s32.totalorder %s19, 1
      %p58 = scmp.ne.s32.totalorder %s53, %s55
      %p59 = scmp.eq.s32.totalorder %s19, 0
      %p60 = por %p58, %p59
      %p61 = scmp.ne.s32.totalorder %s53, %s55
      %p62 = scmp.eq.s32.totalorder %s24, 1
      %p63 = por %p61, %p62
      %p64 = scmp.ne.s32.totalorder %s55, %s56
      %p65 = scmp.eq.s32.totalorder %s24, 0
      %p66 = por %p64, %p65
      %p67 = scmp.ne.s32.totalorder %s55, %s56
      %p68 = scmp.eq.s32.totalorder %s25, 1
      %p69 = por %p67, %p68
      %p71 = scmp.ne.s32.totalorder %s56, %s70
      %p72 = scmp.eq.s32.totalorder %s25, 0
      %p73 = por %p71, %p72
      %s75 = sadd.s32 %s74, 1
      %p78 = scmp.eq.s32.totalorder %s19, 1
      %p79 = scmp.ne.s32.totalorder %s74, %s76
      %p80 = scmp.eq.s32.totalorder %s19, 0
      %p81 = por %p79, %p80
      %p82 = scmp.ne.s32.totalorder %s74, %s76
      %p83 = scmp.eq.s32.totalorder %s24, 1
      %p84 = por %p82, %p83
      %p85 = scmp.ne.s32.totalorder %s76, %s77
      %p86 = scmp.eq.s32.totalorder %s24, 0
      %p87 = por %p85, %p86
      %p88 = scmp.ne.s32.totalorder %s76, %s77
      %p89 = scmp.eq.s32.totalorder %s25, 1
      %p90 = por %p88, %p89
      %p92 = scmp.ne.s32.totalorder %s77, %s91
      %p93 = scmp.eq.s32.totalorder %s25, 0
      %p94 = por %p92, %p93
      %s96 = sadd.s32 %s95, 1
      %p99 = scmp.eq.s32.totalorder %s19, 1
      %p100 = scmp.ne.s32.totalorder %s95, %s97
      %p101 = scmp.eq.s32.totalorder %s19, 0
      %p102 = por %p100, %p101
      %p103 = scmp.ne.s32.totalorder %s95, %s97
      %p104 = scmp.eq.s32.totalorder %s24, 1
      %p105 = por %p103, %p104
      %p106 = scmp.ne.s32.totalorder %s97, %s98
      %p107 = scmp.eq.s32.totalorder %s24, 0
      %p108 = por %p106, %p107
      %p109 = scmp.ne.s32.totalorder %s97, %s98
      %p110 = scmp.eq.s32.totalorder %s25, 1
      %p111 = por %p109, %p110
      %p113 = scmp.ne.s32.totalorder %s98, %s112
      %p114 = scmp.eq.s32.totalorder %s25, 0
      %p115 = por %p113, %p114
      %s117 = sadd.s32 %s116, 1
      %p120 = scmp.eq.s32.totalorder %s19, 1
      %p121 = scmp.ne.s32.totalorder %s116, %s118
      %p122 = scmp.eq.s32.totalorder %s19, 0
      %p123 = por %p121, %p122
      %p124 = scmp.ne.s32.totalorder %s116, %s118
      %p125 = scmp.eq.s32.totalorder %s24, 1
      %p126 = por %p124, %p125
      %p127 = scmp.ne.s32.totalorder %s118, %s119
      %p128 = scmp.eq.s32.totalorder %s24, 0
      %p129 = por %p127, %p128
      %p130 = scmp.ne.s32.totalorder %s118, %s119
      %p131 = scmp.eq.s32.totalorder %s25, 1
      %p132 = por %p130, %p131
      %p134 = scmp.ne.s32.totalorder %s119, %s133
      %p135 = scmp.eq.s32.totalorder %s25, 0
      %p136 = por %p134, %p135
      %s138 = sadd.s32 %s137, 1
      %p141 = scmp.eq.s32.totalorder %s19, 1
      %p142 = scmp.ne.s32.totalorder %s137, %s139
      %p143 = scmp.eq.s32.totalorder %s19, 0
      %p144 = por %p142, %p143
      %p145 = scmp.ne.s32.totalorder %s137, %s139
      %p146 = scmp.eq.s32.totalorder %s24, 1
      %p147 = por %p145, %p146
      %p148 = scmp.ne.s32.totalorder %s139, %s140
      %p149 = scmp.eq.s32.totalorder %s24, 0
      %p150 = por %p148, %p149
      %p151 = scmp.ne.s32.totalorder %s139, %s140
      %p152 = scmp.eq.s32.totalorder %s25, 1
      %p153 = por %p151, %p152
      %p155 = scmp.ne.s32.totalorder %s140, %s154
      %p156 = scmp.eq.s32.totalorder %s25, 0
      %p157 = por %p155, %p156
      %s159 = sadd.s32 %s158, 1
      %p162 = scmp.eq.s32.totalorder %s19, 1
      %p163 = scmp.ne.s32.totalorder %s158, %s160
      %p164 = scmp.eq.s32.totalorder %s19, 0
      %p165 = por %p163, %p164
      %p166 = scmp.ne.s32.totalorder %s158, %s160
      %p167 = scmp.eq.s32.totalorder %s24, 1
      %p168 = por %p166, %p167
      %p169 = scmp.ne.s32.totalorder %s160, %s161
      %p170 = scmp.eq.s32.totalorder %s24, 0
      %p171 = por %p169, %p170
      %p172 = scmp.ne.s32.totalorder %s160, %s161
      %p173 = scmp.eq.s32.totalorder %s25, 1
      %p174 = por %p172, %p173
      %p176 = scmp.ne.s32.totalorder %s161, %s175
      %p177 = scmp.eq.s32.totalorder %s25, 0
      %p178 = por %p176, %p177
      %s180 = sadd.s32 %s179, 1
      %p183 = scmp.eq.s32.totalorder %s19, 1
      %p184 = scmp.ne.s32.totalorder %s179, %s181
      %p185 = scmp.eq.s32.totalorder %s19, 0
      %p186 = por %p184, %p185
      %p187 = scmp.ne.s32.totalorder %s179, %s181
      %p188 = scmp.eq.s32.totalorder %s24, 1
      %p189 = por %p187, %p188
      %p190 = scmp.ne.s32.totalorder %s181, %s182
      %p191 = scmp.eq.s32.totalorder %s24, 0
      %p192 = por %p190, %p191
      %p193 = scmp.ne.s32.totalorder %s181, %s182
      %p194 = scmp.eq.s32.totalorder %s25, 1
      %p195 = por %p193, %p194
      %p197 = scmp.ne.s32.totalorder %s182, %s196
      %p198 = scmp.eq.s32.totalorder %s25, 0
      %p199 = por %p197, %p198
      %s201 = sadd.s32 %s200, 1
      %p204 = scmp.eq.s32.totalorder %s19, 1
      %p205 = scmp.ne.s32.totalorder %s200, %s202
      %p206 = scmp.eq.s32.totalorder %s19, 0
      %p207 = por %p205, %p206
      %p208 = scmp.ne.s32.totalorder %s200, %s202
      %p209 = scmp.eq.s32.totalorder %s24, 1
      %p210 = por %p208, %p209
      %p211 = scmp.ne.s32.totalorder %s202, %s203
      %p212 = scmp.eq.s32.totalorder %s24, 0
      %p213 = por %p211, %p212
      %p214 = scmp.ne.s32.totalorder %s202, %s203
      %p215 = scmp.eq.s32.totalorder %s25, 1
      %p216 = por %p214, %p215
      %p218 = scmp.ne.s32.totalorder %s203, %s217
      %p219 = scmp.eq.s32.totalorder %s25, 0
      %p220 = por %p218, %p219
      %s222 = sadd.s32 %s221, 1
      %p225 = scmp.eq.s32.totalorder %s19, 1
      %p226 = scmp.ne.s32.totalorder %s221, %s223
      %p227 = scmp.eq.s32.totalorder %s19, 0
      %p228 = por %p226, %p227
      %p229 = scmp.ne.s32.totalorder %s221, %s223
      %p230 = scmp.eq.s32.totalorder %s24, 1
      %p231 = por %p229, %p230
      %p232 = scmp.ne.s32.totalorder %s223, %s224
      %p233 = scmp.eq.s32.totalorder %s24, 0
      %p234 = por %p232, %p233
      %p235 = scmp.ne.s32.totalorder %s223, %s224
      %p236 = scmp.eq.s32.totalorder %s25, 1
      %p237 = por %p235, %p236
      %p239 = scmp.ne.s32.totalorder %s224, %s238
      %p240 = scmp.eq.s32.totalorder %s25, 0
      %p241 = por %p239, %p240
      %s242 = ssub.s32 %s19, %s26
      %p243 = scmp.eq.s32.totalorder %s242, 0
      %s245 = sadd.s32 %s244, 1
      %s246 = scalar_select %p243, %s244, %s245
      %p249 = pneg %p243
      %p250 = scmp.eq.s32.totalorder %s19, 1
      %p251 = por %p249, %p250
      %p252 = scmp.ne.s32.totalorder %s244, %s247
      %p253 = scmp.eq.s32.totalorder %s19, 0
      %p254 = por %p252, %p253
      %p255 = scmp.ne.s32.totalorder %s244, %s247
      %p256 = scmp.eq.s32.totalorder %s24, 1
      %p257 = por %p255, %p256
      %p258 = scmp.ne.s32.totalorder %s247, %s248
      %p259 = scmp.eq.s32.totalorder %s24, 0
      %p260 = por %p258, %p259
      %p261 = scmp.ne.s32.totalorder %s247, %s248
      %p262 = scmp.eq.s32.totalorder %s25, 1
      %p263 = por %p261, %p262
      %p265 = scmp.ne.s32.totalorder %s248, %s264
      %p266 = scmp.eq.s32.totalorder %s25, 0
      %p267 = por %p265, %p266
      %p268 = scmp.le.s32.totalorder 1, %s19
      %p269 = scmp.lt.s32.totalorder %s19, 3
      %p270 = pnand %p268, %p269
      %p271 = pneg %p270
      // Predicated region
      $region9: #{tpu_custom_call.1} parent=5 // pred_check
        _
      $region10: #{tpu_custom_call.1} parent=5 // pred_check_branch
        %273 = sbr.rel (%p270) target = $region12
      $region11: #{tpu_custom_call.1} parent=5 // pred_region
        %s274 = ssub.s32 %s19, 1
        // Predicated region
        $region13: #{tpu_custom_call.1} parent=11 // pred_check
          %p275 = pneg %p66
        $region14: #{tpu_custom_call.1} parent=11 // pred_check_branch
          %277 = sbr.rel (%p275) target = $region16
        $region15: #{tpu_custom_call.1} parent=11 // pred_region
          _
        $region16: #{tpu_custom_call.1} parent=11 // pred_fallthru
          _
        // Predicated region
        $region17: #{tpu_custom_call.1} parent=11 // pred_check
          %p278 = pneg %p87
        $region18: #{tpu_custom_call.1} parent=11 // pred_check_branch
          %280 = sbr.rel (%p278) target = $region20
        $region19: #{tpu_custom_call.1} parent=11 // pred_region
          _
        $region20: #{tpu_custom_call.1} parent=11 // pred_fallthru
          _
        // Predicated region
        $region21: #{tpu_custom_call.1} parent=11 // pred_check
          %p281 = pneg %p108
        $region22: #{tpu_custom_call.1} parent=11 // pred_check_branch
          %283 = sbr.rel (%p281) target = $region24
        $region23: #{tpu_custom_call.1} parent=11 // pred_region
          _
        $region24: #{tpu_custom_call.1} parent=11 // pred_fallthru
          _
        // Predicated region
        $region25: #{tpu_custom_call.1} parent=11 // pred_check
          %p284 = pneg %p129
        $region26: #{tpu_custom_call.1} parent=11 // pred_check_branch
          %286 = sbr.rel (%p284) target = $region28
        $region27: #{tpu_custom_call.1} parent=11 // pred_region
          _
        $region28: #{tpu_custom_call.1} parent=11 // pred_fallthru
          _
        // Predicated region
        $region29: #{tpu_custom_call.1} parent=11 // pred_check
          %p287 = pneg %p150
        $region30: #{tpu_custom_call.1} parent=11 // pred_check_branch
          %289 = sbr.rel (%p287) target = $region32
        $region31: #{tpu_custom_call.1} parent=11 // pred_region
          _
        $region32: #{tpu_custom_call.1} parent=11 // pred_fallthru
          _
        // Predicated region
        $region33: #{tpu_custom_call.1} parent=11 // pred_check
          %p290 = pneg %p171
        $region34: #{tpu_custom_call.1} parent=11 // pred_check_branch
          %292 = sbr.rel (%p290) target = $region36
        $region35: #{tpu_custom_call.1} parent=11 // pred_region
          _
        $region36: #{tpu_custom_call.1} parent=11 // pred_fallthru
          _
        // Predicated region
        $region37: #{tpu_custom_call.1} parent=11 // pred_check
          %p293 = pneg %p192
        $region38: #{tpu_custom_call.1} parent=11 // pred_check_branch
          %295 = sbr.rel (%p293) target = $region40
        $region39: #{tpu_custom_call.1} parent=11 // pred_region
          _
        $region40: #{tpu_custom_call.1} parent=11 // pred_fallthru
          _
        // Predicated region
        $region41: #{tpu_custom_call.1} parent=11 // pred_check
          %p296 = pneg %p213
        $region42: #{tpu_custom_call.1} parent=11 // pred_check_branch
          %298 = sbr.rel (%p296) target = $region44
        $region43: #{tpu_custom_call.1} parent=11 // pred_region
          _
        $region44: #{tpu_custom_call.1} parent=11 // pred_fallthru
          _
        // Predicated region
        $region45: #{tpu_custom_call.1} parent=11 // pred_check
          %p299 = pneg %p234
        $region46: #{tpu_custom_call.1} parent=11 // pred_check_branch
          %301 = sbr.rel (%p299) target = $region48
        $region47: #{tpu_custom_call.1} parent=11 // pred_region
          _
        $region48: #{tpu_custom_call.1} parent=11 // pred_fallthru
          _
      $region12: #{tpu_custom_call.1} parent=5 // pred_fallthru
        _
      %p302 = scmp.lt.s32.totalorder %s19, 2
      // Predicated region
      $region49: #{tpu_custom_call.1} parent=5 // pred_check
        %p303 = pneg %p302
      $region50: #{tpu_custom_call.1} parent=5 // pred_check_branch
        %305 = sbr.rel (%p303) target = $region52
      $region51: #{tpu_custom_call.1} parent=5 // pred_region
        // Predicated region
        $region53: #{tpu_custom_call.1} parent=51 // pred_check
          %p306 = pneg %p39
        $region54: #{tpu_custom_call.1} parent=51 // pred_check_branch
          %308 = sbr.rel (%p306) target = $region56
        $region55: #{tpu_custom_call.1} parent=51 // pred_region
          %p309 = scmp.lt.s32.totalorder %s19, 1
          %s310 = scalar_select %p309, %s19, 1
          %s311 = smul.addr %s310, 2
          %s312 = smul.addr %s311, 8
          %s313 = scalar_lea.vmem %s0, %s312
        $region56: #{tpu_custom_call.1} parent=51 // pred_fallthru
          _
      $region52: #{tpu_custom_call.1} parent=5 // pred_fallthru
        _
      %p314 = scmp.le.s32.totalorder 1, %s19
      %p315 = scmp.lt.s32.totalorder %s19, 3
      %p316 = pnand %p314, %p315
      %p317 = pneg %p316
      // Predicated region
      $region57: #{tpu_custom_call.1} parent=5 // pred_check
        _
      $region58: #{tpu_custom_call.1} parent=5 // pred_check_branch
        %319 = sbr.rel (%p316) target = $region60
      $region59: #{tpu_custom_call.1} parent=5 // pred_region
        %s320 = ssub.s32 %s19, 1
        %p321 = scmp.lt.s32.totalorder %s24, 1
        %s322 = scalar_select %p321, %s24, 1
        %s323 = smul.addr %s322, 2
        %s324 = smul.addr %s323, 8
        %s325 = scalar_lea.vmem %s0, %s324
        %p326 = pneg %p45
        %p327 = pneg %p42
        %p328 = pneg %p66
        %p329 = pneg %p63
        %p330 = pneg %p87
        %p331 = pneg %p84
        %p332 = pneg %p108
        %p333 = pneg %p105
        %p334 = pneg %p129
        %p335 = pneg %p126
        %p336 = pneg %p150
        %p337 = pneg %p147
        %p338 = pneg %p171
        %p339 = pneg %p168
        %p340 = pneg %p192
        %p341 = pneg %p189
        %p342 = pneg %p213
        %p343 = pneg %p210
        %p344 = pneg %p234
        %p345 = pneg %p231
        %p346 = pneg %p260
        %p347 = pneg %p257
        %s348 = sand.u32 %s247, 1
        %s349 = scalar_lea.sflag [#allocation3], %s348
        %s350 = sand.u32 %s247, 1
        %s351 = smul.addr %s350, 16
        %s352 = scalar_lea.vmem [#allocation2], %s351
        %p353 = scmp.lt.s32.totalorder %s24, 1
        %s354 = scalar_select %p353, %s24, 1
        %s355 = smul.addr %s354, 2
        %s356 = smul.addr %s355, 8
        %s357 = scalar_lea.vmem %s0, %s356
        %v359 = vld [vmem:[%s357] sm:$0xff]
        %v360 = vld [vmem:[%s357 + $0x8] sm:$0xff]
        %v361 = vld [vmem:[%s1] sm:$0xff]
        %v362 = vld [vmem:[%s1 + $0x8] sm:$0xff]
        %v363 = vld [vmem:[%s2] sm:$0xff]
        %v364 = vld [vmem:[%s2 + $0x8] sm:$0xff]
        %v365 = vld [vmem:[%s2 + $0x10] sm:$0xff]
        %v366 = vld [vmem:[%s2 + $0x18] sm:$0xff]
        %v367 = vld [vmem:[%s2 + $0x20] sm:$0xff]
        %v368 = vld [vmem:[%s2 + $0x28] sm:$0xff]
        %v369 = vld [vmem:[%s2 + $0x30] sm:$0xff]
        %v370 = vld [vmem:[%s2 + $0x38] sm:$0xff]
        %v371 = vld [vmem:[%s2 + $0x40] sm:$0xff]
        %v372 = vld [vmem:[%s2 + $0x48] sm:$0xff]
        %v373 = vld [vmem:[%s2 + $0x50] sm:$0xff]
        %v374 = vld [vmem:[%s2 + $0x58] sm:$0xff]
        %v375 = vld [vmem:[%s2 + $0x60] sm:$0xff]
        %v376 = vld [vmem:[%s2 + $0x68] sm:$0xff]
        %v377 = vld [vmem:[%s2 + $0x70] sm:$0xff]
        %v378 = vld [vmem:[%s2 + $0x78] sm:$0xff]
        %v379 = vld [vmem:[%s2 + $0x80] sm:$0xff]
        %v380 = vld [vmem:[%s2 + $0x88] sm:$0xff]
        %v381 = vld [vmem:[%s2 + $0x90] sm:$0xff]
        %v382 = vld [vmem:[%s2 + $0x98] sm:$0xff]
        %v383 = vld [vmem:[%s2 + $0xa0] sm:$0xff]
        %v384 = vld [vmem:[%s2 + $0xa8] sm:$0xff]
        %v385 = vld [vmem:[%s2 + $0xb0] sm:$0xff]
        %v386 = vld [vmem:[%s2 + $0xb8] sm:$0xff]
        %v387 = vld [vmem:[%s2 + $0xc0] sm:$0xff]
        %v388 = vld [vmem:[%s2 + $0xc8] sm:$0xff]
        %v389 = vld [vmem:[%s2 + $0xd0] sm:$0xff]
        %v390 = vld [vmem:[%s2 + $0xd8] sm:$0xff]
        %v391 = vld [vmem:[%s2 + $0xe0] sm:$0xff]
        %v392 = vld [vmem:[%s2 + $0xe8] sm:$0xff]
        %v393 = vld [vmem:[%s2 + $0xf0] sm:$0xff]
        %v394 = vld [vmem:[%s2 + $0xf8] sm:$0xff]
        %v395 = vld [vmem:[%s4] sm:$0xf]
        %v396 = vlaneseq
        %v397 = vshrl.u32 %v396, 7
        %v398 = vsub.s32 0, %v397
        %v399 = vrot.slane %v361, %v398
        %v400 = vlaneseq
        %v401 = vshrl.u32 %v400, 7
        %v402 = vsub.s32 0, %v401
        %v403 = vrot.slane %v362, %v402
        %406 = vrot.lane.b32.xlu0 %v399, 111
        %v407 = vpop.permute.xlu0 %406
        %408 = vrot.lane.b32.xlu0 %v403, 111
        %v409 = vpop.permute.xlu0 %408
        %vm410 = vcmask 908288
        %v411 = vsel %vm410, %v407, %v409
        %v415 = vmul.f32 %v360, %v407
        %v416 = vmul.f32 %v359, %v411
        %v417 = vmul.f32 %v360, %v409
        %v418 = vlaneseq
        %v419 = vshrl.u32 %v418, 7
        %v420 = vsub.s32 1, %v419
        %v421 = vrot.slane %v361, %v420
        %v422 = vlaneseq
        %v423 = vshrl.u32 %v422, 7
        %v424 = vsub.s32 1, %v423
        %v425 = vrot.slane %v362, %v424
        %428 = vrot.lane.b32.xlu0 %v421, 112
        %v429 = vpop.permute.xlu0 %428
        %430 = vrot.lane.b32.xlu0 %v425, 112
        %v431 = vpop.permute.xlu0 %430
        %vm432 = vcmask 916480
        %v433 = vsel %vm432, %v429, %v431
        %v437 = vmul.f32 %v360, %v429
        %v438 = vmul.f32 %v359, %v433
        %v439 = vmul.f32 %v360, %v431
        %v440 = vlaneseq
        %v441 = vshrl.u32 %v440, 7
        %v442 = vsub.s32 2, %v441
        %v443 = vrot.slane %v361, %v442
        %v444 = vlaneseq
        %v445 = vshrl.u32 %v444, 7
        %v446 = vsub.s32 2, %v445
        %v447 = vrot.slane %v362, %v446
        %450 = vrot.lane.b32.xlu0 %v443, 113
        %v451 = vpop.permute.xlu0 %450
        %452 = vrot.lane.b32.xlu0 %v447, 113
        %v453 = vpop.permute.xlu0 %452
        %vm454 = vcmask 924672
        %v455 = vsel %vm454, %v451, %v453
        %v459 = vmul.f32 %v360, %v451
        %v460 = vmul.f32 %v359, %v455
        %v461 = vmul.f32 %v360, %v453
        %v462 = vlaneseq
        %v463 = vshrl.u32 %v462, 7
        %v464 = vsub.s32 3, %v463
        %v465 = vrot.slane %v361, %v464
        %v466 = vlaneseq
        %v467 = vshrl.u32 %v466, 7
        %v468 = vsub.s32 3, %v467
        %v469 = vrot.slane %v362, %v468
        %472 = vrot.lane.b32.xlu0 %v465, 127
        %v473 = vpop.permute.xlu0 %472
        %474 = vrot.lane.b32.xlu0 %v469, 127
        %v475 = vpop.permute.xlu0 %474
        %vm476 = vcmask 1039360
        %v477 = vsel %vm476, %v473, %v475
        %v481 = vmul.f32 %v360, %v473
        %v482 = vmul.f32 %v359, %v477
        %v483 = vmul.f32 %v360, %v475
        %v484 = vlaneseq
        %v485 = vshrl.u32 %v484, 7
        %v486 = vsub.s32 4, %v485
        %v487 = vrot.slane %v361, %v486
        %v488 = vlaneseq
        %v489 = vshrl.u32 %v488, 7
        %v490 = vsub.s32 4, %v489
        %v491 = vrot.slane %v362, %v490
        %494 = vrot.lane.b32.xlu0 %v487, 1
        %v495 = vpop.permute.xlu0 %494
        %496 = vrot.lane.b32.xlu0 %v491, 1
        %v497 = vpop.permute.xlu0 %496
        %vm498 = vcmask 7168
        %v499 = vsel %vm498, %v495, %v497
        %v503 = vmul.f32 %v359, %v495
        %v504 = vmul.f32 %v360, %v499
        %v505 = vmul.f32 %v359, %v497
        %v506 = vlaneseq
        %v507 = vshrl.u32 %v506, 7
        %v508 = vsub.s32 5, %v507
        %v509 = vrot.slane %v361, %v508
        %v510 = vlaneseq
        %v511 = vshrl.u32 %v510, 7
        %v512 = vsub.s32 5, %v511
        %v513 = vrot.slane %v362, %v512
        %516 = vrot.lane.b32.xlu0 %v509, 15
        %v517 = vpop.permute.xlu0 %516
        %518 = vrot.lane.b32.xlu0 %v513, 15
        %v519 = vpop.permute.xlu0 %518
        %vm520 = vcmask 121856
        %v521 = vsel %vm520, %v517, %v519
        %v525 = vmul.f32 %v359, %v517
        %v526 = vmul.f32 %v360, %v521
        %v527 = vmul.f32 %v359, %v519
        %v528 = vlaneseq
        %v529 = vshrl.u32 %v528, 7
        %v530 = vsub.s32 6, %v529
        %v531 = vrot.slane %v361, %v530
        %v532 = vlaneseq
        %v533 = vshrl.u32 %v532, 7
        %v534 = vsub.s32 6, %v533
        %v535 = vrot.slane %v362, %v534
        %538 = vrot.lane.b32.xlu0 %v531, 16
        %v539 = vpop.permute.xlu0 %538
        %540 = vrot.lane.b32.xlu0 %v535, 16
        %v541 = vpop.permute.xlu0 %540
        %vm542 = vcmask 130048
        %v543 = vsel %vm542, %v539, %v541
        %v547 = vmul.f32 %v359, %v539
        %v548 = vmul.f32 %v360, %v543
        %v549 = vmul.f32 %v359, %v541
        %v550 = vlaneseq
        %v551 = vshrl.u32 %v550, 7
        %v552 = vsub.s32 7, %v551
        %v553 = vrot.slane %v361, %v552
        %v554 = vlaneseq
        %v555 = vshrl.u32 %v554, 7
        %v556 = vsub.s32 7, %v555
        %v557 = vrot.slane %v362, %v556
        %560 = vrot.lane.b32.xlu0 %v553, 17
        %v561 = vpop.permute.xlu0 %560
        %562 = vrot.lane.b32.xlu0 %v557, 17
        %v563 = vpop.permute.xlu0 %562
        %vm564 = vcmask 138240
        %v565 = vsel %vm564, %v561, %v563
        %v569 = vmul.f32 %v359, %v561
        %v570 = vmul.f32 %v360, %v565
        %v571 = vmul.f32 %v359, %v563
        %575 = vrot.lane.b32.xlu0 %v437, 127
        %v576 = vpop.permute.xlu0 %575
        %577 = vrot.lane.b32.xlu0 %v438, 127
        %v578 = vpop.permute.xlu0 %577
        %579 = vrot.lane.b32.xlu0 %v439, 127
        %v580 = vpop.permute.xlu0 %579
        %v581 = vsel %vm476, %v576, %v578
        %v582 = vsel %vm476, %v578, %v580
        %589 = vrot.lane.b32.xlu0 %v459, 126
        %v590 = vpop.permute.xlu0 %589
        %591 = vrot.lane.b32.xlu0 %v460, 126
        %v592 = vpop.permute.xlu0 %591
        %593 = vrot.lane.b32.xlu0 %v461, 126
        %v594 = vpop.permute.xlu0 %593
        %vm595 = vcmask 1031168
        %v596 = vsel %vm595, %v590, %v592
        %v597 = vsel %vm595, %v592, %v594
        %604 = vrot.lane.b32.xlu0 %v481, 112
        %v605 = vpop.permute.xlu0 %604
        %606 = vrot.lane.b32.xlu0 %v482, 112
        %v607 = vpop.permute.xlu0 %606
        %608 = vrot.lane.b32.xlu0 %v483, 112
        %v609 = vpop.permute.xlu0 %608
        %v610 = vsel %vm432, %v605, %v607
        %v611 = vsel %vm432, %v607, %v609
        %617 = vrot.lane.b32.xlu0 %v359, 111
        %v618 = vpop.permute.xlu0 %617
        %619 = vrot.lane.b32.xlu0 %v360, 111
        %v620 = vpop.permute.xlu0 %619
        %v621 = vsel %vm410, %v618, %v620
        %628 = vrot.lane.b32.xlu0 %v503, 110
        %v629 = vpop.permute.xlu0 %628
        %630 = vrot.lane.b32.xlu0 %v504, 110
        %v631 = vpop.permute.xlu0 %630
        %632 = vrot.lane.b32.xlu0 %v505, 110
        %v633 = vpop.permute.xlu0 %632
        %vm634 = vcmask 900096
        %v635 = vsel %vm634, %v629, %v631
        %v636 = vsel %vm634, %v631, %v633
        %643 = vrot.lane.b32.xlu0 %v525, 96
        %v644 = vpop.permute.xlu0 %643
        %645 = vrot.lane.b32.xlu0 %v526, 96
        %v646 = vpop.permute.xlu0 %645
        %647 = vrot.lane.b32.xlu0 %v527, 96
        %v648 = vpop.permute.xlu0 %647
        %vm649 = vcmask 785408
        %v650 = vsel %vm649, %v644, %v646
        %v651 = vsel %vm649, %v646, %v648
        %658 = vrot.lane.b32.xlu0 %v547, 95
        %v659 = vpop.permute.xlu0 %658
        %660 = vrot.lane.b32.xlu0 %v548, 95
        %v661 = vpop.permute.xlu0 %660
        %662 = vrot.lane.b32.xlu0 %v549, 95
        %v663 = vpop.permute.xlu0 %662
        %vm664 = vcmask 777216
        %v665 = vsel %vm664, %v659, %v661
        %v666 = vsel %vm664, %v661, %v663
        %673 = vrot.lane.b32.xlu0 %v569, 94
        %v674 = vpop.permute.xlu0 %673
        %675 = vrot.lane.b32.xlu0 %v570, 94
        %v676 = vpop.permute.xlu0 %675
        %677 = vrot.lane.b32.xlu0 %v571, 94
        %v678 = vpop.permute.xlu0 %677
        %vm679 = vcmask 769024
        %v680 = vsel %vm679, %v674, %v676
        %v681 = vsel %vm679, %v676, %v678
        %v685 = vpack.c.bf16 %v581, %v415
        %v686 = vpack.c.bf16 %v582, %v416
        %v687 = vpack.c.bf16 %v580, %v417
        %v688 = vpack.c.bf16 %v610, %v596
        %v689 = vpack.c.bf16 %v611, %v597
        %v690 = vpack.c.bf16 %v609, %v594
        %v691 = vpack.c.bf16 %v629, %v618
        %v692 = vpack.c.bf16 %v635, %v621
        %v693 = vpack.c.bf16 %v636, %v620
        %v694 = vpack.c.bf16 %v659, %v644
        %v695 = vpack.c.bf16 %v665, %v650
        %v696 = vpack.c.bf16 %v666, %v651
        %v697 = vpack.c.bf16 %v674, %v674
        %v698 = vpack.c.bf16 %v680, %v680
        %v699 = vpack.c.bf16 %v681, %v681
        %715 = vrot.lane.b32.xlu0 %v685, 17
        %v716 = vpop.permute.xlu0 %715
        %717 = vrot.lane.b32.xlu0 %v686, 17
        %v718 = vpop.permute.xlu0 %717
        %719 = vrot.lane.b32.xlu0 %v687, 17
        %v720 = vpop.permute.xlu0 %719
        %721 = vrot.lane.b32.xlu0 %v688, 17
        %v722 = vpop.permute.xlu0 %721
        %723 = vrot.lane.b32.xlu0 %v689, 17
        %v724 = vpop.permute.xlu0 %723
        %725 = vrot.lane.b32.xlu0 %v690, 17
        %v726 = vpop.permute.xlu0 %725
        %727 = vrot.lane.b32.xlu0 %v691, 17
        %v728 = vpop.permute.xlu0 %727
        %729 = vrot.lane.b32.xlu0 %v692, 17
        %v730 = vpop.permute.xlu0 %729
        %731 = vrot.lane.b32.xlu0 %v693, 17
        %v732 = vpop.permute.xlu0 %731
        %733 = vrot.lane.b32.xlu0 %v694, 17
        %v734 = vpop.permute.xlu0 %733
        %735 = vrot.lane.b32.xlu0 %v695, 17
        %v736 = vpop.permute.xlu0 %735
        %737 = vrot.lane.b32.xlu0 %v696, 17
        %v738 = vpop.permute.xlu0 %737
        %739 = vrot.lane.b32.xlu0 %v697, 17
        %v740 = vpop.permute.xlu0 %739
        %741 = vrot.lane.b32.xlu0 %v698, 17
        %v742 = vpop.permute.xlu0 %741
        %743 = vrot.lane.b32.xlu0 %v699, 17
        %v744 = vpop.permute.xlu0 %743
        %vm745 = vcmask 138240
        %v746 = vsel %vm745, %v716, %v718
        %v747 = vsel %vm745, %v718, %v720
        %v748 = vsel %vm745, %v722, %v724
        %v749 = vsel %vm745, %v724, %v726
        %v750 = vsel %vm745, %v728, %v730
        %v751 = vsel %vm745, %v730, %v732
        %v752 = vsel %vm745, %v734, %v736
        %v753 = vsel %vm745, %v736, %v738
        %v754 = vsel %vm745, %v740, %v742
        %v755 = vsel %vm745, %v742, %v744
        %vm764 = vcmask 588800
        %v766 = vsel %vm764, %v395, 0
        %vm768 = vcmask 1043456
        %v770 = vsel %vm768, %v754, 0
        %v773 = vsel %vm768, %v755, 0
        %775 = vmatprep.subr.bf16.mxu0 0
        %776 = vmatpush1.bf16.msra.mxu0 0
        %777 = vmatprep.subr.bf16.mxu0 0
        %778 = vmatpush1.bf16.msra.mxu0 0
        %779 = vmatprep.subr.bf16.mxu0 0
        %780 = vmatpush1.bf16.msra.mxu0 0
        %781 = vmatprep.subr.bf16.mxu0 %v773
        %782 = vmatpush1.bf16.msra.mxu0 %v770
        %783 = vmatprep.subr.bf16.mxu0 %v753
        %784 = vmatpush1.bf16.msra.mxu0 %v752
        %785 = vmatprep.subr.bf16.mxu0 %v751
        %786 = vmatpush1.bf16.msra.mxu0 %v750
        %787 = vmatprep.subr.bf16.mxu0 %v749
        %788 = vmatpush1.bf16.msra.mxu0 %v748
        %789 = vmatprep.subr.bf16.mxu0 %v747
        %790 = vmatpush1.bf16.msra.mxu0 %v746
        %791 = vmatprep.subr.bf16.mxu0 0
        %792 = vmatpush2.bf16.msra.mxu0 0
        %793 = vmatprep.subr.bf16.mxu0 0
        %794 = vmatpush2.bf16.msra.mxu0 0
        %795 = vmatprep.subr.bf16.mxu0 0
        %796 = vmatpush2.bf16.msra.mxu0 0
        %797 = vmatprep.subr.bf16.mxu0 0
        %798 = vmatpush2.bf16.msra.mxu0 0
        %799 = vmatprep.subr.bf16.mxu0 0
        %800 = vmatpush2.bf16.msra.mxu0 0
        %801 = vmatprep.subr.bf16.mxu0 0
        %802 = vmatpush2.bf16.msra.mxu0 0
        %803 = vmatprep.subr.bf16.mxu0 0
        %804 = vmatpush2.bf16.msra.mxu0 0
        %805 = vmatprep.subr.bf16.mxu0 0
        %806 = vmatpush2.bf16.msra.mxu0 0
        %807 = vmatprep.mubr.bf16.mxu0 0
        %808 = vmatmul.mubr.bf16.gmra.mxu0 %v766
        %v809 = vpop.f32.mrf.mxu0
        %v810 = vadd.f32 0.0, %v809
        %v811 = vpop.f32.mrf.mxu0
        %v812 = vadd.f32 0.0, %v811
        %v813 = vpop.f32.mrf.mxu0
        %v814 = vpop.f32.mrf.mxu0
        %815 = vdwg.mxu0
        %v816 = vld [vmem:[%s5] sm:$0xff]
        %v817 = vld [vmem:[%s6] sm:$0xff]
        %v818 = vmul.f32 %v810, %v810
        %v819 = vmul.f32 %v812, %v812
        %820 = vmatprep.subr.mxu0 0.0
        %v821 = vand.u32 %v378, 4294901760
        %822 = vmatpush1.msra.mxu0 %v821
        %823 = vmatprep.subr.mxu0 0.0
        %v824 = vand.u32 %v377, 4294901760
        %825 = vmatpush1.msra.mxu0 %v824
        %826 = vmatprep.subr.mxu0 0.0
        %v827 = vand.u32 %v376, 4294901760
        %828 = vmatpush1.msra.mxu0 %v827
        %829 = vmatprep.subr.mxu0 0.0
        %v830 = vand.u32 %v375, 4294901760
        %831 = vmatpush1.msra.mxu0 %v830
        %832 = vmatprep.subr.mxu0 0.0
        %v833 = vand.u32 %v374, 4294901760
        %834 = vmatpush1.msra.mxu0 %v833
        %835 = vmatprep.subr.mxu0 0.0
        %v836 = vand.u32 %v373, 4294901760
        %837 = vmatpush1.msra.mxu0 %v836
        %838 = vmatprep.subr.mxu0 0.0
        %v839 = vand.u32 %v372, 4294901760
        %840 = vmatpush1.msra.mxu0 %v839
        %841 = vmatprep.subr.mxu0 0.0
        %v842 = vand.u32 %v371, 4294901760
        %843 = vmatpush1.msra.mxu0 %v842
        %844 = vmatprep.subr.mxu0 0.0
        %v845 = vand.u32 %v370, 4294901760
        %846 = vmatpush1.msra.mxu0 %v845
        %847 = vmatprep.subr.mxu0 0.0
        %v848 = vand.u32 %v369, 4294901760
        %849 = vmatpush1.msra.mxu0 %v848
        %850 = vmatprep.subr.mxu0 0.0
        %v851 = vand.u32 %v368, 4294901760
        %852 = vmatpush1.msra.mxu0 %v851
        %853 = vmatprep.subr.mxu0 0.0
        %v854 = vand.u32 %v367, 4294901760
        %855 = vmatpush1.msra.mxu0 %v854
        %856 = vmatprep.subr.mxu0 0.0
        %v857 = vand.u32 %v366, 4294901760
        %858 = vmatpush1.msra.mxu0 %v857
        %859 = vmatprep.subr.mxu0 0.0
        %v860 = vand.u32 %v365, 4294901760
        %861 = vmatpush1.msra.mxu0 %v860
        %862 = vmatprep.subr.mxu0 0.0
        %v863 = vand.u32 %v364, 4294901760
        %864 = vmatpush1.msra.mxu0 %v863
        %865 = vmatprep.subr.mxu0 0.0
        %v866 = vand.u32 %v363, 4294901760
        %867 = vmatpush1.msra.mxu0 %v866
        %868 = vmatprep.subr.mxu0 0.0
        %v869 = vand.u32 %v394, 4294901760
        %870 = vmatpush2.msra.mxu0 %v869
        %871 = vmatprep.subr.mxu0 0.0
        %v872 = vand.u32 %v393, 4294901760
        %873 = vmatpush2.msra.mxu0 %v872
        %874 = vmatprep.subr.mxu0 0.0
        %v875 = vand.u32 %v392, 4294901760
        %876 = vmatpush2.msra.mxu0 %v875
        %877 = vmatprep.subr.mxu0 0.0
        %v878 = vand.u32 %v391, 4294901760
        %879 = vmatpush2.msra.mxu0 %v878
        %880 = vmatprep.subr.mxu0 0.0
        %v881 = vand.u32 %v390, 4294901760
        %882 = vmatpush2.msra.mxu0 %v881
        %883 = vmatprep.subr.mxu0 0.0
        %v884 = vand.u32 %v389, 4294901760
        %885 = vmatpush2.msra.mxu0 %v884
        %886 = vmatprep.subr.mxu0 0.0
        %v887 = vand.u32 %v388, 4294901760
        %888 = vmatpush2.msra.mxu0 %v887
        %889 = vmatprep.subr.mxu0 0.0
        %v890 = vand.u32 %v387, 4294901760
        %891 = vmatpush2.msra.mxu0 %v890
        %892 = vmatprep.subr.mxu0 0.0
        %v893 = vand.u32 %v386, 4294901760
        %894 = vmatpush2.msra.mxu0 %v893
        %895 = vmatprep.subr.mxu0 0.0
        %v896 = vand.u32 %v385, 4294901760
        %897 = vmatpush2.msra.mxu0 %v896
        %898 = vmatprep.subr.mxu0 0.0
        %v899 = vand.u32 %v384, 4294901760
        %900 = vmatpush2.msra.mxu0 %v899
        %901 = vmatprep.subr.mxu0 0.0
        %v902 = vand.u32 %v383, 4294901760
        %903 = vmatpush2.msra.mxu0 %v902
        %904 = vmatprep.subr.mxu0 0.0
        %v905 = vand.u32 %v382, 4294901760
        %906 = vmatpush2.msra.mxu0 %v905
        %907 = vmatprep.subr.mxu0 0.0
        %v908 = vand.u32 %v381, 4294901760
        %909 = vmatpush2.msra.mxu0 %v908
        %910 = vmatprep.subr.mxu0 0.0
        %v911 = vand.u32 %v380, 4294901760
        %912 = vmatpush2.msra.mxu0 %v911
        %913 = vmatprep.subr.mxu0 0.0
        %v914 = vand.u32 %v379, 4294901760
        %915 = vmatpush2.msra.mxu0 %v914
        %v916 = vand.u32 %v812, 4294901760
        %v917 = vsub.f32 %v812, %v916
        %v918 = vand.u32 %v917, 4294901760
        %v919 = vsub.f32 %v917, %v918
        %v920 = vand.u32 %v919, 4294901760
        %921 = vmatprep.mubr.f32.mxu0 %v920
        %v922 = vand.u32 %v810, 4294901760
        %v923 = vsub.f32 %v810, %v922
        %v924 = vand.u32 %v923, 4294901760
        %v925 = vsub.f32 %v923, %v924
        %v926 = vand.u32 %v925, 4294901760
        %927 = vmatmul.mubr.f32.gmra.mxu0 %v926
        %v928 = vpop.f32.mrf.mxu0
        %v929 = vadd.f32 0.0, %v928
        %v930 = vpop.f32.mrf.mxu0
        %v931 = vand.u32 %v819, 4294901760
        %v932 = vsub.f32 %v819, %v931
        %v933 = vand.u32 %v932, 4294901760
        %v934 = vsub.f32 %v932, %v933
        %v935 = vand.u32 %v934, 4294901760
        %936 = vmatprep.mubr.f32.mxu0 %v935
        %v937 = vand.u32 %v818, 4294901760
        %v938 = vsub.f32 %v818, %v937
        %v939 = vand.u32 %v938, 4294901760
        %v940 = vsub.f32 %v938, %v939
        %v941 = vand.u32 %v940, 4294901760
        %942 = vmatmul.mubr.f32.gmra.mxu0 %v941
        %v943 = vpop.f32.mrf.mxu0
        %v944 = vadd.f32 0.0, %v943
        %v945 = vpop.f32.mrf.mxu0
        %946 = vdwg.mxu0
        %947 = vmatprep.subr.mxu0 0.0
        %v948 = vand.u32 %v378, 4294901760
        %v949 = vsub.f32 %v378, %v948
        %v950 = vand.u32 %v949, 4294901760
        %v951 = vsub.f32 %v949, %v950
        %v952 = vand.u32 %v951, 4294901760
        %953 = vmatpush1.msra.mxu0 %v952
        %954 = vmatprep.subr.mxu0 0.0
        %v955 = vand.u32 %v377, 4294901760
        %v956 = vsub.f32 %v377, %v955
        %v957 = vand.u32 %v956, 4294901760
        %v958 = vsub.f32 %v956, %v957
        %v959 = vand.u32 %v958, 4294901760
        %960 = vmatpush1.msra.mxu0 %v959
        %961 = vmatprep.subr.mxu0 0.0
        %v962 = vand.u32 %v376, 4294901760
        %v963 = vsub.f32 %v376, %v962
        %v964 = vand.u32 %v963, 4294901760
        %v965 = vsub.f32 %v963, %v964
        %v966 = vand.u32 %v965, 4294901760
        %967 = vmatpush1.msra.mxu0 %v966
        %968 = vmatprep.subr.mxu0 0.0
        %v969 = vand.u32 %v375, 4294901760
        %v970 = vsub.f32 %v375, %v969
        %v971 = vand.u32 %v970, 4294901760
        %v972 = vsub.f32 %v970, %v971
        %v973 = vand.u32 %v972, 4294901760
        %974 = vmatpush1.msra.mxu0 %v973
        %975 = vmatprep.subr.mxu0 0.0
        %v976 = vand.u32 %v374, 4294901760
        %v977 = vsub.f32 %v374, %v976
        %v978 = vand.u32 %v977, 4294901760
        %v979 = vsub.f32 %v977, %v978
        %v980 = vand.u32 %v979, 4294901760
        %981 = vmatpush1.msra.mxu0 %v980
        %982 = vmatprep.subr.mxu0 0.0
        %v983 = vand.u32 %v373, 4294901760
        %v984 = vsub.f32 %v373, %v983
        %v985 = vand.u32 %v984, 4294901760
        %v986 = vsub.f32 %v984, %v985
        %v987 = vand.u32 %v986, 4294901760
        %988 = vmatpush1.msra.mxu0 %v987
        %989 = vmatprep.subr.mxu0 0.0
        %v990 = vand.u32 %v372, 4294901760
        %v991 = vsub.f32 %v372, %v990
        %v992 = vand.u32 %v991, 4294901760
        %v993 = vsub.f32 %v991, %v992
        %v994 = vand.u32 %v993, 4294901760
        %995 = vmatpush1.msra.mxu0 %v994
        %996 = vmatprep.subr.mxu0 0.0
        %v997 = vand.u32 %v371, 4294901760
        %v998 = vsub.f32 %v371, %v997
        %v999 = vand.u32 %v998, 4294901760
        %v1000 = vsub.f32 %v998, %v999
        %v1001 = vand.u32 %v1000, 4294901760
        %1002 = vmatpush1.msra.mxu0 %v1001
        %1003 = vmatprep.subr.mxu0 0.0
        %v1004 = vand.u32 %v370, 4294901760
        %v1005 = vsub.f32 %v370, %v1004
        %v1006 = vand.u32 %v1005, 4294901760
        %v1007 = vsub.f32 %v1005, %v1006
        %v1008 = vand.u32 %v1007, 4294901760
        %1009 = vmatpush1.msra.mxu0 %v1008
        %1010 = vmatprep.subr.mxu0 0.0
        %v1011 = vand.u32 %v369, 4294901760
        %v1012 = vsub.f32 %v369, %v1011
        %v1013 = vand.u32 %v1012, 4294901760
        %v1014 = vsub.f32 %v1012, %v1013
        %v1015 = vand.u32 %v1014, 4294901760
        %1016 = vmatpush1.msra.mxu0 %v1015
        %1017 = vmatprep.subr.mxu0 0.0
        %v1018 = vand.u32 %v368, 4294901760
        %v1019 = vsub.f32 %v368, %v1018
        %v1020 = vand.u32 %v1019, 4294901760
        %v1021 = vsub.f32 %v1019, %v1020
        %v1022 = vand.u32 %v1021, 4294901760
        %1023 = vmatpush1.msra.mxu0 %v1022
        %1024 = vmatprep.subr.mxu0 0.0
        %v1025 = vand.u32 %v367, 4294901760
        %v1026 = vsub.f32 %v367, %v1025
        %v1027 = vand.u32 %v1026, 4294901760
        %v1028 = vsub.f32 %v1026, %v1027
        %v1029 = vand.u32 %v1028, 4294901760
        %1030 = vmatpush1.msra.mxu0 %v1029
        %1031 = vmatprep.subr.mxu0 0.0
        %v1032 = vand.u32 %v366, 4294901760
        %v1033 = vsub.f32 %v366, %v1032
        %v1034 = vand.u32 %v1033, 4294901760
        %v1035 = vsub.f32 %v1033, %v1034
        %v1036 = vand.u32 %v1035, 4294901760
        %1037 = vmatpush1.msra.mxu0 %v1036
        %1038 = vmatprep.subr.mxu0 0.0
        %v1039 = vand.u32 %v365, 4294901760
        %v1040 = vsub.f32 %v365, %v1039
        %v1041 = vand.u32 %v1040, 4294901760
        %v1042 = vsub.f32 %v1040, %v1041
        %v1043 = vand.u32 %v1042, 4294901760
        %1044 = vmatpush1.msra.mxu0 %v1043
        %1045 = vmatprep.subr.mxu0 0.0
        %v1046 = vand.u32 %v364, 4294901760
        %v1047 = vsub.f32 %v364, %v1046
        %v1048 = vand.u32 %v1047, 4294901760
        %v1049 = vsub.f32 %v1047, %v1048
        %v1050 = vand.u32 %v1049, 4294901760
        %1051 = vmatpush1.msra.mxu0 %v1050
        %1052 = vmatprep.subr.mxu0 0.0
        %v1053 = vand.u32 %v363, 4294901760
        %v1054 = vsub.f32 %v363, %v1053
        %v1055 = vand.u32 %v1054, 4294901760
        %v1056 = vsub.f32 %v1054, %v1055
        %v1057 = vand.u32 %v1056, 4294901760
        %1058 = vmatpush1.msra.mxu0 %v1057
        %1059 = vmatprep.subr.mxu0 0.0
        %v1060 = vand.u32 %v394, 4294901760
        %v1061 = vsub.f32 %v394, %v1060
        %v1062 = vand.u32 %v1061, 4294901760
        %v1063 = vsub.f32 %v1061, %v1062
        %v1064 = vand.u32 %v1063, 4294901760
        %1065 = vmatpush2.msra.mxu0 %v1064
        %1066 = vmatprep.subr.mxu0 0.0
        %v1067 = vand.u32 %v393, 4294901760
        %v1068 = vsub.f32 %v393, %v1067
        %v1069 = vand.u32 %v1068, 4294901760
        %v1070 = vsub.f32 %v1068, %v1069
        %v1071 = vand.u32 %v1070, 4294901760
        %1072 = vmatpush2.msra.mxu0 %v1071
        %1073 = vmatprep.subr.mxu0 0.0
        %v1074 = vand.u32 %v392, 4294901760
        %v1075 = vsub.f32 %v392, %v1074
        %v1076 = vand.u32 %v1075, 4294901760
        %v1077 = vsub.f32 %v1075, %v1076
        %v1078 = vand.u32 %v1077, 4294901760
        %1079 = vmatpush2.msra.mxu0 %v1078
        %1080 = vmatprep.subr.mxu0 0.0
        %v1081 = vand.u32 %v391, 4294901760
        %v1082 = vsub.f32 %v391, %v1081
        %v1083 = vand.u32 %v1082, 4294901760
        %v1084 = vsub.f32 %v1082, %v1083
        %v1085 = vand.u32 %v1084, 4294901760
        %1086 = vmatpush2.msra.mxu0 %v1085
        %1087 = vmatprep.subr.mxu0 0.0
        %v1088 = vand.u32 %v390, 4294901760
        %v1089 = vsub.f32 %v390, %v1088
        %v1090 = vand.u32 %v1089, 4294901760
        %v1091 = vsub.f32 %v1089, %v1090
        %v1092 = vand.u32 %v1091, 4294901760
        %1093 = vmatpush2.msra.mxu0 %v1092
        %1094 = vmatprep.subr.mxu0 0.0
        %v1095 = vand.u32 %v389, 4294901760
        %v1096 = vsub.f32 %v389, %v1095
        %v1097 = vand.u32 %v1096, 4294901760
        %v1098 = vsub.f32 %v1096, %v1097
        %v1099 = vand.u32 %v1098, 4294901760
        %1100 = vmatpush2.msra.mxu0 %v1099
        %1101 = vmatprep.subr.mxu0 0.0
        %v1102 = vand.u32 %v388, 4294901760
        %v1103 = vsub.f32 %v388, %v1102
        %v1104 = vand.u32 %v1103, 4294901760
        %v1105 = vsub.f32 %v1103, %v1104
        %v1106 = vand.u32 %v1105, 4294901760
        %1107 = vmatpush2.msra.mxu0 %v1106
        %1108 = vmatprep.subr.mxu0 0.0
        %v1109 = vand.u32 %v387, 4294901760
        %v1110 = vsub.f32 %v387, %v1109
        %v1111 = vand.u32 %v1110, 4294901760
        %v1112 = vsub.f32 %v1110, %v1111
        %v1113 = vand.u32 %v1112, 4294901760
        %1114 = vmatpush2.msra.mxu0 %v1113
        %1115 = vmatprep.subr.mxu0 0.0
        %v1116 = vand.u32 %v386, 4294901760
        %v1117 = vsub.f32 %v386, %v1116
        %v1118 = vand.u32 %v1117, 4294901760
        %v1119 = vsub.f32 %v1117, %v1118
        %v1120 = vand.u32 %v1119, 4294901760
        %1121 = vmatpush2.msra.mxu0 %v1120
        %1122 = vmatprep.subr.mxu0 0.0
        %v1123 = vand.u32 %v385, 4294901760
        %v1124 = vsub.f32 %v385, %v1123
        %v1125 = vand.u32 %v1124, 4294901760
        %v1126 = vsub.f32 %v1124, %v1125
        %v1127 = vand.u32 %v1126, 4294901760
        %1128 = vmatpush2.msra.mxu0 %v1127
        %1129 = vmatprep.subr.mxu0 0.0
        %v1130 = vand.u32 %v384, 4294901760
        %v1131 = vsub.f32 %v384, %v1130
        %v1132 = vand.u32 %v1131, 4294901760
        %v1133 = vsub.f32 %v1131, %v1132
        %v1134 = vand.u32 %v1133, 4294901760
        %1135 = vmatpush2.msra.mxu0 %v1134
        %1136 = vmatprep.subr.mxu0 0.0
        %v1137 = vand.u32 %v383, 4294901760
        %v1138 = vsub.f32 %v383, %v1137
        %v1139 = vand.u32 %v1138, 4294901760
        %v1140 = vsub.f32 %v1138, %v1139
        %v1141 = vand.u32 %v1140, 4294901760
        %1142 = vmatpush2.msra.mxu0 %v1141
        %1143 = vmatprep.subr.mxu0 0.0
        %v1144 = vand.u32 %v382, 4294901760
        %v1145 = vsub.f32 %v382, %v1144
        %v1146 = vand.u32 %v1145, 4294901760
        %v1147 = vsub.f32 %v1145, %v1146
        %v1148 = vand.u32 %v1147, 4294901760
        %1149 = vmatpush2.msra.mxu0 %v1148
        %1150 = vmatprep.subr.mxu0 0.0
        %v1151 = vand.u32 %v381, 4294901760
        %v1152 = vsub.f32 %v381, %v1151
        %v1153 = vand.u32 %v1152, 4294901760
        %v1154 = vsub.f32 %v1152, %v1153
        %v1155 = vand.u32 %v1154, 4294901760
        %1156 = vmatpush2.msra.mxu0 %v1155
        %1157 = vmatprep.subr.mxu0 0.0
        %v1158 = vand.u32 %v380, 4294901760
        %v1159 = vsub.f32 %v380, %v1158
        %v1160 = vand.u32 %v1159, 4294901760
        %v1161 = vsub.f32 %v1159, %v1160
        %v1162 = vand.u32 %v1161, 4294901760
        %1163 = vmatpush2.msra.mxu0 %v1162
        %1164 = vmatprep.subr.mxu0 0.0
        %v1165 = vand.u32 %v379, 4294901760
        %v1166 = vsub.f32 %v379, %v1165
        %v1167 = vand.u32 %v1166, 4294901760
        %v1168 = vsub.f32 %v1166, %v1167
        %v1169 = vand.u32 %v1168, 4294901760
        %1170 = vmatpush2.msra.mxu0 %v1169
        %v1171 = vand.u32 %v812, 4294901760
        %1172 = vmatprep.mubr.f32.mxu0 %v1171
        %v1173 = vand.u32 %v810, 4294901760
        %1174 = vmatmul.mubr.f32.gmra.mxu0 %v1173
        %v1175 = vpop.f32.mrf.mxu0
        %v1176 = vadd.f32 %v929, %v1175
        %v1177 = vpop.f32.mrf.mxu0
        %v1178 = vand.u32 %v819, 4294901760
        %1179 = vmatprep.mubr.f32.mxu0 %v1178
        %v1180 = vand.u32 %v818, 4294901760
        %1181 = vmatmul.mubr.f32.gmra.mxu0 %v1180
        %v1182 = vpop.f32.mrf.mxu0
        %v1183 = vadd.f32 %v944, %v1182
        %v1184 = vpop.f32.mrf.mxu0
        %1185 = vdwg.mxu0
        %1186 = vmatprep.subr.mxu0 0.0
        %v1187 = vand.u32 %v378, 4294901760
        %v1188 = vsub.f32 %v378, %v1187
        %1189 = vmatpush1.msra.mxu0 %v1188
        %1190 = vmatprep.subr.mxu0 0.0
        %v1191 = vand.u32 %v377, 4294901760
        %v1192 = vsub.f32 %v377, %v1191
        %1193 = vmatpush1.msra.mxu0 %v1192
        %1194 = vmatprep.subr.mxu0 0.0
        %v1195 = vand.u32 %v376, 4294901760
        %v1196 = vsub.f32 %v376, %v1195
        %1197 = vmatpush1.msra.mxu0 %v1196
        %1198 = vmatprep.subr.mxu0 0.0
        %v1199 = vand.u32 %v375, 4294901760
        %v1200 = vsub.f32 %v375, %v1199
        %1201 = vmatpush1.msra.mxu0 %v1200
        %1202 = vmatprep.subr.mxu0 0.0
        %v1203 = vand.u32 %v374, 4294901760
        %v1204 = vsub.f32 %v374, %v1203
        %1205 = vmatpush1.msra.mxu0 %v1204
        %1206 = vmatprep.subr.mxu0 0.0
        %v1207 = vand.u32 %v373, 4294901760
        %v1208 = vsub.f32 %v373, %v1207
        %1209 = vmatpush1.msra.mxu0 %v1208
        %1210 = vmatprep.subr.mxu0 0.0
        %v1211 = vand.u32 %v372, 4294901760
        %v1212 = vsub.f32 %v372, %v1211
        %1213 = vmatpush1.msra.mxu0 %v1212
        %1214 = vmatprep.subr.mxu0 0.0
        %v1215 = vand.u32 %v371, 4294901760
        %v1216 = vsub.f32 %v371, %v1215
        %1217 = vmatpush1.msra.mxu0 %v1216
        %1218 = vmatprep.subr.mxu0 0.0
        %v1219 = vand.u32 %v370, 4294901760
        %v1220 = vsub.f32 %v370, %v1219
        %1221 = vmatpush1.msra.mxu0 %v1220
        %1222 = vmatprep.subr.mxu0 0.0
        %v1223 = vand.u32 %v369, 4294901760
        %v1224 = vsub.f32 %v369, %v1223
        %1225 = vmatpush1.msra.mxu0 %v1224
        %1226 = vmatprep.subr.mxu0 0.0
        %v1227 = vand.u32 %v368, 4294901760
        %v1228 = vsub.f32 %v368, %v1227
        %1229 = vmatpush1.msra.mxu0 %v1228
        %1230 = vmatprep.subr.mxu0 0.0
        %v1231 = vand.u32 %v367, 4294901760
        %v1232 = vsub.f32 %v367, %v1231
        %1233 = vmatpush1.msra.mxu0 %v1232
        %1234 = vmatprep.subr.mxu0 0.0
        %v1235 = vand.u32 %v366, 4294901760
        %v1236 = vsub.f32 %v366, %v1235
        %1237 = vmatpush1.msra.mxu0 %v1236
        %1238 = vmatprep.subr.mxu0 0.0
        %v1239 = vand.u32 %v365, 4294901760
        %v1240 = vsub.f32 %v365, %v1239
        %1241 = vmatpush1.msra.mxu0 %v1240
        %1242 = vmatprep.subr.mxu0 0.0
        %v1243 = vand.u32 %v364, 4294901760
        %v1244 = vsub.f32 %v364, %v1243
        %1245 = vmatpush1.msra.mxu0 %v1244
        %1246 = vmatprep.subr.mxu0 0.0
        %v1247 = vand.u32 %v363, 4294901760
        %v1248 = vsub.f32 %v363, %v1247
        %1249 = vmatpush1.msra.mxu0 %v1248
        %1250 = vmatprep.subr.mxu0 0.0
        %v1251 = vand.u32 %v394, 4294901760
        %v1252 = vsub.f32 %v394, %v1251
        %1253 = vmatpush2.msra.mxu0 %v1252
        %1254 = vmatprep.subr.mxu0 0.0
        %v1255 = vand.u32 %v393, 4294901760
        %v1256 = vsub.f32 %v393, %v1255
        %1257 = vmatpush2.msra.mxu0 %v1256
        %1258 = vmatprep.subr.mxu0 0.0
        %v1259 = vand.u32 %v392, 4294901760
        %v1260 = vsub.f32 %v392, %v1259
        %1261 = vmatpush2.msra.mxu0 %v1260
        %1262 = vmatprep.subr.mxu0 0.0
        %v1263 = vand.u32 %v391, 4294901760
        %v1264 = vsub.f32 %v391, %v1263
        %1265 = vmatpush2.msra.mxu0 %v1264
        %1266 = vmatprep.subr.mxu0 0.0
        %v1267 = vand.u32 %v390, 4294901760
        %v1268 = vsub.f32 %v390, %v1267
        %1269 = vmatpush2.msra.mxu0 %v1268
        %1270 = vmatprep.subr.mxu0 0.0
        %v1271 = vand.u32 %v389, 4294901760
        %v1272 = vsub.f32 %v389, %v1271
        %1273 = vmatpush2.msra.mxu0 %v1272
        %1274 = vmatprep.subr.mxu0 0.0
        %v1275 = vand.u32 %v388, 4294901760
        %v1276 = vsub.f32 %v388, %v1275
        %1277 = vmatpush2.msra.mxu0 %v1276
        %1278 = vmatprep.subr.mxu0 0.0
        %v1279 = vand.u32 %v387, 4294901760
        %v1280 = vsub.f32 %v387, %v1279
        %1281 = vmatpush2.msra.mxu0 %v1280
        %1282 = vmatprep.subr.mxu0 0.0
        %v1283 = vand.u32 %v386, 4294901760
        %v1284 = vsub.f32 %v386, %v1283
        %1285 = vmatpush2.msra.mxu0 %v1284
        %1286 = vmatprep.subr.mxu0 0.0
        %v1287 = vand.u32 %v385, 4294901760
        %v1288 = vsub.f32 %v385, %v1287
        %1289 = vmatpush2.msra.mxu0 %v1288
        %1290 = vmatprep.subr.mxu0 0.0
        %v1291 = vand.u32 %v384, 4294901760
        %v1292 = vsub.f32 %v384, %v1291
        %1293 = vmatpush2.msra.mxu0 %v1292
        %1294 = vmatprep.subr.mxu0 0.0
        %v1295 = vand.u32 %v383, 4294901760
        %v1296 = vsub.f32 %v383, %v1295
        %1297 = vmatpush2.msra.mxu0 %v1296
        %1298 = vmatprep.subr.mxu0 0.0
        %v1299 = vand.u32 %v382, 4294901760
        %v1300 = vsub.f32 %v382, %v1299
        %1301 = vmatpush2.msra.mxu0 %v1300
        %1302 = vmatprep.subr.mxu0 0.0
        %v1303 = vand.u32 %v381, 4294901760
        %v1304 = vsub.f32 %v381, %v1303
        %1305 = vmatpush2.msra.mxu0 %v1304
        %1306 = vmatprep.subr.mxu0 0.0
        %v1307 = vand.u32 %v380, 4294901760
        %v1308 = vsub.f32 %v380, %v1307
        %1309 = vmatpush2.msra.mxu0 %v1308
        %1310 = vmatprep.subr.mxu0 0.0
        %v1311 = vand.u32 %v379, 4294901760
        %v1312 = vsub.f32 %v379, %v1311
        %1313 = vmatpush2.msra.mxu0 %v1312
        %v1314 = vand.u32 %v812, 4294901760
        %v1315 = vsub.f32 %v812, %v1314
        %1316 = vmatprep.mubr.f32.mxu0 %v1315
        %v1317 = vand.u32 %v810, 4294901760
        %v1318 = vsub.f32 %v810, %v1317
        %1319 = vmatmul.mubr.f32.gmra.mxu0 %v1318
        %v1320 = vpop.f32.mrf.mxu0
        %v1321 = vadd.f32 %v1176, %v1320
        %v1322 = vpop.f32.mrf.mxu0
        %v1323 = vand.u32 %v819, 4294901760
        %v1324 = vsub.f32 %v819, %v1323
        %1325 = vmatprep.mubr.f32.mxu0 %v1324
        %v1326 = vand.u32 %v818, 4294901760
        %v1327 = vsub.f32 %v818, %v1326
        %1328 = vmatmul.mubr.f32.gmra.mxu0 %v1327
        %v1329 = vpop.f32.mrf.mxu0
        %v1330 = vadd.f32 %v1183, %v1329
        %v1331 = vpop.f32.mrf.mxu0
        %1332 = vdwg.mxu0
        %1333 = vmatprep.subr.mxu0 0.0
        %v1334 = vand.u32 %v378, 4294901760
        %1335 = vmatpush1.msra.mxu0 %v1334
        %1336 = vmatprep.subr.mxu0 0.0
        %v1337 = vand.u32 %v377, 4294901760
        %1338 = vmatpush1.msra.mxu0 %v1337
        %1339 = vmatprep.subr.mxu0 0.0
        %v1340 = vand.u32 %v376, 4294901760
        %1341 = vmatpush1.msra.mxu0 %v1340
        %1342 = vmatprep.subr.mxu0 0.0
        %v1343 = vand.u32 %v375, 4294901760
        %1344 = vmatpush1.msra.mxu0 %v1343
        %1345 = vmatprep.subr.mxu0 0.0
        %v1346 = vand.u32 %v374, 4294901760
        %1347 = vmatpush1.msra.mxu0 %v1346
        %1348 = vmatprep.subr.mxu0 0.0
        %v1349 = vand.u32 %v373, 4294901760
        %1350 = vmatpush1.msra.mxu0 %v1349
        %1351 = vmatprep.subr.mxu0 0.0
        %v1352 = vand.u32 %v372, 4294901760
        %1353 = vmatpush1.msra.mxu0 %v1352
        %1354 = vmatprep.subr.mxu0 0.0
        %v1355 = vand.u32 %v371, 4294901760
        %1356 = vmatpush1.msra.mxu0 %v1355
        %1357 = vmatprep.subr.mxu0 0.0
        %v1358 = vand.u32 %v370, 4294901760
        %1359 = vmatpush1.msra.mxu0 %v1358
        %1360 = vmatprep.subr.mxu0 0.0
        %v1361 = vand.u32 %v369, 4294901760
        %1362 = vmatpush1.msra.mxu0 %v1361
        %1363 = vmatprep.subr.mxu0 0.0
        %v1364 = vand.u32 %v368, 4294901760
        %1365 = vmatpush1.msra.mxu0 %v1364
        %1366 = vmatprep.subr.mxu0 0.0
        %v1367 = vand.u32 %v367, 4294901760
        %1368 = vmatpush1.msra.mxu0 %v1367
        %1369 = vmatprep.subr.mxu0 0.0
        %v1370 = vand.u32 %v366, 4294901760
        %1371 = vmatpush1.msra.mxu0 %v1370
        %1372 = vmatprep.subr.mxu0 0.0
        %v1373 = vand.u32 %v365, 4294901760
        %1374 = vmatpush1.msra.mxu0 %v1373
        %1375 = vmatprep.subr.mxu0 0.0
        %v1376 = vand.u32 %v364, 4294901760
        %1377 = vmatpush1.msra.mxu0 %v1376
        %1378 = vmatprep.subr.mxu0 0.0
        %v1379 = vand.u32 %v363, 4294901760
        %1380 = vmatpush1.msra.mxu0 %v1379
        %1381 = vmatprep.subr.mxu0 0.0
        %v1382 = vand.u32 %v394, 4294901760
        %1383 = vmatpush2.msra.mxu0 %v1382
        %1384 = vmatprep.subr.mxu0 0.0
        %v1385 = vand.u32 %v393, 4294901760
        %1386 = vmatpush2.msra.mxu0 %v1385
        %1387 = vmatprep.subr.mxu0 0.0
        %v1388 = vand.u32 %v392, 4294901760
        %1389 = vmatpush2.msra.mxu0 %v1388
        %1390 = vmatprep.subr.mxu0 0.0
        %v1391 = vand.u32 %v391, 4294901760
        %1392 = vmatpush2.msra.mxu0 %v1391
        %1393 = vmatprep.subr.mxu0 0.0
        %v1394 = vand.u32 %v390, 4294901760
        %1395 = vmatpush2.msra.mxu0 %v1394
        %1396 = vmatprep.subr.mxu0 0.0
        %v1397 = vand.u32 %v389, 4294901760
        %1398 = vmatpush2.msra.mxu0 %v1397
        %1399 = vmatprep.subr.mxu0 0.0
        %v1400 = vand.u32 %v388, 4294901760
        %1401 = vmatpush2.msra.mxu0 %v1400
        %1402 = vmatprep.subr.mxu0 0.0
        %v1403 = vand.u32 %v387, 4294901760
        %1404 = vmatpush2.msra.mxu0 %v1403
        %1405 = vmatprep.subr.mxu0 0.0
        %v1406 = vand.u32 %v386, 4294901760
        %1407 = vmatpush2.msra.mxu0 %v1406
        %1408 = vmatprep.subr.mxu0 0.0
        %v1409 = vand.u32 %v385, 4294901760
        %1410 = vmatpush2.msra.mxu0 %v1409
        %1411 = vmatprep.subr.mxu0 0.0
        %v1412 = vand.u32 %v384, 4294901760
        %1413 = vmatpush2.msra.mxu0 %v1412
        %1414 = vmatprep.subr.mxu0 0.0
        %v1415 = vand.u32 %v383, 4294901760
        %1416 = vmatpush2.msra.mxu0 %v1415
        %1417 = vmatprep.subr.mxu0 0.0
        %v1418 = vand.u32 %v382, 4294901760
        %1419 = vmatpush2.msra.mxu0 %v1418
        %1420 = vmatprep.subr.mxu0 0.0
        %v1421 = vand.u32 %v381, 4294901760
        %1422 = vmatpush2.msra.mxu0 %v1421
        %1423 = vmatprep.subr.mxu0 0.0
        %v1424 = vand.u32 %v380, 4294901760
        %1425 = vmatpush2.msra.mxu0 %v1424
        %1426 = vmatprep.subr.mxu0 0.0
        %v1427 = vand.u32 %v379, 4294901760
        %1428 = vmatpush2.msra.mxu0 %v1427
        %v1429 = vand.u32 %v812, 4294901760
        %v1430 = vsub.f32 %v812, %v1429
        %v1431 = vand.u32 %v1430, 4294901760
        %1432 = vmatprep.mubr.f32.mxu0 %v1431
        %v1433 = vand.u32 %v810, 4294901760
        %v1434 = vsub.f32 %v810, %v1433
        %v1435 = vand.u32 %v1434, 4294901760
        %1436 = vmatmul.mubr.f32.gmra.mxu0 %v1435
        %v1437 = vpop.f32.mrf.mxu0
        %v1438 = vadd.f32 %v1321, %v1437
        %v1439 = vpop.f32.mrf.mxu0
        %v1440 = vand.u32 %v819, 4294901760
        %v1441 = vsub.f32 %v819, %v1440
        %v1442 = vand.u32 %v1441, 4294901760
        %1443 = vmatprep.mubr.f32.mxu0 %v1442
        %v1444 = vand.u32 %v818, 4294901760
        %v1445 = vsub.f32 %v818, %v1444
        %v1446 = vand.u32 %v1445, 4294901760
        %1447 = vmatmul.mubr.f32.gmra.mxu0 %v1446
        %v1448 = vpop.f32.mrf.mxu0
        %v1449 = vadd.f32 %v1330, %v1448
        %v1450 = vpop.f32.mrf.mxu0
        %1451 = vdwg.mxu0
        %1452 = vmatprep.subr.mxu0 0.0
        %v1453 = vand.u32 %v378, 4294901760
        %v1454 = vsub.f32 %v378, %v1453
        %v1455 = vand.u32 %v1454, 4294901760
        %1456 = vmatpush1.msra.mxu0 %v1455
        %1457 = vmatprep.subr.mxu0 0.0
        %v1458 = vand.u32 %v377, 4294901760
        %v1459 = vsub.f32 %v377, %v1458
        %v1460 = vand.u32 %v1459, 4294901760
        %1461 = vmatpush1.msra.mxu0 %v1460
        %1462 = vmatprep.subr.mxu0 0.0
        %v1463 = vand.u32 %v376, 4294901760
        %v1464 = vsub.f32 %v376, %v1463
        %v1465 = vand.u32 %v1464, 4294901760
        %1466 = vmatpush1.msra.mxu0 %v1465
        %1467 = vmatprep.subr.mxu0 0.0
        %v1468 = vand.u32 %v375, 4294901760
        %v1469 = vsub.f32 %v375, %v1468
        %v1470 = vand.u32 %v1469, 4294901760
        %1471 = vmatpush1.msra.mxu0 %v1470
        %1472 = vmatprep.subr.mxu0 0.0
        %v1473 = vand.u32 %v374, 4294901760
        %v1474 = vsub.f32 %v374, %v1473
        %v1475 = vand.u32 %v1474, 4294901760
        %1476 = vmatpush1.msra.mxu0 %v1475
        %1477 = vmatprep.subr.mxu0 0.0
        %v1478 = vand.u32 %v373, 4294901760
        %v1479 = vsub.f32 %v373, %v1478
        %v1480 = vand.u32 %v1479, 4294901760
        %1481 = vmatpush1.msra.mxu0 %v1480
        %1482 = vmatprep.subr.mxu0 0.0
        %v1483 = vand.u32 %v372, 4294901760
        %v1484 = vsub.f32 %v372, %v1483
        %v1485 = vand.u32 %v1484, 4294901760
        %1486 = vmatpush1.msra.mxu0 %v1485
        %1487 = vmatprep.subr.mxu0 0.0
        %v1488 = vand.u32 %v371, 4294901760
        %v1489 = vsub.f32 %v371, %v1488
        %v1490 = vand.u32 %v1489, 4294901760
        %1491 = vmatpush1.msra.mxu0 %v1490
        %1492 = vmatprep.subr.mxu0 0.0
        %v1493 = vand.u32 %v370, 4294901760
        %v1494 = vsub.f32 %v370, %v1493
        %v1495 = vand.u32 %v1494, 4294901760
        %1496 = vmatpush1.msra.mxu0 %v1495
        %1497 = vmatprep.subr.mxu0 0.0
        %v1498 = vand.u32 %v369, 4294901760
        %v1499 = vsub.f32 %v369, %v1498
        %v1500 = vand.u32 %v1499, 4294901760
        %1501 = vmatpush1.msra.mxu0 %v1500
        %1502 = vmatprep.subr.mxu0 0.0
        %v1503 = vand.u32 %v368, 4294901760
        %v1504 = vsub.f32 %v368, %v1503
        %v1505 = vand.u32 %v1504, 4294901760
        %1506 = vmatpush1.msra.mxu0 %v1505
        %1507 = vmatprep.subr.mxu0 0.0
        %v1508 = vand.u32 %v367, 4294901760
        %v1509 = vsub.f32 %v367, %v1508
        %v1510 = vand.u32 %v1509, 4294901760
        %1511 = vmatpush1.msra.mxu0 %v1510
        %1512 = vmatprep.subr.mxu0 0.0
        %v1513 = vand.u32 %v366, 4294901760
        %v1514 = vsub.f32 %v366, %v1513
        %v1515 = vand.u32 %v1514, 4294901760
        %1516 = vmatpush1.msra.mxu0 %v1515
        %1517 = vmatprep.subr.mxu0 0.0
        %v1518 = vand.u32 %v365, 4294901760
        %v1519 = vsub.f32 %v365, %v1518
        %v1520 = vand.u32 %v1519, 4294901760
        %1521 = vmatpush1.msra.mxu0 %v1520
        %1522 = vmatprep.subr.mxu0 0.0
        %v1523 = vand.u32 %v364, 4294901760
        %v1524 = vsub.f32 %v364, %v1523
        %v1525 = vand.u32 %v1524, 4294901760
        %1526 = vmatpush1.msra.mxu0 %v1525
        %1527 = vmatprep.subr.mxu0 0.0
        %v1528 = vand.u32 %v363, 4294901760
        %v1529 = vsub.f32 %v363, %v1528
        %v1530 = vand.u32 %v1529, 4294901760
        %1531 = vmatpush1.msra.mxu0 %v1530
        %1532 = vmatprep.subr.mxu0 0.0
        %v1533 = vand.u32 %v394, 4294901760
        %v1534 = vsub.f32 %v394, %v1533
        %v1535 = vand.u32 %v1534, 4294901760
        %1536 = vmatpush2.msra.mxu0 %v1535
        %1537 = vmatprep.subr.mxu0 0.0
        %v1538 = vand.u32 %v393, 4294901760
        %v1539 = vsub.f32 %v393, %v1538
        %v1540 = vand.u32 %v1539, 4294901760
        %1541 = vmatpush2.msra.mxu0 %v1540
        %1542 = vmatprep.subr.mxu0 0.0
        %v1543 = vand.u32 %v392, 4294901760
        %v1544 = vsub.f32 %v392, %v1543
        %v1545 = vand.u32 %v1544, 4294901760
        %1546 = vmatpush2.msra.mxu0 %v1545
        %1547 = vmatprep.subr.mxu0 0.0
        %v1548 = vand.u32 %v391, 4294901760
        %v1549 = vsub.f32 %v391, %v1548
        %v1550 = vand.u32 %v1549, 4294901760
        %1551 = vmatpush2.msra.mxu0 %v1550
        %1552 = vmatprep.subr.mxu0 0.0
        %v1553 = vand.u32 %v390, 4294901760
        %v1554 = vsub.f32 %v390, %v1553
        %v1555 = vand.u32 %v1554, 4294901760
        %1556 = vmatpush2.msra.mxu0 %v1555
        %1557 = vmatprep.subr.mxu0 0.0
        %v1558 = vand.u32 %v389, 4294901760
        %v1559 = vsub.f32 %v389, %v1558
        %v1560 = vand.u32 %v1559, 4294901760
        %1561 = vmatpush2.msra.mxu0 %v1560
        %1562 = vmatprep.subr.mxu0 0.0
        %v1563 = vand.u32 %v388, 4294901760
        %v1564 = vsub.f32 %v388, %v1563
        %v1565 = vand.u32 %v1564, 4294901760
        %1566 = vmatpush2.msra.mxu0 %v1565
        %1567 = vmatprep.subr.mxu0 0.0
        %v1568 = vand.u32 %v387, 4294901760
        %v1569 = vsub.f32 %v387, %v1568
        %v1570 = vand.u32 %v1569, 4294901760
        %1571 = vmatpush2.msra.mxu0 %v1570
        %1572 = vmatprep.subr.mxu0 0.0
        %v1573 = vand.u32 %v386, 4294901760
        %v1574 = vsub.f32 %v386, %v1573
        %v1575 = vand.u32 %v1574, 4294901760
        %1576 = vmatpush2.msra.mxu0 %v1575
        %1577 = vmatprep.subr.mxu0 0.0
        %v1578 = vand.u32 %v385, 4294901760
        %v1579 = vsub.f32 %v385, %v1578
        %v1580 = vand.u32 %v1579, 4294901760
        %1581 = vmatpush2.msra.mxu0 %v1580
        %1582 = vmatprep.subr.mxu0 0.0
        %v1583 = vand.u32 %v384, 4294901760
        %v1584 = vsub.f32 %v384, %v1583
        %v1585 = vand.u32 %v1584, 4294901760
        %1586 = vmatpush2.msra.mxu0 %v1585
        %1587 = vmatprep.subr.mxu0 0.0
        %v1588 = vand.u32 %v383, 4294901760
        %v1589 = vsub.f32 %v383, %v1588
        %v1590 = vand.u32 %v1589, 4294901760
        %1591 = vmatpush2.msra.mxu0 %v1590
        %1592 = vmatprep.subr.mxu0 0.0
        %v1593 = vand.u32 %v382, 4294901760
        %v1594 = vsub.f32 %v382, %v1593
        %v1595 = vand.u32 %v1594, 4294901760
        %1596 = vmatpush2.msra.mxu0 %v1595
        %1597 = vmatprep.subr.mxu0 0.0
        %v1598 = vand.u32 %v381, 4294901760
        %v1599 = vsub.f32 %v381, %v1598
        %v1600 = vand.u32 %v1599, 4294901760
        %1601 = vmatpush2.msra.mxu0 %v1600
        %1602 = vmatprep.subr.mxu0 0.0
        %v1603 = vand.u32 %v380, 4294901760
        %v1604 = vsub.f32 %v380, %v1603
        %v1605 = vand.u32 %v1604, 4294901760
        %1606 = vmatpush2.msra.mxu0 %v1605
        %1607 = vmatprep.subr.mxu0 0.0
        %v1608 = vand.u32 %v379, 4294901760
        %v1609 = vsub.f32 %v379, %v1608
        %v1610 = vand.u32 %v1609, 4294901760
        %1611 = vmatpush2.msra.mxu0 %v1610
        %v1612 = vand.u32 %v812, 4294901760
        %1613 = vmatprep.mubr.f32.mxu0 %v1612
        %v1614 = vand.u32 %v810, 4294901760
        %1615 = vmatmul.mubr.f32.gmra.mxu0 %v1614
        %v1616 = vpop.f32.mrf.mxu0
        %v1617 = vadd.f32 %v1438, %v1616
        %v1618 = vpop.f32.mrf.mxu0
        %v1619 = vand.u32 %v819, 4294901760
        %1620 = vmatprep.mubr.f32.mxu0 %v1619
        %v1621 = vand.u32 %v818, 4294901760
        %1622 = vmatmul.mubr.f32.gmra.mxu0 %v1621
        %v1623 = vpop.f32.mrf.mxu0
        %v1624 = vadd.f32 %v1449, %v1623
        %v1625 = vpop.f32.mrf.mxu0
        %1626 = vdwg.mxu0
        %1627 = vmatprep.subr.mxu0 0.0
        %v1628 = vand.u32 %v378, 4294901760
        %1629 = vmatpush1.msra.mxu0 %v1628
        %1630 = vmatprep.subr.mxu0 0.0
        %v1631 = vand.u32 %v377, 4294901760
        %1632 = vmatpush1.msra.mxu0 %v1631
        %1633 = vmatprep.subr.mxu0 0.0
        %v1634 = vand.u32 %v376, 4294901760
        %1635 = vmatpush1.msra.mxu0 %v1634
        %1636 = vmatprep.subr.mxu0 0.0
        %v1637 = vand.u32 %v375, 4294901760
        %1638 = vmatpush1.msra.mxu0 %v1637
        %1639 = vmatprep.subr.mxu0 0.0
        %v1640 = vand.u32 %v374, 4294901760
        %1641 = vmatpush1.msra.mxu0 %v1640
        %1642 = vmatprep.subr.mxu0 0.0
        %v1643 = vand.u32 %v373, 4294901760
        %1644 = vmatpush1.msra.mxu0 %v1643
        %1645 = vmatprep.subr.mxu0 0.0
        %v1646 = vand.u32 %v372, 4294901760
        %1647 = vmatpush1.msra.mxu0 %v1646
        %1648 = vmatprep.subr.mxu0 0.0
        %v1649 = vand.u32 %v371, 4294901760
        %1650 = vmatpush1.msra.mxu0 %v1649
        %1651 = vmatprep.subr.mxu0 0.0
        %v1652 = vand.u32 %v370, 4294901760
        %1653 = vmatpush1.msra.mxu0 %v1652
        %1654 = vmatprep.subr.mxu0 0.0
        %v1655 = vand.u32 %v369, 4294901760
        %1656 = vmatpush1.msra.mxu0 %v1655
        %1657 = vmatprep.subr.mxu0 0.0
        %v1658 = vand.u32 %v368, 4294901760
        %1659 = vmatpush1.msra.mxu0 %v1658
        %1660 = vmatprep.subr.mxu0 0.0
        %v1661 = vand.u32 %v367, 4294901760
        %1662 = vmatpush1.msra.mxu0 %v1661
        %1663 = vmatprep.subr.mxu0 0.0
        %v1664 = vand.u32 %v366, 4294901760
        %1665 = vmatpush1.msra.mxu0 %v1664
        %1666 = vmatprep.subr.mxu0 0.0
        %v1667 = vand.u32 %v365, 4294901760
        %1668 = vmatpush1.msra.mxu0 %v1667
        %1669 = vmatprep.subr.mxu0 0.0
        %v1670 = vand.u32 %v364, 4294901760
        %1671 = vmatpush1.msra.mxu0 %v1670
        %1672 = vmatprep.subr.mxu0 0.0
        %v1673 = vand.u32 %v363, 4294901760
        %1674 = vmatpush1.msra.mxu0 %v1673
        %1675 = vmatprep.subr.mxu0 0.0
        %v1676 = vand.u32 %v394, 4294901760
        %1677 = vmatpush2.msra.mxu0 %v1676
        %1678 = vmatprep.subr.mxu0 0.0
        %v1679 = vand.u32 %v393, 4294901760
        %1680 = vmatpush2.msra.mxu0 %v1679
        %1681 = vmatprep.subr.mxu0 0.0
        %v1682 = vand.u32 %v392, 4294901760
        %1683 = vmatpush2.msra.mxu0 %v1682
        %1684 = vmatprep.subr.mxu0 0.0
        %v1685 = vand.u32 %v391, 4294901760
        %1686 = vmatpush2.msra.mxu0 %v1685
        %1687 = vmatprep.subr.mxu0 0.0
        %v1688 = vand.u32 %v390, 4294901760
        %1689 = vmatpush2.msra.mxu0 %v1688
        %1690 = vmatprep.subr.mxu0 0.0
        %v1691 = vand.u32 %v389, 4294901760
        %1692 = vmatpush2.msra.mxu0 %v1691
        %1693 = vmatprep.subr.mxu0 0.0
        %v1694 = vand.u32 %v388, 4294901760
        %1695 = vmatpush2.msra.mxu0 %v1694
        %1696 = vmatprep.subr.mxu0 0.0
        %v1697 = vand.u32 %v387, 4294901760
        %1698 = vmatpush2.msra.mxu0 %v1697
        %1699 = vmatprep.subr.mxu0 0.0
        %v1700 = vand.u32 %v386, 4294901760
        %1701 = vmatpush2.msra.mxu0 %v1700
        %1702 = vmatprep.subr.mxu0 0.0
        %v1703 = vand.u32 %v385, 4294901760
        %1704 = vmatpush2.msra.mxu0 %v1703
        %1705 = vmatprep.subr.mxu0 0.0
        %v1706 = vand.u32 %v384, 4294901760
        %1707 = vmatpush2.msra.mxu0 %v1706
        %1708 = vmatprep.subr.mxu0 0.0
        %v1709 = vand.u32 %v383, 4294901760
        %1710 = vmatpush2.msra.mxu0 %v1709
        %1711 = vmatprep.subr.mxu0 0.0
        %v1712 = vand.u32 %v382, 4294901760
        %1713 = vmatpush2.msra.mxu0 %v1712
        %1714 = vmatprep.subr.mxu0 0.0
        %v1715 = vand.u32 %v381, 4294901760
        %1716 = vmatpush2.msra.mxu0 %v1715
        %1717 = vmatprep.subr.mxu0 0.0
        %v1718 = vand.u32 %v380, 4294901760
        %1719 = vmatpush2.msra.mxu0 %v1718
        %1720 = vmatprep.subr.mxu0 0.0
        %v1721 = vand.u32 %v379, 4294901760
        %1722 = vmatpush2.msra.mxu0 %v1721
        %v1723 = vand.u32 %v812, 4294901760
        %1724 = vmatprep.mubr.f32.mxu0 %v1723
        %v1725 = vand.u32 %v810, 4294901760
        %1726 = vmatmul.mubr.f32.gmra.mxu0 %v1725
        %v1727 = vpop.f32.mrf.mxu0
        %v1728 = vadd.f32 %v1617, %v1727
        %v1729 = vpop.f32.mrf.mxu0
        %v1730 = vand.u32 %v819, 4294901760
        %1731 = vmatprep.mubr.f32.mxu0 %v1730
        %v1732 = vand.u32 %v818, 4294901760
        %1733 = vmatmul.mubr.f32.gmra.mxu0 %v1732
        %v1734 = vpop.f32.mrf.mxu0
        %v1735 = vadd.f32 %v1624, %v1734
        %v1736 = vpop.f32.mrf.mxu0
        %1737 = vdwg.mxu0
        %v1738 = vsel %vm498, %v1728, 0.0
        %v1739 = vrot.slane %v1738, 4
        %v1740 = vadd.f32 %v1738, %v1739
        %v1741 = vrot.slane %v1740, 2
        %v1742 = vadd.f32 %v1740, %v1741
        %v1743 = vrot.slane %v1742, 1
        %v1744 = vadd.f32 %v1742, %v1743
        %v1745 = vmul.f32 %v1744, 0.00048828125
        %v1746 = vsel %vm498, %v1735, 0.0
        %v1747 = vrot.slane %v1746, 4
        %v1748 = vadd.f32 %v1746, %v1747
        %v1749 = vrot.slane %v1748, 2
        %v1750 = vadd.f32 %v1748, %v1749
        %v1751 = vrot.slane %v1750, 1
        %v1752 = vadd.f32 %v1750, %v1751
        %v1753 = vmul.f32 %v1752, 0.00048828125
        %v1754 = vmul.f32 %v1745, %v1745
        %v1755 = vsub.f32 %v1753, %v1754
        %v1756 = vadd.f32 %v1755, 1e-05
        %v1757 = vrsqrt.pop %v1756
        %1759 = vset.pattern.permute.xlu0 0
        %1760 = vperm.xlu0 %1759, %v1745
        %v1761 = vpop.permute.xlu0 %1760
        %v1763 = vsub.f32 %v810, %v1761
        %v1764 = vsub.f32 %v812, %v1761
        %1766 = vset.pattern.permute.xlu0 0
        %1767 = vperm.xlu0 %1766, %v1757
        %v1768 = vpop.permute.xlu0 %1767
        %v1770 = vmul.f32 %v1763, %v1768
        %v1771 = vmul.f32 %v1764, %v1768
        %1773 = vset.pattern.permute.xlu0 0
        %1774 = vperm.xlu0 %1773, %v816
        %v1775 = vpop.permute.xlu0 %1774
        %v1777 = vmul.f32 %v1770, %v1775
        %v1778 = vmul.f32 %v1771, %v1775
        %1780 = vset.pattern.permute.xlu0 0
        %1781 = vperm.xlu0 %1780, %v817
        %v1782 = vpop.permute.xlu0 %1781
        %v1784 = vadd.f32 %v1777, %v1782
        %v1785 = vadd.f32 %v1778, %v1782
        %v1786 = vmul.f32 %v1784, 0.5
        %v1787 = vmul.f32 %v1785, 0.5
        %v1788 = vmul.f32 %v1784, 0.044715
        %v1789 = vmul.f32 %v1785, 0.044715
        %v1790 = vmul.f32 %v1788, %v1784
        %v1791 = vmul.f32 %v1789, %v1785
        %v1792 = vmul.f32 %v1790, %v1784
        %v1793 = vmul.f32 %v1791, %v1785
        %v1794 = vadd.f32 %v1784, %v1792
        %v1795 = vadd.f32 %v1785, %v1793
        %v1796 = vmul.f32 %v1794, 0.7978846
        %v1797 = vmul.f32 %v1795, 0.7978846
        %v1798 = vtanh.pop %v1796
        %v1799 = vtanh.pop %v1797
        %v1800 = vadd.f32 %v1798, 1.0
        %v1801 = vadd.f32 %v1799, 1.0
        %v1802 = vmul.f32 %v1786, %v1800
        %v1803 = vmul.f32 %v1787, %v1801
        %v1804 = vld [vmem:[%s7] sm:$0xf]
        %v1805 = vmul.f32 %v1803, %v407
        %v1806 = vmul.f32 %v1802, %v411
        %v1807 = vmul.f32 %v1803, %v409
        %v1808 = vmul.f32 %v1803, %v429
        %v1809 = vmul.f32 %v1802, %v433
        %v1810 = vmul.f32 %v1803, %v431
        %v1811 = vmul.f32 %v1803, %v451
        %v1812 = vmul.f32 %v1802, %v455
        %v1813 = vmul.f32 %v1803, %v453
        %v1814 = vmul.f32 %v1803, %v473
        %v1815 = vmul.f32 %v1802, %v477
        %v1816 = vmul.f32 %v1803, %v475
        %v1817 = vmul.f32 %v1802, %v495
        %v1818 = vmul.f32 %v1803, %v499
        %v1819 = vmul.f32 %v1802, %v497
        %v1820 = vmul.f32 %v1802, %v517
        %v1821 = vmul.f32 %v1803, %v521
        %v1822 = vmul.f32 %v1802, %v519
        %v1823 = vmul.f32 %v1802, %v539
        %v1824 = vmul.f32 %v1803, %v543
        %v1825 = vmul.f32 %v1802, %v541
        %v1826 = vmul.f32 %v1802, %v561
        %v1827 = vmul.f32 %v1803, %v565
        %v1828 = vmul.f32 %v1802, %v563
        %1832 = vrot.lane.b32.xlu0 %v1808, 127
        %v1833 = vpop.permute.xlu0 %1832
        %1834 = vrot.lane.b32.xlu0 %v1809, 127
        %v1835 = vpop.permute.xlu0 %1834
        %1836 = vrot.lane.b32.xlu0 %v1810, 127
        %v1837 = vpop.permute.xlu0 %1836
        %v1838 = vsel %vm476, %v1833, %v1835
        %v1839 = vsel %vm476, %v1835, %v1837
        %1846 = vrot.lane.b32.xlu0 %v1811, 126
        %v1847 = vpop.permute.xlu0 %1846
        %1848 = vrot.lane.b32.xlu0 %v1812, 126
        %v1849 = vpop.permute.xlu0 %1848
        %1850 = vrot.lane.b32.xlu0 %v1813, 126
        %v1851 = vpop.permute.xlu0 %1850
        %v1852 = vsel %vm595, %v1847, %v1849
        %v1853 = vsel %vm595, %v1849, %v1851
        %1860 = vrot.lane.b32.xlu0 %v1814, 112
        %v1861 = vpop.permute.xlu0 %1860
        %1862 = vrot.lane.b32.xlu0 %v1815, 112
        %v1863 = vpop.permute.xlu0 %1862
        %1864 = vrot.lane.b32.xlu0 %v1816, 112
        %v1865 = vpop.permute.xlu0 %1864
        %v1866 = vsel %vm432, %v1861, %v1863
        %v1867 = vsel %vm432, %v1863, %v1865
        %1873 = vrot.lane.b32.xlu0 %v1802, 111
        %v1874 = vpop.permute.xlu0 %1873
        %1875 = vrot.lane.b32.xlu0 %v1803, 111
        %v1876 = vpop.permute.xlu0 %1875
        %v1877 = vsel %vm410, %v1874, %v1876
        %1884 = vrot.lane.b32.xlu0 %v1817, 110
        %v1885 = vpop.permute.xlu0 %1884
        %1886 = vrot.lane.b32.xlu0 %v1818, 110
        %v1887 = vpop.permute.xlu0 %1886
        %1888 = vrot.lane.b32.xlu0 %v1819, 110
        %v1889 = vpop.permute.xlu0 %1888
        %v1890 = vsel %vm634, %v1885, %v1887
        %v1891 = vsel %vm634, %v1887, %v1889
        %1898 = vrot.lane.b32.xlu0 %v1820, 96
        %v1899 = vpop.permute.xlu0 %1898
        %1900 = vrot.lane.b32.xlu0 %v1821, 96
        %v1901 = vpop.permute.xlu0 %1900
        %1902 = vrot.lane.b32.xlu0 %v1822, 96
        %v1903 = vpop.permute.xlu0 %1902
        %v1904 = vsel %vm649, %v1899, %v1901
        %v1905 = vsel %vm649, %v1901, %v1903
        %1912 = vrot.lane.b32.xlu0 %v1823, 95
        %v1913 = vpop.permute.xlu0 %1912
        %1914 = vrot.lane.b32.xlu0 %v1824, 95
        %v1915 = vpop.permute.xlu0 %1914
        %1916 = vrot.lane.b32.xlu0 %v1825, 95
        %v1917 = vpop.permute.xlu0 %1916
        %v1918 = vsel %vm664, %v1913, %v1915
        %v1919 = vsel %vm664, %v1915, %v1917
        %1926 = vrot.lane.b32.xlu0 %v1826, 94
        %v1927 = vpop.permute.xlu0 %1926
        %1928 = vrot.lane.b32.xlu0 %v1827, 94
        %v1929 = vpop.permute.xlu0 %1928
        %1930 = vrot.lane.b32.xlu0 %v1828, 94
        %v1931 = vpop.permute.xlu0 %1930
        %v1932 = vsel %vm679, %v1927, %v1929
        %v1933 = vsel %vm679, %v1929, %v1931
        %v1937 = vpack.c.bf16 %v1838, %v1805
        %v1938 = vpack.c.bf16 %v1839, %v1806
        %v1939 = vpack.c.bf16 %v1837, %v1807
        %v1940 = vpack.c.bf16 %v1866, %v1852
        %v1941 = vpack.c.bf16 %v1867, %v1853
        %v1942 = vpack.c.bf16 %v1865, %v1851
        %v1943 = vpack.c.bf16 %v1885, %v1874
        %v1944 = vpack.c.bf16 %v1890, %v1877
        %v1945 = vpack.c.bf16 %v1891, %v1876
        %v1946 = vpack.c.bf16 %v1913, %v1899
        %v1947 = vpack.c.bf16 %v1918, %v1904
        %v1948 = vpack.c.bf16 %v1919, %v1905
        %v1949 = vpack.c.bf16 %v1927, %v1927
        %v1950 = vpack.c.bf16 %v1932, %v1932
        %v1951 = vpack.c.bf16 %v1933, %v1933
        %1967 = vrot.lane.b32.xlu0 %v1937, 17
        %v1968 = vpop.permute.xlu0 %1967
        %1969 = vrot.lane.b32.xlu0 %v1938, 17
        %v1970 = vpop.permute.xlu0 %1969
        %1971 = vrot.lane.b32.xlu0 %v1939, 17
        %v1972 = vpop.permute.xlu0 %1971
        %1973 = vrot.lane.b32.xlu0 %v1940, 17
        %v1974 = vpop.permute.xlu0 %1973
        %1975 = vrot.lane.b32.xlu0 %v1941, 17
        %v1976 = vpop.permute.xlu0 %1975
        %1977 = vrot.lane.b32.xlu0 %v1942, 17
        %v1978 = vpop.permute.xlu0 %1977
        %1979 = vrot.lane.b32.xlu0 %v1943, 17
        %v1980 = vpop.permute.xlu0 %1979
        %1981 = vrot.lane.b32.xlu0 %v1944, 17
        %v1982 = vpop.permute.xlu0 %1981
        %1983 = vrot.lane.b32.xlu0 %v1945, 17
        %v1984 = vpop.permute.xlu0 %1983
        %1985 = vrot.lane.b32.xlu0 %v1946, 17
        %v1986 = vpop.permute.xlu0 %1985
        %1987 = vrot.lane.b32.xlu0 %v1947, 17
        %v1988 = vpop.permute.xlu0 %1987
        %1989 = vrot.lane.b32.xlu0 %v1948, 17
        %v1990 = vpop.permute.xlu0 %1989
        %1991 = vrot.lane.b32.xlu0 %v1949, 17
        %v1992 = vpop.permute.xlu0 %1991
        %1993 = vrot.lane.b32.xlu0 %v1950, 17
        %v1994 = vpop.permute.xlu0 %1993
        %1995 = vrot.lane.b32.xlu0 %v1951, 17
        %v1996 = vpop.permute.xlu0 %1995
        %v1997 = vsel %vm745, %v1968, %v1970
        %v1998 = vsel %vm745, %v1970, %v1972
        %v1999 = vsel %vm745, %v1974, %v1976
        %v2000 = vsel %vm745, %v1976, %v1978
        %v2001 = vsel %vm745, %v1980, %v1982
        %v2002 = vsel %vm745, %v1982, %v1984
        %v2003 = vsel %vm745, %v1986, %v1988
        %v2004 = vsel %vm745, %v1988, %v1990
        %v2005 = vsel %vm745, %v1992, %v1994
        %v2006 = vsel %vm745, %v1994, %v1996
        %v2016 = vsel %vm764, %v1804, 0
        %v2019 = vsel %vm768, %v2005, 0
        %v2022 = vsel %vm768, %v2006, 0
        %2024 = vmatprep.subr.bf16.mxu0 0
        %2025 = vmatpush1.bf16.msra.mxu0 0
        %2026 = vmatprep.subr.bf16.mxu0 0
        %2027 = vmatpush1.bf16.msra.mxu0 0
        %2028 = vmatprep.subr.bf16.mxu0 0
        %2029 = vmatpush1.bf16.msra.mxu0 0
        %2030 = vmatprep.subr.bf16.mxu0 %v2022
        %2031 = vmatpush1.bf16.msra.mxu0 %v2019
        %2032 = vmatprep.subr.bf16.mxu0 %v2004
        %2033 = vmatpush1.bf16.msra.mxu0 %v2003
        %2034 = vmatprep.subr.bf16.mxu0 %v2002
        %2035 = vmatpush1.bf16.msra.mxu0 %v2001
        %2036 = vmatprep.subr.bf16.mxu0 %v2000
        %2037 = vmatpush1.bf16.msra.mxu0 %v1999
        %2038 = vmatprep.subr.bf16.mxu0 %v1998
        %2039 = vmatpush1.bf16.msra.mxu0 %v1997
        %2040 = vmatprep.subr.bf16.mxu0 0
        %2041 = vmatpush2.bf16.msra.mxu0 0
        %2042 = vmatprep.subr.bf16.mxu0 0
        %2043 = vmatpush2.bf16.msra.mxu0 0
        %2044 = vmatprep.subr.bf16.mxu0 0
        %2045 = vmatpush2.bf16.msra.mxu0 0
        %2046 = vmatprep.subr.bf16.mxu0 0
        %2047 = vmatpush2.bf16.msra.mxu0 0
        %2048 = vmatprep.subr.bf16.mxu0 0
        %2049 = vmatpush2.bf16.msra.mxu0 0
        %2050 = vmatprep.subr.bf16.mxu0 0
        %2051 = vmatpush2.bf16.msra.mxu0 0
        %2052 = vmatprep.subr.bf16.mxu0 0
        %2053 = vmatpush2.bf16.msra.mxu0 0
        %2054 = vmatprep.subr.bf16.mxu0 0
        %2055 = vmatpush2.bf16.msra.mxu0 0
        %2056 = vmatprep.mubr.bf16.mxu0 0
        %2057 = vmatmul.mubr.bf16.gmra.mxu0 %v2016
        %v2058 = vpop.f32.mrf.mxu0
        %v2059 = vadd.f32 0.0, %v2058
        %v2060 = vpop.f32.mrf.mxu0
        %v2061 = vadd.f32 0.0, %v2060
        %v2062 = vpop.f32.mrf.mxu0
        %v2063 = vpop.f32.mrf.mxu0
        %2064 = vdwg.mxu0
        %v2065 = vld [vmem:[%s8] sm:$0xff]
        %v2066 = vld [vmem:[%s9] sm:$0xff]
        %v2067 = vmul.f32 %v2059, %v2059
        %v2068 = vmul.f32 %v2061, %v2061
        %2069 = vmatprep.subr.mxu0 0.0
        %v2070 = vand.u32 %v378, 4294901760
        %2071 = vmatpush1.msra.mxu0 %v2070
        %2072 = vmatprep.subr.mxu0 0.0
        %v2073 = vand.u32 %v377, 4294901760
        %2074 = vmatpush1.msra.mxu0 %v2073
        %2075 = vmatprep.subr.mxu0 0.0
        %v2076 = vand.u32 %v376, 4294901760
        %2077 = vmatpush1.msra.mxu0 %v2076
        %2078 = vmatprep.subr.mxu0 0.0
        %v2079 = vand.u32 %v375, 4294901760
        %2080 = vmatpush1.msra.mxu0 %v2079
        %2081 = vmatprep.subr.mxu0 0.0
        %v2082 = vand.u32 %v374, 4294901760
        %2083 = vmatpush1.msra.mxu0 %v2082
        %2084 = vmatprep.subr.mxu0 0.0
        %v2085 = vand.u32 %v373, 4294901760
        %2086 = vmatpush1.msra.mxu0 %v2085
        %2087 = vmatprep.subr.mxu0 0.0
        %v2088 = vand.u32 %v372, 4294901760
        %2089 = vmatpush1.msra.mxu0 %v2088
        %2090 = vmatprep.subr.mxu0 0.0
        %v2091 = vand.u32 %v371, 4294901760
        %2092 = vmatpush1.msra.mxu0 %v2091
        %2093 = vmatprep.subr.mxu0 0.0
        %v2094 = vand.u32 %v370, 4294901760
        %2095 = vmatpush1.msra.mxu0 %v2094
        %2096 = vmatprep.subr.mxu0 0.0
        %v2097 = vand.u32 %v369, 4294901760
        %2098 = vmatpush1.msra.mxu0 %v2097
        %2099 = vmatprep.subr.mxu0 0.0
        %v2100 = vand.u32 %v368, 4294901760
        %2101 = vmatpush1.msra.mxu0 %v2100
        %2102 = vmatprep.subr.mxu0 0.0
        %v2103 = vand.u32 %v367, 4294901760
        %2104 = vmatpush1.msra.mxu0 %v2103
        %2105 = vmatprep.subr.mxu0 0.0
        %v2106 = vand.u32 %v366, 4294901760
        %2107 = vmatpush1.msra.mxu0 %v2106
        %2108 = vmatprep.subr.mxu0 0.0
        %v2109 = vand.u32 %v365, 4294901760
        %2110 = vmatpush1.msra.mxu0 %v2109
        %2111 = vmatprep.subr.mxu0 0.0
        %v2112 = vand.u32 %v364, 4294901760
        %2113 = vmatpush1.msra.mxu0 %v2112
        %2114 = vmatprep.subr.mxu0 0.0
        %v2115 = vand.u32 %v363, 4294901760
        %2116 = vmatpush1.msra.mxu0 %v2115
        %2117 = vmatprep.subr.mxu0 0.0
        %v2118 = vand.u32 %v394, 4294901760
        %2119 = vmatpush2.msra.mxu0 %v2118
        %2120 = vmatprep.subr.mxu0 0.0
        %v2121 = vand.u32 %v393, 4294901760
        %2122 = vmatpush2.msra.mxu0 %v2121
        %2123 = vmatprep.subr.mxu0 0.0
        %v2124 = vand.u32 %v392, 4294901760
        %2125 = vmatpush2.msra.mxu0 %v2124
        %2126 = vmatprep.subr.mxu0 0.0
        %v2127 = vand.u32 %v391, 4294901760
        %2128 = vmatpush2.msra.mxu0 %v2127
        %2129 = vmatprep.subr.mxu0 0.0
        %v2130 = vand.u32 %v390, 4294901760
        %2131 = vmatpush2.msra.mxu0 %v2130
        %2132 = vmatprep.subr.mxu0 0.0
        %v2133 = vand.u32 %v389, 4294901760
        %2134 = vmatpush2.msra.mxu0 %v2133
        %2135 = vmatprep.subr.mxu0 0.0
        %v2136 = vand.u32 %v388, 4294901760
        %2137 = vmatpush2.msra.mxu0 %v2136
        %2138 = vmatprep.subr.mxu0 0.0
        %v2139 = vand.u32 %v387, 4294901760
        %2140 = vmatpush2.msra.mxu0 %v2139
        %2141 = vmatprep.subr.mxu0 0.0
        %v2142 = vand.u32 %v386, 4294901760
        %2143 = vmatpush2.msra.mxu0 %v2142
        %2144 = vmatprep.subr.mxu0 0.0
        %v2145 = vand.u32 %v385, 4294901760
        %2146 = vmatpush2.msra.mxu0 %v2145
        %2147 = vmatprep.subr.mxu0 0.0
        %v2148 = vand.u32 %v384, 4294901760
        %2149 = vmatpush2.msra.mxu0 %v2148
        %2150 = vmatprep.subr.mxu0 0.0
        %v2151 = vand.u32 %v383, 4294901760
        %2152 = vmatpush2.msra.mxu0 %v2151
        %2153 = vmatprep.subr.mxu0 0.0
        %v2154 = vand.u32 %v382, 4294901760
        %2155 = vmatpush2.msra.mxu0 %v2154
        %2156 = vmatprep.subr.mxu0 0.0
        %v2157 = vand.u32 %v381, 4294901760
        %2158 = vmatpush2.msra.mxu0 %v2157
        %2159 = vmatprep.subr.mxu0 0.0
        %v2160 = vand.u32 %v380, 4294901760
        %2161 = vmatpush2.msra.mxu0 %v2160
        %2162 = vmatprep.subr.mxu0 0.0
        %v2163 = vand.u32 %v379, 4294901760
        %2164 = vmatpush2.msra.mxu0 %v2163
        %v2165 = vand.u32 %v2061, 4294901760
        %v2166 = vsub.f32 %v2061, %v2165
        %v2167 = vand.u32 %v2166, 4294901760
        %v2168 = vsub.f32 %v2166, %v2167
        %v2169 = vand.u32 %v2168, 4294901760
        %2170 = vmatprep.mubr.f32.mxu0 %v2169
        %v2171 = vand.u32 %v2059, 4294901760
        %v2172 = vsub.f32 %v2059, %v2171
        %v2173 = vand.u32 %v2172, 4294901760
        %v2174 = vsub.f32 %v2172, %v2173
        %v2175 = vand.u32 %v2174, 4294901760
        %2176 = vmatmul.mubr.f32.gmra.mxu0 %v2175
        %v2177 = vpop.f32.mrf.mxu0
        %v2178 = vadd.f32 0.0, %v2177
        %v2179 = vpop.f32.mrf.mxu0
        %v2180 = vand.u32 %v2068, 4294901760
        %v2181 = vsub.f32 %v2068, %v2180
        %v2182 = vand.u32 %v2181, 4294901760
        %v2183 = vsub.f32 %v2181, %v2182
        %v2184 = vand.u32 %v2183, 4294901760
        %2185 = vmatprep.mubr.f32.mxu0 %v2184
        %v2186 = vand.u32 %v2067, 4294901760
        %v2187 = vsub.f32 %v2067, %v2186
        %v2188 = vand.u32 %v2187, 4294901760
        %v2189 = vsub.f32 %v2187, %v2188
        %v2190 = vand.u32 %v2189, 4294901760
        %2191 = vmatmul.mubr.f32.gmra.mxu0 %v2190
        %v2192 = vpop.f32.mrf.mxu0
        %v2193 = vadd.f32 0.0, %v2192
        %v2194 = vpop.f32.mrf.mxu0
        %2195 = vdwg.mxu0
        %2196 = vmatprep.subr.mxu0 0.0
        %v2197 = vand.u32 %v378, 4294901760
        %v2198 = vsub.f32 %v378, %v2197
        %v2199 = vand.u32 %v2198, 4294901760
        %v2200 = vsub.f32 %v2198, %v2199
        %v2201 = vand.u32 %v2200, 4294901760
        %2202 = vmatpush1.msra.mxu0 %v2201
        %2203 = vmatprep.subr.mxu0 0.0
        %v2204 = vand.u32 %v377, 4294901760
        %v2205 = vsub.f32 %v377, %v2204
        %v2206 = vand.u32 %v2205, 4294901760
        %v2207 = vsub.f32 %v2205, %v2206
        %v2208 = vand.u32 %v2207, 4294901760
        %2209 = vmatpush1.msra.mxu0 %v2208
        %2210 = vmatprep.subr.mxu0 0.0
        %v2211 = vand.u32 %v376, 4294901760
        %v2212 = vsub.f32 %v376, %v2211
        %v2213 = vand.u32 %v2212, 4294901760
        %v2214 = vsub.f32 %v2212, %v2213
        %v2215 = vand.u32 %v2214, 4294901760
        %2216 = vmatpush1.msra.mxu0 %v2215
        %2217 = vmatprep.subr.mxu0 0.0
        %v2218 = vand.u32 %v375, 4294901760
        %v2219 = vsub.f32 %v375, %v2218
        %v2220 = vand.u32 %v2219, 4294901760
        %v2221 = vsub.f32 %v2219, %v2220
        %v2222 = vand.u32 %v2221, 4294901760
        %2223 = vmatpush1.msra.mxu0 %v2222
        %2224 = vmatprep.subr.mxu0 0.0
        %v2225 = vand.u32 %v374, 4294901760
        %v2226 = vsub.f32 %v374, %v2225
        %v2227 = vand.u32 %v2226, 4294901760
        %v2228 = vsub.f32 %v2226, %v2227
        %v2229 = vand.u32 %v2228, 4294901760
        %2230 = vmatpush1.msra.mxu0 %v2229
        %2231 = vmatprep.subr.mxu0 0.0
        %v2232 = vand.u32 %v373, 4294901760
        %v2233 = vsub.f32 %v373, %v2232
        %v2234 = vand.u32 %v2233, 4294901760
        %v2235 = vsub.f32 %v2233, %v2234
        %v2236 = vand.u32 %v2235, 4294901760
        %2237 = vmatpush1.msra.mxu0 %v2236
        %2238 = vmatprep.subr.mxu0 0.0
        %v2239 = vand.u32 %v372, 4294901760
        %v2240 = vsub.f32 %v372, %v2239
        %v2241 = vand.u32 %v2240, 4294901760
        %v2242 = vsub.f32 %v2240, %v2241
        %v2243 = vand.u32 %v2242, 4294901760
        %2244 = vmatpush1.msra.mxu0 %v2243
        %2245 = vmatprep.subr.mxu0 0.0
        %v2246 = vand.u32 %v371, 4294901760
        %v2247 = vsub.f32 %v371, %v2246
        %v2248 = vand.u32 %v2247, 4294901760
        %v2249 = vsub.f32 %v2247, %v2248
        %v2250 = vand.u32 %v2249, 4294901760
        %2251 = vmatpush1.msra.mxu0 %v2250
        %2252 = vmatprep.subr.mxu0 0.0
        %v2253 = vand.u32 %v370, 4294901760
        %v2254 = vsub.f32 %v370, %v2253
        %v2255 = vand.u32 %v2254, 4294901760
        %v2256 = vsub.f32 %v2254, %v2255
        %v2257 = vand.u32 %v2256, 4294901760
        %2258 = vmatpush1.msra.mxu0 %v2257
        %2259 = vmatprep.subr.mxu0 0.0
        %v2260 = vand.u32 %v369, 4294901760
        %v2261 = vsub.f32 %v369, %v2260
        %v2262 = vand.u32 %v2261, 4294901760
        %v2263 = vsub.f32 %v2261, %v2262
        %v2264 = vand.u32 %v2263, 4294901760
        %2265 = vmatpush1.msra.mxu0 %v2264
        %2266 = vmatprep.subr.mxu0 0.0
        %v2267 = vand.u32 %v368, 4294901760
        %v2268 = vsub.f32 %v368, %v2267
        %v2269 = vand.u32 %v2268, 4294901760
        %v2270 = vsub.f32 %v2268, %v2269
        %v2271 = vand.u32 %v2270, 4294901760
        %2272 = vmatpush1.msra.mxu0 %v2271
        %2273 = vmatprep.subr.mxu0 0.0
        %v2274 = vand.u32 %v367, 4294901760
        %v2275 = vsub.f32 %v367, %v2274
        %v2276 = vand.u32 %v2275, 4294901760
        %v2277 = vsub.f32 %v2275, %v2276
        %v2278 = vand.u32 %v2277, 4294901760
        %2279 = vmatpush1.msra.mxu0 %v2278
        %2280 = vmatprep.subr.mxu0 0.0
        %v2281 = vand.u32 %v366, 4294901760
        %v2282 = vsub.f32 %v366, %v2281
        %v2283 = vand.u32 %v2282, 4294901760
        %v2284 = vsub.f32 %v2282, %v2283
        %v2285 = vand.u32 %v2284, 4294901760
        %2286 = vmatpush1.msra.mxu0 %v2285
        %2287 = vmatprep.subr.mxu0 0.0
        %v2288 = vand.u32 %v365, 4294901760
        %v2289 = vsub.f32 %v365, %v2288
        %v2290 = vand.u32 %v2289, 4294901760
        %v2291 = vsub.f32 %v2289, %v2290
        %v2292 = vand.u32 %v2291, 4294901760
        %2293 = vmatpush1.msra.mxu0 %v2292
        %2294 = vmatprep.subr.mxu0 0.0
        %v2295 = vand.u32 %v364, 4294901760
        %v2296 = vsub.f32 %v364, %v2295
        %v2297 = vand.u32 %v2296, 4294901760
        %v2298 = vsub.f32 %v2296, %v2297
        %v2299 = vand.u32 %v2298, 4294901760
        %2300 = vmatpush1.msra.mxu0 %v2299
        %2301 = vmatprep.subr.mxu0 0.0
        %v2302 = vand.u32 %v363, 4294901760
        %v2303 = vsub.f32 %v363, %v2302
        %v2304 = vand.u32 %v2303, 4294901760
        %v2305 = vsub.f32 %v2303, %v2304
        %v2306 = vand.u32 %v2305, 4294901760
        %2307 = vmatpush1.msra.mxu0 %v2306
        %2308 = vmatprep.subr.mxu0 0.0
        %v2309 = vand.u32 %v394, 4294901760
        %v2310 = vsub.f32 %v394, %v2309
        %v2311 = vand.u32 %v2310, 4294901760
        %v2312 = vsub.f32 %v2310, %v2311
        %v2313 = vand.u32 %v2312, 4294901760
        %2314 = vmatpush2.msra.mxu0 %v2313
        %2315 = vmatprep.subr.mxu0 0.0
        %v2316 = vand.u32 %v393, 4294901760
        %v2317 = vsub.f32 %v393, %v2316
        %v2318 = vand.u32 %v2317, 4294901760
        %v2319 = vsub.f32 %v2317, %v2318
        %v2320 = vand.u32 %v2319, 4294901760
        %2321 = vmatpush2.msra.mxu0 %v2320
        %2322 = vmatprep.subr.mxu0 0.0
        %v2323 = vand.u32 %v392, 4294901760
        %v2324 = vsub.f32 %v392, %v2323
        %v2325 = vand.u32 %v2324, 4294901760
        %v2326 = vsub.f32 %v2324, %v2325
        %v2327 = vand.u32 %v2326, 4294901760
        %2328 = vmatpush2.msra.mxu0 %v2327
        %2329 = vmatprep.subr.mxu0 0.0
        %v2330 = vand.u32 %v391, 4294901760
        %v2331 = vsub.f32 %v391, %v2330
        %v2332 = vand.u32 %v2331, 4294901760
        %v2333 = vsub.f32 %v2331, %v2332
        %v2334 = vand.u32 %v2333, 4294901760
        %2335 = vmatpush2.msra.mxu0 %v2334
        %2336 = vmatprep.subr.mxu0 0.0
        %v2337 = vand.u32 %v390, 4294901760
        %v2338 = vsub.f32 %v390, %v2337
        %v2339 = vand.u32 %v2338, 4294901760
        %v2340 = vsub.f32 %v2338, %v2339
        %v2341 = vand.u32 %v2340, 4294901760
        %2342 = vmatpush2.msra.mxu0 %v2341
        %2343 = vmatprep.subr.mxu0 0.0
        %v2344 = vand.u32 %v389, 4294901760
        %v2345 = vsub.f32 %v389, %v2344
        %v2346 = vand.u32 %v2345, 4294901760
        %v2347 = vsub.f32 %v2345, %v2346
        %v2348 = vand.u32 %v2347, 4294901760
        %2349 = vmatpush2.msra.mxu0 %v2348
        %2350 = vmatprep.subr.mxu0 0.0
        %v2351 = vand.u32 %v388, 4294901760
        %v2352 = vsub.f32 %v388, %v2351
        %v2353 = vand.u32 %v2352, 4294901760
        %v2354 = vsub.f32 %v2352, %v2353
        %v2355 = vand.u32 %v2354, 4294901760
        %2356 = vmatpush2.msra.mxu0 %v2355
        %2357 = vmatprep.subr.mxu0 0.0
        %v2358 = vand.u32 %v387, 4294901760
        %v2359 = vsub.f32 %v387, %v2358
        %v2360 = vand.u32 %v2359, 4294901760
        %v2361 = vsub.f32 %v2359, %v2360
        %v2362 = vand.u32 %v2361, 4294901760
        %2363 = vmatpush2.msra.mxu0 %v2362
        %2364 = vmatprep.subr.mxu0 0.0
        %v2365 = vand.u32 %v386, 4294901760
        %v2366 = vsub.f32 %v386, %v2365
        %v2367 = vand.u32 %v2366, 4294901760
        %v2368 = vsub.f32 %v2366, %v2367
        %v2369 = vand.u32 %v2368, 4294901760
        %2370 = vmatpush2.msra.mxu0 %v2369
        %2371 = vmatprep.subr.mxu0 0.0
        %v2372 = vand.u32 %v385, 4294901760
        %v2373 = vsub.f32 %v385, %v2372
        %v2374 = vand.u32 %v2373, 4294901760
        %v2375 = vsub.f32 %v2373, %v2374
        %v2376 = vand.u32 %v2375, 4294901760
        %2377 = vmatpush2.msra.mxu0 %v2376
        %2378 = vmatprep.subr.mxu0 0.0
        %v2379 = vand.u32 %v384, 4294901760
        %v2380 = vsub.f32 %v384, %v2379
        %v2381 = vand.u32 %v2380, 4294901760
        %v2382 = vsub.f32 %v2380, %v2381
        %v2383 = vand.u32 %v2382, 4294901760
        %2384 = vmatpush2.msra.mxu0 %v2383
        %2385 = vmatprep.subr.mxu0 0.0
        %v2386 = vand.u32 %v383, 4294901760
        %v2387 = vsub.f32 %v383, %v2386
        %v2388 = vand.u32 %v2387, 4294901760
        %v2389 = vsub.f32 %v2387, %v2388
        %v2390 = vand.u32 %v2389, 4294901760
        %2391 = vmatpush2.msra.mxu0 %v2390
        %2392 = vmatprep.subr.mxu0 0.0
        %v2393 = vand.u32 %v382, 4294901760
        %v2394 = vsub.f32 %v382, %v2393
        %v2395 = vand.u32 %v2394, 4294901760
        %v2396 = vsub.f32 %v2394, %v2395
        %v2397 = vand.u32 %v2396, 4294901760
        %2398 = vmatpush2.msra.mxu0 %v2397
        %2399 = vmatprep.subr.mxu0 0.0
        %v2400 = vand.u32 %v381, 4294901760
        %v2401 = vsub.f32 %v381, %v2400
        %v2402 = vand.u32 %v2401, 4294901760
        %v2403 = vsub.f32 %v2401, %v2402
        %v2404 = vand.u32 %v2403, 4294901760
        %2405 = vmatpush2.msra.mxu0 %v2404
        %2406 = vmatprep.subr.mxu0 0.0
        %v2407 = vand.u32 %v380, 4294901760
        %v2408 = vsub.f32 %v380, %v2407
        %v2409 = vand.u32 %v2408, 4294901760
        %v2410 = vsub.f32 %v2408, %v2409
        %v2411 = vand.u32 %v2410, 4294901760
        %2412 = vmatpush2.msra.mxu0 %v2411
        %2413 = vmatprep.subr.mxu0 0.0
        %v2414 = vand.u32 %v379, 4294901760
        %v2415 = vsub.f32 %v379, %v2414
        %v2416 = vand.u32 %v2415, 4294901760
        %v2417 = vsub.f32 %v2415, %v2416
        %v2418 = vand.u32 %v2417, 4294901760
        %2419 = vmatpush2.msra.mxu0 %v2418
        %v2420 = vand.u32 %v2061, 4294901760
        %2421 = vmatprep.mubr.f32.mxu0 %v2420
        %v2422 = vand.u32 %v2059, 4294901760
        %2423 = vmatmul.mubr.f32.gmra.mxu0 %v2422
        %v2424 = vpop.f32.mrf.mxu0
        %v2425 = vadd.f32 %v2178, %v2424
        %v2426 = vpop.f32.mrf.mxu0
        %v2427 = vand.u32 %v2068, 4294901760
        %2428 = vmatprep.mubr.f32.mxu0 %v2427
        %v2429 = vand.u32 %v2067, 4294901760
        %2430 = vmatmul.mubr.f32.gmra.mxu0 %v2429
        %v2431 = vpop.f32.mrf.mxu0
        %v2432 = vadd.f32 %v2193, %v2431
        %v2433 = vpop.f32.mrf.mxu0
        %2434 = vdwg.mxu0
        %2435 = vmatprep.subr.mxu0 0.0
        %v2436 = vand.u32 %v378, 4294901760
        %v2437 = vsub.f32 %v378, %v2436
        %2438 = vmatpush1.msra.mxu0 %v2437
        %2439 = vmatprep.subr.mxu0 0.0
        %v2440 = vand.u32 %v377, 4294901760
        %v2441 = vsub.f32 %v377, %v2440
        %2442 = vmatpush1.msra.mxu0 %v2441
        %2443 = vmatprep.subr.mxu0 0.0
        %v2444 = vand.u32 %v376, 4294901760
        %v2445 = vsub.f32 %v376, %v2444
        %2446 = vmatpush1.msra.mxu0 %v2445
        %2447 = vmatprep.subr.mxu0 0.0
        %v2448 = vand.u32 %v375, 4294901760
        %v2449 = vsub.f32 %v375, %v2448
        %2450 = vmatpush1.msra.mxu0 %v2449
        %2451 = vmatprep.subr.mxu0 0.0
        %v2452 = vand.u32 %v374, 4294901760
        %v2453 = vsub.f32 %v374, %v2452
        %2454 = vmatpush1.msra.mxu0 %v2453
        %2455 = vmatprep.subr.mxu0 0.0
        %v2456 = vand.u32 %v373, 4294901760
        %v2457 = vsub.f32 %v373, %v2456
        %2458 = vmatpush1.msra.mxu0 %v2457
        %2459 = vmatprep.subr.mxu0 0.0
        %v2460 = vand.u32 %v372, 4294901760
        %v2461 = vsub.f32 %v372, %v2460
        %2462 = vmatpush1.msra.mxu0 %v2461
        %2463 = vmatprep.subr.mxu0 0.0
        %v2464 = vand.u32 %v371, 4294901760
        %v2465 = vsub.f32 %v371, %v2464
        %2466 = vmatpush1.msra.mxu0 %v2465
        %2467 = vmatprep.subr.mxu0 0.0
        %v2468 = vand.u32 %v370, 4294901760
        %v2469 = vsub.f32 %v370, %v2468
        %2470 = vmatpush1.msra.mxu0 %v2469
        %2471 = vmatprep.subr.mxu0 0.0
        %v2472 = vand.u32 %v369, 4294901760
        %v2473 = vsub.f32 %v369, %v2472
        %2474 = vmatpush1.msra.mxu0 %v2473
        %2475 = vmatprep.subr.mxu0 0.0
        %v2476 = vand.u32 %v368, 4294901760
        %v2477 = vsub.f32 %v368, %v2476
        %2478 = vmatpush1.msra.mxu0 %v2477
        %2479 = vmatprep.subr.mxu0 0.0
        %v2480 = vand.u32 %v367, 4294901760
        %v2481 = vsub.f32 %v367, %v2480
        %2482 = vmatpush1.msra.mxu0 %v2481
        %2483 = vmatprep.subr.mxu0 0.0
        %v2484 = vand.u32 %v366, 4294901760
        %v2485 = vsub.f32 %v366, %v2484
        %2486 = vmatpush1.msra.mxu0 %v2485
        %2487 = vmatprep.subr.mxu0 0.0
        %v2488 = vand.u32 %v365, 4294901760
        %v2489 = vsub.f32 %v365, %v2488
        %2490 = vmatpush1.msra.mxu0 %v2489
        %2491 = vmatprep.subr.mxu0 0.0
        %v2492 = vand.u32 %v364, 4294901760
        %v2493 = vsub.f32 %v364, %v2492
        %2494 = vmatpush1.msra.mxu0 %v2493
        %2495 = vmatprep.subr.mxu0 0.0
        %v2496 = vand.u32 %v363, 4294901760
        %v2497 = vsub.f32 %v363, %v2496
        %2498 = vmatpush1.msra.mxu0 %v2497
        %2499 = vmatprep.subr.mxu0 0.0
        %v2500 = vand.u32 %v394, 4294901760
        %v2501 = vsub.f32 %v394, %v2500
        %2502 = vmatpush2.msra.mxu0 %v2501
        %2503 = vmatprep.subr.mxu0 0.0
        %v2504 = vand.u32 %v393, 4294901760
        %v2505 = vsub.f32 %v393, %v2504
        %2506 = vmatpush2.msra.mxu0 %v2505
        %2507 = vmatprep.subr.mxu0 0.0
        %v2508 = vand.u32 %v392, 4294901760
        %v2509 = vsub.f32 %v392, %v2508
        %2510 = vmatpush2.msra.mxu0 %v2509
        %2511 = vmatprep.subr.mxu0 0.0
        %v2512 = vand.u32 %v391, 4294901760
        %v2513 = vsub.f32 %v391, %v2512
        %2514 = vmatpush2.msra.mxu0 %v2513
        %2515 = vmatprep.subr.mxu0 0.0
        %v2516 = vand.u32 %v390, 4294901760
        %v2517 = vsub.f32 %v390, %v2516
        %2518 = vmatpush2.msra.mxu0 %v2517
        %2519 = vmatprep.subr.mxu0 0.0
        %v2520 = vand.u32 %v389, 4294901760
        %v2521 = vsub.f32 %v389, %v2520
        %2522 = vmatpush2.msra.mxu0 %v2521
        %2523 = vmatprep.subr.mxu0 0.0
        %v2524 = vand.u32 %v388, 4294901760
        %v2525 = vsub.f32 %v388, %v2524
        %2526 = vmatpush2.msra.mxu0 %v2525
        %2527 = vmatprep.subr.mxu0 0.0
        %v2528 = vand.u32 %v387, 4294901760
        %v2529 = vsub.f32 %v387, %v2528
        %2530 = vmatpush2.msra.mxu0 %v2529
        %2531 = vmatprep.subr.mxu0 0.0
        %v2532 = vand.u32 %v386, 4294901760
        %v2533 = vsub.f32 %v386, %v2532
        %2534 = vmatpush2.msra.mxu0 %v2533
        %2535 = vmatprep.subr.mxu0 0.0
        %v2536 = vand.u32 %v385, 4294901760
        %v2537 = vsub.f32 %v385, %v2536
        %2538 = vmatpush2.msra.mxu0 %v2537
        %2539 = vmatprep.subr.mxu0 0.0
        %v2540 = vand.u32 %v384, 4294901760
        %v2541 = vsub.f32 %v384, %v2540
        %2542 = vmatpush2.msra.mxu0 %v2541
        %2543 = vmatprep.subr.mxu0 0.0
        %v2544 = vand.u32 %v383, 4294901760
        %v2545 = vsub.f32 %v383, %v2544
        %2546 = vmatpush2.msra.mxu0 %v2545
        %2547 = vmatprep.subr.mxu0 0.0
        %v2548 = vand.u32 %v382, 4294901760
        %v2549 = vsub.f32 %v382, %v2548
        %2550 = vmatpush2.msra.mxu0 %v2549
        %2551 = vmatprep.subr.mxu0 0.0
        %v2552 = vand.u32 %v381, 4294901760
        %v2553 = vsub.f32 %v381, %v2552
        %2554 = vmatpush2.msra.mxu0 %v2553
        %2555 = vmatprep.subr.mxu0 0.0
        %v2556 = vand.u32 %v380, 4294901760
        %v2557 = vsub.f32 %v380, %v2556
        %2558 = vmatpush2.msra.mxu0 %v2557
        %2559 = vmatprep.subr.mxu0 0.0
        %v2560 = vand.u32 %v379, 4294901760
        %v2561 = vsub.f32 %v379, %v2560
        %2562 = vmatpush2.msra.mxu0 %v2561
        %v2563 = vand.u32 %v2061, 4294901760
        %v2564 = vsub.f32 %v2061, %v2563
        %2565 = vmatprep.mubr.f32.mxu0 %v2564
        %v2566 = vand.u32 %v2059, 4294901760
        %v2567 = vsub.f32 %v2059, %v2566
        %2568 = vmatmul.mubr.f32.gmra.mxu0 %v2567
        %v2569 = vpop.f32.mrf.mxu0
        %v2570 = vadd.f32 %v2425, %v2569
        %v2571 = vpop.f32.mrf.mxu0
        %v2572 = vand.u32 %v2068, 4294901760
        %v2573 = vsub.f32 %v2068, %v2572
        %2574 = vmatprep.mubr.f32.mxu0 %v2573
        %v2575 = vand.u32 %v2067, 4294901760
        %v2576 = vsub.f32 %v2067, %v2575
        %2577 = vmatmul.mubr.f32.gmra.mxu0 %v2576
        %v2578 = vpop.f32.mrf.mxu0
        %v2579 = vadd.f32 %v2432, %v2578
        %v2580 = vpop.f32.mrf.mxu0
        %2581 = vdwg.mxu0
        %2582 = vmatprep.subr.mxu0 0.0
        %v2583 = vand.u32 %v378, 4294901760
        %2584 = vmatpush1.msra.mxu0 %v2583
        %2585 = vmatprep.subr.mxu0 0.0
        %v2586 = vand.u32 %v377, 4294901760
        %2587 = vmatpush1.msra.mxu0 %v2586
        %2588 = vmatprep.subr.mxu0 0.0
        %v2589 = vand.u32 %v376, 4294901760
        %2590 = vmatpush1.msra.mxu0 %v2589
        %2591 = vmatprep.subr.mxu0 0.0
        %v2592 = vand.u32 %v375, 4294901760
        %2593 = vmatpush1.msra.mxu0 %v2592
        %2594 = vmatprep.subr.mxu0 0.0
        %v2595 = vand.u32 %v374, 4294901760
        %2596 = vmatpush1.msra.mxu0 %v2595
        %2597 = vmatprep.subr.mxu0 0.0
        %v2598 = vand.u32 %v373, 4294901760
        %2599 = vmatpush1.msra.mxu0 %v2598
        %2600 = vmatprep.subr.mxu0 0.0
        %v2601 = vand.u32 %v372, 4294901760
        %2602 = vmatpush1.msra.mxu0 %v2601
        %2603 = vmatprep.subr.mxu0 0.0
        %v2604 = vand.u32 %v371, 4294901760
        %2605 = vmatpush1.msra.mxu0 %v2604
        %2606 = vmatprep.subr.mxu0 0.0
        %v2607 = vand.u32 %v370, 4294901760
        %2608 = vmatpush1.msra.mxu0 %v2607
        %2609 = vmatprep.subr.mxu0 0.0
        %v2610 = vand.u32 %v369, 4294901760
        %2611 = vmatpush1.msra.mxu0 %v2610
        %2612 = vmatprep.subr.mxu0 0.0
        %v2613 = vand.u32 %v368, 4294901760
        %2614 = vmatpush1.msra.mxu0 %v2613
        %2615 = vmatprep.subr.mxu0 0.0
        %v2616 = vand.u32 %v367, 4294901760
        %2617 = vmatpush1.msra.mxu0 %v2616
        %2618 = vmatprep.subr.mxu0 0.0
        %v2619 = vand.u32 %v366, 4294901760
        %2620 = vmatpush1.msra.mxu0 %v2619
        %2621 = vmatprep.subr.mxu0 0.0
        %v2622 = vand.u32 %v365, 4294901760
        %2623 = vmatpush1.msra.mxu0 %v2622
        %2624 = vmatprep.subr.mxu0 0.0
        %v2625 = vand.u32 %v364, 4294901760
        %2626 = vmatpush1.msra.mxu0 %v2625
        %2627 = vmatprep.subr.mxu0 0.0
        %v2628 = vand.u32 %v363, 4294901760
        %2629 = vmatpush1.msra.mxu0 %v2628
        %2630 = vmatprep.subr.mxu0 0.0
        %v2631 = vand.u32 %v394, 4294901760
        %2632 = vmatpush2.msra.mxu0 %v2631
        %2633 = vmatprep.subr.mxu0 0.0
        %v2634 = vand.u32 %v393, 4294901760
        %2635 = vmatpush2.msra.mxu0 %v2634
        %2636 = vmatprep.subr.mxu0 0.0
        %v2637 = vand.u32 %v392, 4294901760
        %2638 = vmatpush2.msra.mxu0 %v2637
        %2639 = vmatprep.subr.mxu0 0.0
        %v2640 = vand.u32 %v391, 4294901760
        %2641 = vmatpush2.msra.mxu0 %v2640
        %2642 = vmatprep.subr.mxu0 0.0
        %v2643 = vand.u32 %v390, 4294901760
        %2644 = vmatpush2.msra.mxu0 %v2643
        %2645 = vmatprep.subr.mxu0 0.0
        %v2646 = vand.u32 %v389, 4294901760
        %2647 = vmatpush2.msra.mxu0 %v2646
        %2648 = vmatprep.subr.mxu0 0.0
        %v2649 = vand.u32 %v388, 4294901760
        %2650 = vmatpush2.msra.mxu0 %v2649
        %2651 = vmatprep.subr.mxu0 0.0
        %v2652 = vand.u32 %v387, 4294901760
        %2653 = vmatpush2.msra.mxu0 %v2652
        %2654 = vmatprep.subr.mxu0 0.0
        %v2655 = vand.u32 %v386, 4294901760
        %2656 = vmatpush2.msra.mxu0 %v2655
        %2657 = vmatprep.subr.mxu0 0.0
        %v2658 = vand.u32 %v385, 4294901760
        %2659 = vmatpush2.msra.mxu0 %v2658
        %2660 = vmatprep.subr.mxu0 0.0
        %v2661 = vand.u32 %v384, 4294901760
        %2662 = vmatpush2.msra.mxu0 %v2661
        %2663 = vmatprep.subr.mxu0 0.0
        %v2664 = vand.u32 %v383, 4294901760
        %2665 = vmatpush2.msra.mxu0 %v2664
        %2666 = vmatprep.subr.mxu0 0.0
        %v2667 = vand.u32 %v382, 4294901760
        %2668 = vmatpush2.msra.mxu0 %v2667
        %2669 = vmatprep.subr.mxu0 0.0
        %v2670 = vand.u32 %v381, 4294901760
        %2671 = vmatpush2.msra.mxu0 %v2670
        %2672 = vmatprep.subr.mxu0 0.0
        %v2673 = vand.u32 %v380, 4294901760
        %2674 = vmatpush2.msra.mxu0 %v2673
        %2675 = vmatprep.subr.mxu0 0.0
        %v2676 = vand.u32 %v379, 4294901760
        %2677 = vmatpush2.msra.mxu0 %v2676
        %v2678 = vand.u32 %v2061, 4294901760
        %v2679 = vsub.f32 %v2061, %v2678
        %v2680 = vand.u32 %v2679, 4294901760
        %2681 = vmatprep.mubr.f32.mxu0 %v2680
        %v2682 = vand.u32 %v2059, 4294901760
        %v2683 = vsub.f32 %v2059, %v2682
        %v2684 = vand.u32 %v2683, 4294901760
        %2685 = vmatmul.mubr.f32.gmra.mxu0 %v2684
        %v2686 = vpop.f32.mrf.mxu0
        %v2687 = vadd.f32 %v2570, %v2686
        %v2688 = vpop.f32.mrf.mxu0
        %v2689 = vand.u32 %v2068, 4294901760
        %v2690 = vsub.f32 %v2068, %v2689
        %v2691 = vand.u32 %v2690, 4294901760
        %2692 = vmatprep.mubr.f32.mxu0 %v2691
        %v2693 = vand.u32 %v2067, 4294901760
        %v2694 = vsub.f32 %v2067, %v2693
        %v2695 = vand.u32 %v2694, 4294901760
        %2696 = vmatmul.mubr.f32.gmra.mxu0 %v2695
        %v2697 = vpop.f32.mrf.mxu0
        %v2698 = vadd.f32 %v2579, %v2697
        %v2699 = vpop.f32.mrf.mxu0
        %2700 = vdwg.mxu0
        %2701 = vmatprep.subr.mxu0 0.0
        %v2702 = vand.u32 %v378, 4294901760
        %v2703 = vsub.f32 %v378, %v2702
        %v2704 = vand.u32 %v2703, 4294901760
        %2705 = vmatpush1.msra.mxu0 %v2704
        %2706 = vmatprep.subr.mxu0 0.0
        %v2707 = vand.u32 %v377, 4294901760
        %v2708 = vsub.f32 %v377, %v2707
        %v2709 = vand.u32 %v2708, 4294901760
        %2710 = vmatpush1.msra.mxu0 %v2709
        %2711 = vmatprep.subr.mxu0 0.0
        %v2712 = vand.u32 %v376, 4294901760
        %v2713 = vsub.f32 %v376, %v2712
        %v2714 = vand.u32 %v2713, 4294901760
        %2715 = vmatpush1.msra.mxu0 %v2714
        %2716 = vmatprep.subr.mxu0 0.0
        %v2717 = vand.u32 %v375, 4294901760
        %v2718 = vsub.f32 %v375, %v2717
        %v2719 = vand.u32 %v2718, 4294901760
        %2720 = vmatpush1.msra.mxu0 %v2719
        %2721 = vmatprep.subr.mxu0 0.0
        %v2722 = vand.u32 %v374, 4294901760
        %v2723 = vsub.f32 %v374, %v2722
        %v2724 = vand.u32 %v2723, 4294901760
        %2725 = vmatpush1.msra.mxu0 %v2724
        %2726 = vmatprep.subr.mxu0 0.0
        %v2727 = vand.u32 %v373, 4294901760
        %v2728 = vsub.f32 %v373, %v2727
        %v2729 = vand.u32 %v2728, 4294901760
        %2730 = vmatpush1.msra.mxu0 %v2729
        %2731 = vmatprep.subr.mxu0 0.0
        %v2732 = vand.u32 %v372, 4294901760
        %v2733 = vsub.f32 %v372, %v2732
        %v2734 = vand.u32 %v2733, 4294901760
        %2735 = vmatpush1.msra.mxu0 %v2734
        %2736 = vmatprep.subr.mxu0 0.0
        %v2737 = vand.u32 %v371, 4294901760
        %v2738 = vsub.f32 %v371, %v2737
        %v2739 = vand.u32 %v2738, 4294901760
        %2740 = vmatpush1.msra.mxu0 %v2739
        %2741 = vmatprep.subr.mxu0 0.0
        %v2742 = vand.u32 %v370, 4294901760
        %v2743 = vsub.f32 %v370, %v2742
        %v2744 = vand.u32 %v2743, 4294901760
        %2745 = vmatpush1.msra.mxu0 %v2744
        %2746 = vmatprep.subr.mxu0 0.0
        %v2747 = vand.u32 %v369, 4294901760
        %v2748 = vsub.f32 %v369, %v2747
        %v2749 = vand.u32 %v2748, 4294901760
        %2750 = vmatpush1.msra.mxu0 %v2749
        %2751 = vmatprep.subr.mxu0 0.0
        %v2752 = vand.u32 %v368, 4294901760
        %v2753 = vsub.f32 %v368, %v2752
        %v2754 = vand.u32 %v2753, 4294901760
        %2755 = vmatpush1.msra.mxu0 %v2754
        %2756 = vmatprep.subr.mxu0 0.0
        %v2757 = vand.u32 %v367, 4294901760
        %v2758 = vsub.f32 %v367, %v2757
        %v2759 = vand.u32 %v2758, 4294901760
        %2760 = vmatpush1.msra.mxu0 %v2759
        %2761 = vmatprep.subr.mxu0 0.0
        %v2762 = vand.u32 %v366, 4294901760
        %v2763 = vsub.f32 %v366, %v2762
        %v2764 = vand.u32 %v2763, 4294901760
        %2765 = vmatpush1.msra.mxu0 %v2764
        %2766 = vmatprep.subr.mxu0 0.0
        %v2767 = vand.u32 %v365, 4294901760
        %v2768 = vsub.f32 %v365, %v2767
        %v2769 = vand.u32 %v2768, 4294901760
        %2770 = vmatpush1.msra.mxu0 %v2769
        %2771 = vmatprep.subr.mxu0 0.0
        %v2772 = vand.u32 %v364, 4294901760
        %v2773 = vsub.f32 %v364, %v2772
        %v2774 = vand.u32 %v2773, 4294901760
        %2775 = vmatpush1.msra.mxu0 %v2774
        %2776 = vmatprep.subr.mxu0 0.0
        %v2777 = vand.u32 %v363, 4294901760
        %v2778 = vsub.f32 %v363, %v2777
        %v2779 = vand.u32 %v2778, 4294901760
        %2780 = vmatpush1.msra.mxu0 %v2779
        %2781 = vmatprep.subr.mxu0 0.0
        %v2782 = vand.u32 %v394, 4294901760
        %v2783 = vsub.f32 %v394, %v2782
        %v2784 = vand.u32 %v2783, 4294901760
        %2785 = vmatpush2.msra.mxu0 %v2784
        %2786 = vmatprep.subr.mxu0 0.0
        %v2787 = vand.u32 %v393, 4294901760
        %v2788 = vsub.f32 %v393, %v2787
        %v2789 = vand.u32 %v2788, 4294901760
        %2790 = vmatpush2.msra.mxu0 %v2789
        %2791 = vmatprep.subr.mxu0 0.0
        %v2792 = vand.u32 %v392, 4294901760
        %v2793 = vsub.f32 %v392, %v2792
        %v2794 = vand.u32 %v2793, 4294901760
        %2795 = vmatpush2.msra.mxu0 %v2794
        %2796 = vmatprep.subr.mxu0 0.0
        %v2797 = vand.u32 %v391, 4294901760
        %v2798 = vsub.f32 %v391, %v2797
        %v2799 = vand.u32 %v2798, 4294901760
        %2800 = vmatpush2.msra.mxu0 %v2799
        %2801 = vmatprep.subr.mxu0 0.0
        %v2802 = vand.u32 %v390, 4294901760
        %v2803 = vsub.f32 %v390, %v2802
        %v2804 = vand.u32 %v2803, 4294901760
        %2805 = vmatpush2.msra.mxu0 %v2804
        %2806 = vmatprep.subr.mxu0 0.0
        %v2807 = vand.u32 %v389, 4294901760
        %v2808 = vsub.f32 %v389, %v2807
        %v2809 = vand.u32 %v2808, 4294901760
        %2810 = vmatpush2.msra.mxu0 %v2809
        %2811 = vmatprep.subr.mxu0 0.0
        %v2812 = vand.u32 %v388, 4294901760
        %v2813 = vsub.f32 %v388, %v2812
        %v2814 = vand.u32 %v2813, 4294901760
        %2815 = vmatpush2.msra.mxu0 %v2814
        %2816 = vmatprep.subr.mxu0 0.0
        %v2817 = vand.u32 %v387, 4294901760
        %v2818 = vsub.f32 %v387, %v2817
        %v2819 = vand.u32 %v2818, 4294901760
        %2820 = vmatpush2.msra.mxu0 %v2819
        %2821 = vmatprep.subr.mxu0 0.0
        %v2822 = vand.u32 %v386, 4294901760
        %v2823 = vsub.f32 %v386, %v2822
        %v2824 = vand.u32 %v2823, 4294901760
        %2825 = vmatpush2.msra.mxu0 %v2824
        %2826 = vmatprep.subr.mxu0 0.0
        %v2827 = vand.u32 %v385, 4294901760
        %v2828 = vsub.f32 %v385, %v2827
        %v2829 = vand.u32 %v2828, 4294901760
        %2830 = vmatpush2.msra.mxu0 %v2829
        %2831 = vmatprep.subr.mxu0 0.0
        %v2832 = vand.u32 %v384, 4294901760
        %v2833 = vsub.f32 %v384, %v2832
        %v2834 = vand.u32 %v2833, 4294901760
        %2835 = vmatpush2.msra.mxu0 %v2834
        %2836 = vmatprep.subr.mxu0 0.0
        %v2837 = vand.u32 %v383, 4294901760
        %v2838 = vsub.f32 %v383, %v2837
        %v2839 = vand.u32 %v2838, 4294901760
        %2840 = vmatpush2.msra.mxu0 %v2839
        %2841 = vmatprep.subr.mxu0 0.0
        %v2842 = vand.u32 %v382, 4294901760
        %v2843 = vsub.f32 %v382, %v2842
        %v2844 = vand.u32 %v2843, 4294901760
        %2845 = vmatpush2.msra.mxu0 %v2844
        %2846 = vmatprep.subr.mxu0 0.0
        %v2847 = vand.u32 %v381, 4294901760
        %v2848 = vsub.f32 %v381, %v2847
        %v2849 = vand.u32 %v2848, 4294901760
        %2850 = vmatpush2.msra.mxu0 %v2849
        %2851 = vmatprep.subr.mxu0 0.0
        %v2852 = vand.u32 %v380, 4294901760
        %v2853 = vsub.f32 %v380, %v2852
        %v2854 = vand.u32 %v2853, 4294901760
        %2855 = vmatpush2.msra.mxu0 %v2854
        %2856 = vmatprep.subr.mxu0 0.0
        %v2857 = vand.u32 %v379, 4294901760
        %v2858 = vsub.f32 %v379, %v2857
        %v2859 = vand.u32 %v2858, 4294901760
        %2860 = vmatpush2.msra.mxu0 %v2859
        %v2861 = vand.u32 %v2061, 4294901760
        %2862 = vmatprep.mubr.f32.mxu0 %v2861
        %v2863 = vand.u32 %v2059, 4294901760
        %2864 = vmatmul.mubr.f32.gmra.mxu0 %v2863
        %v2865 = vpop.f32.mrf.mxu0
        %v2866 = vadd.f32 %v2687, %v2865
        %v2867 = vpop.f32.mrf.mxu0
        %v2868 = vand.u32 %v2068, 4294901760
        %2869 = vmatprep.mubr.f32.mxu0 %v2868
        %v2870 = vand.u32 %v2067, 4294901760
        %2871 = vmatmul.mubr.f32.gmra.mxu0 %v2870
        %v2872 = vpop.f32.mrf.mxu0
        %v2873 = vadd.f32 %v2698, %v2872
        %v2874 = vpop.f32.mrf.mxu0
        %2875 = vdwg.mxu0
        %2876 = vmatprep.subr.mxu0 0.0
        %v2877 = vand.u32 %v378, 4294901760
        %2878 = vmatpush1.msra.mxu0 %v2877
        %2879 = vmatprep.subr.mxu0 0.0
        %v2880 = vand.u32 %v377, 4294901760
        %2881 = vmatpush1.msra.mxu0 %v2880
        %2882 = vmatprep.subr.mxu0 0.0
        %v2883 = vand.u32 %v376, 4294901760
        %2884 = vmatpush1.msra.mxu0 %v2883
        %2885 = vmatprep.subr.mxu0 0.0
        %v2886 = vand.u32 %v375, 4294901760
        %2887 = vmatpush1.msra.mxu0 %v2886
        %2888 = vmatprep.subr.mxu0 0.0
        %v2889 = vand.u32 %v374, 4294901760
        %2890 = vmatpush1.msra.mxu0 %v2889
        %2891 = vmatprep.subr.mxu0 0.0
        %v2892 = vand.u32 %v373, 4294901760
        %2893 = vmatpush1.msra.mxu0 %v2892
        %2894 = vmatprep.subr.mxu0 0.0
        %v2895 = vand.u32 %v372, 4294901760
        %2896 = vmatpush1.msra.mxu0 %v2895
        %2897 = vmatprep.subr.mxu0 0.0
        %v2898 = vand.u32 %v371, 4294901760
        %2899 = vmatpush1.msra.mxu0 %v2898
        %2900 = vmatprep.subr.mxu0 0.0
        %v2901 = vand.u32 %v370, 4294901760
        %2902 = vmatpush1.msra.mxu0 %v2901
        %2903 = vmatprep.subr.mxu0 0.0
        %v2904 = vand.u32 %v369, 4294901760
        %2905 = vmatpush1.msra.mxu0 %v2904
        %2906 = vmatprep.subr.mxu0 0.0
        %v2907 = vand.u32 %v368, 4294901760
        %2908 = vmatpush1.msra.mxu0 %v2907
        %2909 = vmatprep.subr.mxu0 0.0
        %v2910 = vand.u32 %v367, 4294901760
        %2911 = vmatpush1.msra.mxu0 %v2910
        %2912 = vmatprep.subr.mxu0 0.0
        %v2913 = vand.u32 %v366, 4294901760
        %2914 = vmatpush1.msra.mxu0 %v2913
        %2915 = vmatprep.subr.mxu0 0.0
        %v2916 = vand.u32 %v365, 4294901760
        %2917 = vmatpush1.msra.mxu0 %v2916
        %2918 = vmatprep.subr.mxu0 0.0
        %v2919 = vand.u32 %v364, 4294901760
        %2920 = vmatpush1.msra.mxu0 %v2919
        %2921 = vmatprep.subr.mxu0 0.0
        %v2922 = vand.u32 %v363, 4294901760
        %2923 = vmatpush1.msra.mxu0 %v2922
        %2924 = vmatprep.subr.mxu0 0.0
        %v2925 = vand.u32 %v394, 4294901760
        %2926 = vmatpush2.msra.mxu0 %v2925
        %2927 = vmatprep.subr.mxu0 0.0
        %v2928 = vand.u32 %v393, 4294901760
        %2929 = vmatpush2.msra.mxu0 %v2928
        %2930 = vmatprep.subr.mxu0 0.0
        %v2931 = vand.u32 %v392, 4294901760
        %2932 = vmatpush2.msra.mxu0 %v2931
        %2933 = vmatprep.subr.mxu0 0.0
        %v2934 = vand.u32 %v391, 4294901760
        %2935 = vmatpush2.msra.mxu0 %v2934
        %2936 = vmatprep.subr.mxu0 0.0
        %v2937 = vand.u32 %v390, 4294901760
        %2938 = vmatpush2.msra.mxu0 %v2937
        %2939 = vmatprep.subr.mxu0 0.0
        %v2940 = vand.u32 %v389, 4294901760
        %2941 = vmatpush2.msra.mxu0 %v2940
        %2942 = vmatprep.subr.mxu0 0.0
        %v2943 = vand.u32 %v388, 4294901760
        %2944 = vmatpush2.msra.mxu0 %v2943
        %2945 = vmatprep.subr.mxu0 0.0
        %v2946 = vand.u32 %v387, 4294901760
        %2947 = vmatpush2.msra.mxu0 %v2946
        %2948 = vmatprep.subr.mxu0 0.0
        %v2949 = vand.u32 %v386, 4294901760
        %2950 = vmatpush2.msra.mxu0 %v2949
        %2951 = vmatprep.subr.mxu0 0.0
        %v2952 = vand.u32 %v385, 4294901760
        %2953 = vmatpush2.msra.mxu0 %v2952
        %2954 = vmatprep.subr.mxu0 0.0
        %v2955 = vand.u32 %v384, 4294901760
        %2956 = vmatpush2.msra.mxu0 %v2955
        %2957 = vmatprep.subr.mxu0 0.0
        %v2958 = vand.u32 %v383, 4294901760
        %2959 = vmatpush2.msra.mxu0 %v2958
        %2960 = vmatprep.subr.mxu0 0.0
        %v2961 = vand.u32 %v382, 4294901760
        %2962 = vmatpush2.msra.mxu0 %v2961
        %2963 = vmatprep.subr.mxu0 0.0
        %v2964 = vand.u32 %v381, 4294901760
        %2965 = vmatpush2.msra.mxu0 %v2964
        %2966 = vmatprep.subr.mxu0 0.0
        %v2967 = vand.u32 %v380, 4294901760
        %2968 = vmatpush2.msra.mxu0 %v2967
        %2969 = vmatprep.subr.mxu0 0.0
        %v2970 = vand.u32 %v379, 4294901760
        %2971 = vmatpush2.msra.mxu0 %v2970
        %v2972 = vand.u32 %v2061, 4294901760
        %2973 = vmatprep.mubr.f32.mxu0 %v2972
        %v2974 = vand.u32 %v2059, 4294901760
        %2975 = vmatmul.mubr.f32.gmra.mxu0 %v2974
        %v2976 = vpop.f32.mrf.mxu0
        %v2977 = vadd.f32 %v2866, %v2976
        %v2978 = vpop.f32.mrf.mxu0
        %v2979 = vand.u32 %v2068, 4294901760
        %2980 = vmatprep.mubr.f32.mxu0 %v2979
        %v2981 = vand.u32 %v2067, 4294901760
        %2982 = vmatmul.mubr.f32.gmra.mxu0 %v2981
        %v2983 = vpop.f32.mrf.mxu0
        %v2984 = vadd.f32 %v2873, %v2983
        %v2985 = vpop.f32.mrf.mxu0
        %2986 = vdwg.mxu0
        %v2987 = vsel %vm498, %v2977, 0.0
        %v2988 = vrot.slane %v2987, 4
        %v2989 = vadd.f32 %v2987, %v2988
        %v2990 = vrot.slane %v2989, 2
        %v2991 = vadd.f32 %v2989, %v2990
        %v2992 = vrot.slane %v2991, 1
        %v2993 = vadd.f32 %v2991, %v2992
        %v2994 = vmul.f32 %v2993, 0.00048828125
        %v2995 = vsel %vm498, %v2984, 0.0
        %v2996 = vrot.slane %v2995, 4
        %v2997 = vadd.f32 %v2995, %v2996
        %v2998 = vrot.slane %v2997, 2
        %v2999 = vadd.f32 %v2997, %v2998
        %v3000 = vrot.slane %v2999, 1
        %v3001 = vadd.f32 %v2999, %v3000
        %v3002 = vmul.f32 %v3001, 0.00048828125
        %v3003 = vmul.f32 %v2994, %v2994
        %v3004 = vsub.f32 %v3002, %v3003
        %v3005 = vadd.f32 %v3004, 1e-05
        %v3006 = vrsqrt.pop %v3005
        %3008 = vset.pattern.permute.xlu0 0
        %3009 = vperm.xlu0 %3008, %v2994
        %v3010 = vpop.permute.xlu0 %3009
        %v3012 = vsub.f32 %v2059, %v3010
        %v3013 = vsub.f32 %v2061, %v3010
        %3015 = vset.pattern.permute.xlu0 0
        %3016 = vperm.xlu0 %3015, %v3006
        %v3017 = vpop.permute.xlu0 %3016
        %v3019 = vmul.f32 %v3012, %v3017
        %v3020 = vmul.f32 %v3013, %v3017
        %3022 = vset.pattern.permute.xlu0 0
        %3023 = vperm.xlu0 %3022, %v2065
        %v3024 = vpop.permute.xlu0 %3023
        %v3026 = vmul.f32 %v3019, %v3024
        %v3027 = vmul.f32 %v3020, %v3024
        %3029 = vset.pattern.permute.xlu0 0
        %3030 = vperm.xlu0 %3029, %v2066
        %v3031 = vpop.permute.xlu0 %3030
        %v3033 = vadd.f32 %v3026, %v3031
        %v3034 = vadd.f32 %v3027, %v3031
        %3035 = vst [vmem:[%s352] sm:$0xff] %v3033
        %3036 = vst [vmem:[%s352 + $0x8] sm:$0xff] %v3034
        %s3037 = sand.u32 %s247, 1
        %s3038 = scalar_lea.sflag [#allocation3], %s3037
        %s3039 = sand.u32 %s247, 1
        %s3040 = smul.addr %s3039, 16
        %s3041 = scalar_lea.vmem [#allocation2], %s3040
        // Predicated region
        $region61: #{tpu_custom_call.1} parent=59 // pred_check
          %p3042 = pneg %p257
        $region62: #{tpu_custom_call.1} parent=59 // pred_check_branch
          %3044 = sbr.rel (%p3042) target = $region64
        $region63: #{tpu_custom_call.1} parent=59 // pred_region
          %s3046 = ssub.s32 256, 256
          %3047 = vsyncadd %s3038, %s3046
          %s3048 = smul.addr %s24, 2
          %s3049 = smul.addr %s3048, 128
          %s3050 = scalar_lea.hbm %s10, %s3049
          %s3052 = sshll.u32 %s3041, 4
          %s3053 = int_to_ptr.vmem [resolvable:$true] %s3052
          %3055 = dma.vmem_to_hbm [thread:$0]  %s3053, 256, %s3050, %s3038
        $region64: #{tpu_custom_call.1} parent=59 // pred_fallthru
          _
      $region60: #{tpu_custom_call.1} parent=5 // pred_fallthru
        _
      %p3056 = scmp.le.s32.totalorder 2, %s19
      // Predicated region
      $region65: #{tpu_custom_call.1} parent=5 // pred_check
        %p3057 = pneg %p3056
      $region66: #{tpu_custom_call.1} parent=5 // pred_check_branch
        %3059 = sbr.rel (%p3057) target = $region68
      $region67: #{tpu_custom_call.1} parent=5 // pred_region
        %s3060 = ssub.s32 %s19, 2
        // Predicated region
        $region69: #{tpu_custom_call.1} parent=67 // pred_check
          %p3061 = pneg %p263
        $region70: #{tpu_custom_call.1} parent=67 // pred_check_branch
          %3063 = sbr.rel (%p3061) target = $region72
        $region71: #{tpu_custom_call.1} parent=67 // pred_region
          %s3064 = sand.u32 %s248, 1
          %s3065 = scalar_lea.sflag [#allocation3], %s3064
          %s3066 = sand.u32 %s248, 1
          %s3067 = smul.addr %s3066, 16
          %s3068 = scalar_lea.vmem [#allocation2], %s3067
          %3069 = dma.done %s3065, 256
        $region72: #{tpu_custom_call.1} parent=67 // pred_fallthru
          _
      $region68: #{tpu_custom_call.1} parent=5 // pred_fallthru
        _
    $region6: #{tpu_custom_call.1} parent=1 // loop_footer
      %s23 = sadd.s32 1, %s19
    $region7: #{tpu_custom_call.1} parent=1 // loop_footer_branch
      %18 = sbr.rel target = $region3
    $region8: #{tpu_custom_call.1} parent=1 // loop_exit
      _
    %3070 = vsyncpa [#allocation3], 1
    %s3071 = scalar_lea.sflag [#allocation3], 1
    %3072 = vsyncpa %s3071, 1

</llo_original>
